<compile_context>
chip_gen: v7x
topology: tpu7x:2x2x1
jax: 0.10.0
libtpu: 0.0.40
codegen_flags: <defaults>
</compile_context>

<pallas_src>
import math

import jax
import jax.numpy as jnp
from jax.experimental import pallas as pl
from jax.experimental.pallas import tpu as pltpu


def _round_up(n, m):
    return (n + m - 1) // m * m


def _lstm_kernel(x_ref, w_ref, u_ref, b_ref, y_ref, c_out_ref, h_sc, c_sc):
    """One grid step == t_blk LSTM timesteps for one batch tile.

    x_ref:     (b_blk, t_blk, I)    input block (batch-major, streamed)
    w_ref:     (I, 4H)              input->gate weights, gate order (f,i,o,c)
    u_ref:     (H, 4H)              hidden->gate weights, gate order (f,i,o,c)
    b_ref:     (1, 4H) f32          fused bias
    y_ref:     (b_blk, t_blk, H)    per-timestep hidden outputs (batch-major)
    c_out_ref: (b_blk, H)           final cell state
    h_sc/c_sc: (b_blk, H) f32       recurrence carry across seq grid steps
    """
    b_blk, t_blk, in_size = x_ref.shape
    hp = h_sc.shape[-1]
    four_hp = 4 * hp
    tb = pl.program_id(1)                      # seq-block index ("arbitrary")

    @pl.when(tb == 0)
    def _init():
        h_sc[...] = jnp.zeros_like(h_sc)
        c_sc[...] = jnp.zeros_like(c_sc)

    w = w_ref[...]                             # (I, 4H), resident
    u = u_ref[...]                             # (H, 4H), resident
    bias = b_ref[...].astype(jnp.float32)      # (1, 4H)

    # Block-level input projection: one lane-dense (b_blk*t_blk, 4H) matmul
    # per grid step (off the serial recurrence path, full MXU utilisation).
    x_blk = x_ref[...].astype(w.dtype)         # (b_blk, t_blk, I)
    xw = (jnp.dot(x_blk.reshape(b_blk * t_blk, in_size), w,
                  preferred_element_type=jnp.float32)
          + bias).reshape(b_blk, t_blk, four_hp)   # (b_blk, t_blk, 4H) f32

    # Recurrence: h/c carried as values (vregs), written back once at the end.
    h = h_sc[...]                              # (b_blk, H) f32
    c = c_sc[...]                              # (b_blk, H) f32
    for s in range(t_blk):                     # static unroll, static slices
        pre = xw[:, s, :] + jnp.dot(h.astype(u.dtype), u,
                                    preferred_element_type=jnp.float32)
        gates = jax.nn.sigmoid(pre[:, :3 * hp])        # one pass for f, i, o
        f = gates[:, 0 * hp:1 * hp]
        i = gates[:, 1 * hp:2 * hp]
        o = gates[:, 2 * hp:3 * hp]
        g = jnp.tanh(pre[:, 3 * hp:4 * hp])
        c = f * c + i * g
        h = o * jnp.tanh(c)
        y_ref[:, s, :] = h.astype(y_ref.dtype)
    h_sc[...] = h
    c_sc[...] = c

    @pl.when(tb == pl.num_programs(1) - 1)
    def _final():
        c_out_ref[...] = c.astype(c_out_ref.dtype)


def _pick_t_blk(seq, target):
    """Largest divisor of seq that is <= target and 8-sublane aligned."""
    if seq <= target:
        return seq
    for t in range(min(target, seq), 7, -1):
        if seq % t == 0 and t % 8 == 0:
            return t
    return seq      # no aligned divisor: run the whole sequence in one block


def lstm_forward(x, w, u, b, *, t_blk=16, b_blk=None, use_bf16_matmul=False):
    """x: (batch, seq, I); w: (I, 4H); u: (H, 4H); b: (4H,).

    Gate order along the concatenated axis is (f, i, o, c).  Returns
    (y, (h, c)) matching the PyTorch module: y: (batch, seq, H); h/c: (batch, H).
    Set use_bf16_matmul=True on v6e/v7x production runs (f32 accumulation and
    f32 h/c state are kept); leave False for exact PyTorch parity.
    """
    batch, seq, in_size = x.shape
    hidden = u.shape[0]
    assert w.shape == (in_size, 4 * hidden)
    assert u.shape == (hidden, 4 * hidden)
    assert b.shape == (4 * hidden,)

    # Lane/sublane alignment: gate slabs 128-lane dense, batch 8-sublane dense.
    hp = _round_up(hidden, 128)
    bp = _round_up(batch, 8)
    four_hp = 4 * hp

    mm_dtype = jnp.bfloat16 if use_bf16_matmul else jnp.float32

    def pad_gate_cols(a):               # (..., 4*hidden) -> (..., 4*hp), per gate
        lead = a.shape[:-1]
        a4 = a.reshape(*lead, 4, hidden)
        a4 = jnp.pad(a4, [(0, 0)] * len(lead) + [(0, 0), (0, hp - hidden)])
        return a4.reshape(*lead, 4 * hp)

    w_p = pad_gate_cols(w).astype(mm_dtype)                               # (I, 4hp)
    u_p = pad_gate_cols(jnp.pad(u, ((0, hp - hidden), (0, 0)))).astype(mm_dtype)
    b_p = pad_gate_cols(b[None, :]).astype(jnp.float32)                   # (1, 4hp)
    x_p = jnp.pad(x, ((0, bp - batch), (0, 0), (0, 0))).astype(mm_dtype)  # (bp, seq, I)

    # Batch tiling: split across the two v7x TensorCores when halves stay
    # 8-sublane aligned; otherwise one tile.
    if b_blk is None:
        b_blk = bp // 2 if (bp % 16 == 0) else bp
    assert bp % b_blk == 0 and (b_blk % 8 == 0 or b_blk == bp)
    t_blk = _pick_t_blk(seq, t_blk)
    nb, nt = bp // b_blk, seq // t_blk

    # VMEM budget: double-buffered blocks + scratch + the in-kernel xw slab,
    # with headroom, capped below v7x's 64 MiB physical VMEM.
    # TODO(synk): re-derive t_blk/b_blk per generation at large H (64 MiB on v7x).
    itm = jnp.dtype(mm_dtype).itemsize
    ity = jnp.dtype(x.dtype).itemsize
    blk_bytes = (2 * b_blk * t_blk * in_size * itm      # x blocks
                 + 2 * in_size * four_hp * itm          # W
                 + 2 * hp * four_hp * itm               # U
                 + 2 * four_hp * 4                      # bias
                 + 2 * b_blk * t_blk * hp * ity         # y blocks
                 + 2 * b_blk * hp * ity                 # c block
                 + 2 * b_blk * hp * 4                   # h/c scratch
                 + b_blk * t_blk * four_hp * 4)         # xw slab (f32)
    vmem_limit = int(min(max(32 * 1024 * 1024, 2 * blk_bytes), 48 * 1024 * 1024))

    out_shapes = (
        jax.ShapeDtypeStruct((bp, seq, hp), x.dtype),    # y (batch-major)
        jax.ShapeDtypeStruct((bp, hp), x.dtype),         # c
    )

    grid_spec = pltpu.PrefetchScalarGridSpec(
        num_scalar_prefetch=0,
        grid=(nb, nt),                                   # (batch tiles, seq blocks)
        in_specs=[
            pl.BlockSpec((b_blk, t_blk, in_size), lambda bb, tb: (bb, tb, 0)),
            pl.BlockSpec((in_size, four_hp), lambda bb, tb: (0, 0)),
            pl.BlockSpec((hp, four_hp), lambda bb, tb: (0, 0)),
            pl.BlockSpec((1, four_hp), lambda bb, tb: (0, 0)),
        ],
        out_specs=[
            pl.BlockSpec((b_blk, t_blk, hp), lambda bb, tb: (bb, tb, 0)),
            pl.BlockSpec((b_blk, hp), lambda bb, tb: (bb, 0)),
        ],
        scratch_shapes=[
            pltpu.VMEM((b_blk, hp), jnp.float32),        # h carry
            pltpu.VMEM((b_blk, hp), jnp.float32),        # c carry
        ],
    )

    y_full, c_full = pl.pallas_call(
        _lstm_kernel,
        out_shape=out_shapes,
        grid_spec=grid_spec,
        compiler_params=pltpu.CompilerParams(
            dimension_semantics=("parallel", "arbitrary"),
            vmem_limit_bytes=vmem_limit),
    )(x_p, w_p, u_p, b_p)

    y = y_full[:batch, :, :hidden]                       # drop alignment padding
    h = y[:, -1, :]                                      # h == y[:, -1, :]
    c = c_full[:batch, :hidden]
    return y, (h, c)


def xavier_uniform(key, shape, dtype=jnp.float32):
    fan_in, fan_out = shape[-2], shape[-1]
    limit = math.sqrt(6.0 / (fan_in + fan_out))
    return jax.random.uniform(key, shape, dtype, minval=-limit, maxval=limit)


def init_params(key, input_size, hidden_size):
    """Matches MyLegacyLSTM.__init__: per-gate 2-D xavier_uniform_ weights,
    zero biases, concatenated on the last axis in gate order (f, i, o, c)."""
    kf, ki, ko, kc, uf, ui, uo, uc = jax.random.split(key, 8)
    w = jnp.concatenate([xavier_uniform(k, (input_size, hidden_size))
                         for k in (kf, ki, ko, kc)], axis=1)   # (I, 4H)
    u = jnp.concatenate([xavier_uniform(k, (hidden_size, hidden_size))
                         for k in (uf, ui, uo, uc)], axis=1)   # (H, 4H)
    b = jnp.zeros((4 * hidden_size,), jnp.float32)             # (4H,)
    return w, u, b


def lstm_reference(x, w, u, b):
    """Pure-JAX reference reproducing the PyTorch loop, for validation."""
    batch, _, _ = x.shape
    hidden = u.shape[0]
    h = jnp.zeros((batch, hidden), x.dtype)
    c = jnp.zeros((batch, hidden), x.dtype)

    def step(carry, x_t):
        h, c = carry
        pre = x_t @ w + h @ u + b
        f = jax.nn.sigmoid(pre[:, 0 * hidden:1 * hidden])
        i = jax.nn.sigmoid(pre[:, 1 * hidden:2 * hidden])
        o = jax.nn.sigmoid(pre[:, 2 * hidden:3 * hidden])
        g = jnp.tanh(pre[:, 3 * hidden:4 * hidden])
        c = f * c + i * g
        h = o * jnp.tanh(c)
        return (h, c), h

    (h, c), ys = jax.lax.scan(step, (h, c), jnp.transpose(x, (1, 0, 2)))
    return jnp.transpose(ys, (1, 0, 2)), (h, c)


if __name__ == "__main__":
    batch, seq, input_size, hidden_size = 4, 8, 8, 32

    key = jax.random.PRNGKey(0)
    k_x, k_p = jax.random.split(key)
    x = jax.random.normal(k_x, (batch, seq, input_size), jnp.float32)
    w, u, b = init_params(k_p, input_size, hidden_size)

    y, (h, c) = jax.jit(lstm_forward)(x, w, u, b)
    jax.block_until_ready((y, h, c))

    y_ref, (h_ref, c_ref) = lstm_reference(x, w, u, b)
    assert jnp.allclose(y, y_ref, atol=1e-5, rtol=1e-5)
    assert jnp.allclose(h, h_ref, atol=1e-5, rtol=1e-5)
    assert jnp.allclose(c, c_ref, atol=1e-5, rtol=1e-5)

    print("KERNEL_OK")
</pallas_src>

<mosaic_0001>
module attributes {stable_mosaic.version = 11 : i64} {
  func.func @_lstm_kernel(%arg0: i32, %arg1: i32, %arg2: memref<8x8x8xf32, #tpu.memory_space<vmem>>, %arg3: memref<8x512xf32, #tpu.memory_space<vmem>>, %arg4: memref<128x512xf32, #tpu.memory_space<vmem>>, %arg5: memref<1x512xf32, #tpu.memory_space<vmem>>, %arg6: memref<8x8x128xf32, #tpu.memory_space<vmem>>, %arg7: memref<8x128xf32, #tpu.memory_space<vmem>>, %arg8: memref<8x128xf32, #tpu.memory_space<vmem>>, %arg9: memref<8x128xf32, #tpu.memory_space<vmem>>) attributes {dimension_semantics = [#tpu.dimension_semantics<parallel>, #tpu.dimension_semantics<arbitrary>], iteration_bounds = array<i64: 1, 1>, scalar_prefetch = 0 : i64, scratch_operands = 2 : i64, tpu.core_type = #tpu.core_type<tc>, window_params = [{transform_indices = @transform_0, window_bounds = array<i64: 8, 8, 8>}, {pipeline_mode = #tpu.pipeline_mode<synchronous>, transform_indices = @transform_1, window_bounds = array<i64: 8, 512>}, {pipeline_mode = #tpu.pipeline_mode<synchronous>, transform_indices = @transform_2, window_bounds = array<i64: 128, 512>}, {pipeline_mode = #tpu.pipeline_mode<synchronous>, transform_indices = @transform_3, window_bounds = array<i64: 1, 512>}, {transform_indices = @transform_4, window_bounds = array<i64: 8, 8, 128>}, {transform_indices = @transform_5, window_bounds = array<i64: 8, 128>}]} {
    %c0_i32 = arith.constant 0 : i32
    %0 = arith.cmpi eq, %arg1, %c0_i32 : i32
    %1 = arith.extui %0 : i1 to i32
    %c0_i32_0 = arith.constant 0 : i32
    %2 = arith.cmpi ne, %1, %c0_i32_0 : i32
    scf.if %2 {
      %cst_52 = arith.constant 0.000000e+00 : f32
      %203 = vector.broadcast %cst_52 : f32 to vector<8x128xf32>
      %c0_53 = arith.constant 0 : index
      %c0_54 = arith.constant 0 : index
      %204 = vector.load %arg8[%c0_53, %c0_54] : memref<8x128xf32, #tpu.memory_space<vmem>>, vector<8x128xf32>
      tpu.vector_store %arg8[%c0_53, %c0_54], %203 {strides = array<i32>} : memref<8x128xf32, #tpu.memory_space<vmem>>, vector<8x128xf32>,
      %cst_55 = arith.constant 0.000000e+00 : f32
      %205 = vector.broadcast %cst_55 : f32 to vector<8x128xf32>
      %c0_56 = arith.constant 0 : index
      %c0_57 = arith.constant 0 : index
      %206 = vector.load %arg9[%c0_56, %c0_57] : memref<8x128xf32, #tpu.memory_space<vmem>>, vector<8x128xf32>
      tpu.vector_store %arg9[%c0_56, %c0_57], %205 {strides = array<i32>} : memref<8x128xf32, #tpu.memory_space<vmem>>, vector<8x128xf32>,
    } else {
    }
    %c0 = arith.constant 0 : index
    %c0_1 = arith.constant 0 : index
    %3 = vector.load %arg3[%c0, %c0_1] : memref<8x512xf32, #tpu.memory_space<vmem>>, vector<8x512xf32>
    %c0_2 = arith.constant 0 : index
    %c0_3 = arith.constant 0 : index
    %4 = vector.load %arg4[%c0_2, %c0_3] : memref<128x512xf32, #tpu.memory_space<vmem>>, vector<128x512xf32>
    %c0_4 = arith.constant 0 : index
    %c0_5 = arith.constant 0 : index
    %5 = vector.load %arg5[%c0_4, %c0_5] : memref<1x512xf32, #tpu.memory_space<vmem>>, vector<1x512xf32>
    %c0_6 = arith.constant 0 : index
    %c0_7 = arith.constant 0 : index
    %c0_8 = arith.constant 0 : index
    %6 = vector.load %arg2[%c0_6, %c0_7, %c0_8] : memref<8x8x8xf32, #tpu.memory_space<vmem>>, vector<8x8x8xf32>
    %7 = vector.shape_cast %6 : vector<8x8x8xf32> to vector<64x8xf32>
    %cst = arith.constant dense<0.000000e+00> : vector<64x512xf32>
    %8 = tpu.matmul %7, %3, %cst {dimension_numbers = #tpu.dot_dimension_numbers<[1], [0], [0], [1], [0, 0, 1, 1], [], []>} : vector<64x8xf32>, vector<8x512xf32>, vector<64x512xf32> -> vector<64x512xf32>
    %9 = vector.broadcast %5 : vector<1x512xf32> to vector<64x512xf32>
    %10 = arith.addf %8, %9 : vector<64x512xf32>
    %11 = vector.shape_cast %10 : vector<64x512xf32> to vector<8x8x512xf32>
    %c0_9 = arith.constant 0 : index
    %c0_10 = arith.constant 0 : index
    %12 = vector.load %arg8[%c0_9, %c0_10] : memref<8x128xf32, #tpu.memory_space<vmem>>, vector<8x128xf32>
    %c0_11 = arith.constant 0 : index
    %c0_12 = arith.constant 0 : index
    %13 = vector.load %arg9[%c0_11, %c0_12] : memref<8x128xf32, #tpu.memory_space<vmem>>, vector<8x128xf32>
    %14 = vector.extract_strided_slice %11 {offsets = [0, 0, 0], sizes = [8, 1, 512], strides = [1, 1, 1]} : vector<8x8x512xf32> to vector<8x1x512xf32>
    %15 = vector.shape_cast %14 : vector<8x1x512xf32> to vector<8x512xf32>
    %cst_13 = arith.constant dense<0.000000e+00> : vector<8x512xf32>
    %16 = tpu.matmul %12, %4, %cst_13 {dimension_numbers = #tpu.dot_dimension_numbers<[1], [0], [0], [1], [0, 0, 1, 1], [], []>} : vector<8x128xf32>, vector<128x512xf32>, vector<8x512xf32> -> vector<8x512xf32>
    %17 = arith.addf %15, %16 : vector<8x512xf32>
    %18 = vector.extract_strided_slice %17 {offsets = [0, 0], sizes = [8, 384], strides = [1, 1]} : vector<8x512xf32> to vector<8x384xf32>
    %19 = arith.negf %18 : vector<8x384xf32>
    %20 = math.exp %19 : vector<8x384xf32>
    %cst_14 = arith.constant 1.000000e+00 : f32
    %21 = vector.broadcast %cst_14 : f32 to vector<8x384xf32>
    %22 = arith.addf %21, %20 : vector<8x384xf32>
    %23 = arith.divf %21, %22 : vector<8x384xf32>
    %24 = vector.extract_strided_slice %23 {offsets = [0, 0], sizes = [8, 128], strides = [1, 1]} : vector<8x384xf32> to vector<8x128xf32>
    %25 = vector.extract_strided_slice %23 {offsets = [0, 128], sizes = [8, 128], strides = [1, 1]} : vector<8x384xf32> to vector<8x128xf32>
    %26 = vector.extract_strided_slice %23 {offsets = [0, 256], sizes = [8, 128], strides = [1, 1]} : vector<8x384xf32> to vector<8x128xf32>
    %27 = vector.extract_strided_slice %17 {offsets = [0, 384], sizes = [8, 128], strides = [1, 1]} : vector<8x512xf32> to vector<8x128xf32>
    %28 = math.tanh %27 : vector<8x128xf32>
    %29 = arith.mulf %24, %13 : vector<8x128xf32>
    %30 = arith.mulf %25, %28 : vector<8x128xf32>
    %31 = arith.addf %29, %30 : vector<8x128xf32>
    %32 = math.tanh %31 : vector<8x128xf32>
    %33 = arith.mulf %26, %32 : vector<8x128xf32>
    %c0_15 = arith.constant 0 : index
    %c0_16 = arith.constant 0 : index
    %c0_17 = arith.constant 0 : index
    %34 = vector.load %arg6[%c0_15, %c0_16, %c0_17] : memref<8x8x128xf32, #tpu.memory_space<vmem>>, vector<8x1x128xf32>
    %35 = vector.shape_cast %34 : vector<8x1x128xf32> to vector<8x128xf32>
    %36 = vector.shape_cast %33 : vector<8x128xf32> to vector<8x1x128xf32>
    tpu.vector_store %arg6[%c0_15, %c0_16, %c0_17], %36 {strides = array<i32>} : memref<8x8x128xf32, #tpu.memory_space<vmem>>, vector<8x1x128xf32>,
    %37 = vector.extract_strided_slice %11 {offsets = [0, 1, 0], sizes = [8, 1, 512], strides = [1, 1, 1]} : vector<8x8x512xf32> to vector<8x1x512xf32>
    %38 = vector.shape_cast %37 : vector<8x1x512xf32> to vector<8x512xf32>
    %cst_18 = arith.constant dense<0.000000e+00> : vector<8x512xf32>
    %39 = tpu.matmul %33, %4, %cst_18 {dimension_numbers = #tpu.dot_dimension_numbers<[1], [0], [0], [1], [0, 0, 1, 1], [], []>} : vector<8x128xf32>, vector<128x512xf32>, vector<8x512xf32> -> vector<8x512xf32>
    %40 = arith.addf %38, %39 : vector<8x512xf32>
    %41 = vector.extract_strided_slice %40 {offsets = [0, 0], sizes = [8, 384], strides = [1, 1]} : vector<8x512xf32> to vector<8x384xf32>
    %42 = arith.negf %41 : vector<8x384xf32>
    %43 = math.exp %42 : vector<8x384xf32>
    %cst_19 = arith.constant 1.000000e+00 : f32
    %44 = vector.broadcast %cst_19 : f32 to vector<8x384xf32>
    %45 = arith.addf %44, %43 : vector<8x384xf32>
    %46 = arith.divf %44, %45 : vector<8x384xf32>
    %47 = vector.extract_strided_slice %46 {offsets = [0, 0], sizes = [8, 128], strides = [1, 1]} : vector<8x384xf32> to vector<8x128xf32>
    %48 = vector.extract_strided_slice %46 {offsets = [0, 128], sizes = [8, 128], strides = [1, 1]} : vector<8x384xf32> to vector<8x128xf32>
    %49 = vector.extract_strided_slice %46 {offsets = [0, 256], sizes = [8, 128], strides = [1, 1]} : vector<8x384xf32> to vector<8x128xf32>
    %50 = vector.extract_strided_slice %40 {offsets = [0, 384], sizes = [8, 128], strides = [1, 1]} : vector<8x512xf32> to vector<8x128xf32>
    %51 = math.tanh %50 : vector<8x128xf32>
    %52 = arith.mulf %47, %31 : vector<8x128xf32>
    %53 = arith.mulf %48, %51 : vector<8x128xf32>
    %54 = arith.addf %52, %53 : vector<8x128xf32>
    %55 = math.tanh %54 : vector<8x128xf32>
    %56 = arith.mulf %49, %55 : vector<8x128xf32>
    %c0_20 = arith.constant 0 : index
    %c1 = arith.constant 1 : index
    %c0_21 = arith.constant 0 : index
    %57 = vector.load %arg6[%c0_20, %c1, %c0_21] : memref<8x8x128xf32, #tpu.memory_space<vmem>>, vector<8x1x128xf32>
    %58 = vector.shape_cast %57 : vector<8x1x128xf32> to vector<8x128xf32>
    %59 = vector.shape_cast %56 : vector<8x128xf32> to vector<8x1x128xf32>
    tpu.vector_store %arg6[%c0_20, %c1, %c0_21], %59 {strides = array<i32>} : memref<8x8x128xf32, #tpu.memory_space<vmem>>, vector<8x1x128xf32>,
    %60 = vector.extract_strided_slice %11 {offsets = [0, 2, 0], sizes = [8, 1, 512], strides = [1, 1, 1]} : vector<8x8x512xf32> to vector<8x1x512xf32>
    %61 = vector.shape_cast %60 : vector<8x1x512xf32> to vector<8x512xf32>
    %cst_22 = arith.constant dense<0.000000e+00> : vector<8x512xf32>
    %62 = tpu.matmul %56, %4, %cst_22 {dimension_numbers = #tpu.dot_dimension_numbers<[1], [0], [0], [1], [0, 0, 1, 1], [], []>} : vector<8x128xf32>, vector<128x512xf32>, vector<8x512xf32> -> vector<8x512xf32>
    %63 = arith.addf %61, %62 : vector<8x512xf32>
    %64 = vector.extract_strided_slice %63 {offsets = [0, 0], sizes = [8, 384], strides = [1, 1]} : vector<8x512xf32> to vector<8x384xf32>
    %65 = arith.negf %64 : vector<8x384xf32>
    %66 = math.exp %65 : vector<8x384xf32>
    %cst_23 = arith.constant 1.000000e+00 : f32
    %67 = vector.broadcast %cst_23 : f32 to vector<8x384xf32>
    %68 = arith.addf %67, %66 : vector<8x384xf32>
    %69 = arith.divf %67, %68 : vector<8x384xf32>
    %70 = vector.extract_strided_slice %69 {offsets = [0, 0], sizes = [8, 128], strides = [1, 1]} : vector<8x384xf32> to vector<8x128xf32>
    %71 = vector.extract_strided_slice %69 {offsets = [0, 128], sizes = [8, 128], strides = [1, 1]} : vector<8x384xf32> to vector<8x128xf32>
    %72 = vector.extract_strided_slice %69 {offsets = [0, 256], sizes = [8, 128], strides = [1, 1]} : vector<8x384xf32> to vector<8x128xf32>
    %73 = vector.extract_strided_slice %63 {offsets = [0, 384], sizes = [8, 128], strides = [1, 1]} : vector<8x512xf32> to vector<8x128xf32>
    %74 = math.tanh %73 : vector<8x128xf32>
    %75 = arith.mulf %70, %54 : vector<8x128xf32>
    %76 = arith.mulf %71, %74 : vector<8x128xf32>
    %77 = arith.addf %75, %76 : vector<8x128xf32>
    %78 = math.tanh %77 : vector<8x128xf32>
    %79 = arith.mulf %72, %78 : vector<8x128xf32>
    %c0_24 = arith.constant 0 : index
    %c2 = arith.constant 2 : index
    %c0_25 = arith.constant 0 : index
    %80 = vector.load %arg6[%c0_24, %c2, %c0_25] : memref<8x8x128xf32, #tpu.memory_space<vmem>>, vector<8x1x128xf32>
    %81 = vector.shape_cast %80 : vector<8x1x128xf32> to vector<8x128xf32>
    %82 = vector.shape_cast %79 : vector<8x128xf32> to vector<8x1x128xf32>
    tpu.vector_store %arg6[%c0_24, %c2, %c0_25], %82 {strides = array<i32>} : memref<8x8x128xf32, #tpu.memory_space<vmem>>, vector<8x1x128xf32>,
    %83 = vector.extract_strided_slice %11 {offsets = [0, 3, 0], sizes = [8, 1, 512], strides = [1, 1, 1]} : vector<8x8x512xf32> to vector<8x1x512xf32>
    %84 = vector.shape_cast %83 : vector<8x1x512xf32> to vector<8x512xf32>
    %cst_26 = arith.constant dense<0.000000e+00> : vector<8x512xf32>
    %85 = tpu.matmul %79, %4, %cst_26 {dimension_numbers = #tpu.dot_dimension_numbers<[1], [0], [0], [1], [0, 0, 1, 1], [], []>} : vector<8x128xf32>, vector<128x512xf32>, vector<8x512xf32> -> vector<8x512xf32>
    %86 = arith.addf %84, %85 : vector<8x512xf32>
    %87 = vector.extract_strided_slice %86 {offsets = [0, 0], sizes = [8, 384], strides = [1, 1]} : vector<8x512xf32> to vector<8x384xf32>
    %88 = arith.negf %87 : vector<8x384xf32>
    %89 = math.exp %88 : vector<8x384xf32>
    %cst_27 = arith.constant 1.000000e+00 : f32
    %90 = vector.broadcast %cst_27 : f32 to vector<8x384xf32>
    %91 = arith.addf %90, %89 : vector<8x384xf32>
    %92 = arith.divf %90, %91 : vector<8x384xf32>
    %93 = vector.extract_strided_slice %92 {offsets = [0, 0], sizes = [8, 128], strides = [1, 1]} : vector<8x384xf32> to vector<8x128xf32>
    %94 = vector.extract_strided_slice %92 {offsets = [0, 128], sizes = [8, 128], strides = [1, 1]} : vector<8x384xf32> to vector<8x128xf32>
    %95 = vector.extract_strided_slice %92 {offsets = [0, 256], sizes = [8, 128], strides = [1, 1]} : vector<8x384xf32> to vector<8x128xf32>
    %96 = vector.extract_strided_slice %86 {offsets = [0, 384], sizes = [8, 128], strides = [1, 1]} : vector<8x512xf32> to vector<8x128xf32>
    %97 = math.tanh %96 : vector<8x128xf32>
    %98 = arith.mulf %93, %77 : vector<8x128xf32>
    %99 = arith.mulf %94, %97 : vector<8x128xf32>
    %100 = arith.addf %98, %99 : vector<8x128xf32>
    %101 = math.tanh %100 : vector<8x128xf32>
    %102 = arith.mulf %95, %101 : vector<8x128xf32>
    %c0_28 = arith.constant 0 : index
    %c3 = arith.constant 3 : index
    %c0_29 = arith.constant 0 : index
    %103 = vector.load %arg6[%c0_28, %c3, %c0_29] : memref<8x8x128xf32, #tpu.memory_space<vmem>>, vector<8x1x128xf32>
    %104 = vector.shape_cast %103 : vector<8x1x128xf32> to vector<8x128xf32>
    %105 = vector.shape_cast %102 : vector<8x128xf32> to vector<8x1x128xf32>
    tpu.vector_store %arg6[%c0_28, %c3, %c0_29], %105 {strides = array<i32>} : memref<8x8x128xf32, #tpu.memory_space<vmem>>, vector<8x1x128xf32>,
    %106 = vector.extract_strided_slice %11 {offsets = [0, 4, 0], sizes = [8, 1, 512], strides = [1, 1, 1]} : vector<8x8x512xf32> to vector<8x1x512xf32>
    %107 = vector.shape_cast %106 : vector<8x1x512xf32> to vector<8x512xf32>
    %cst_30 = arith.constant dense<0.000000e+00> : vector<8x512xf32>
    %108 = tpu.matmul %102, %4, %cst_30 {dimension_numbers = #tpu.dot_dimension_numbers<[1], [0], [0], [1], [0, 0, 1, 1], [], []>} : vector<8x128xf32>, vector<128x512xf32>, vector<8x512xf32> -> vector<8x512xf32>
    %109 = arith.addf %107, %108 : vector<8x512xf32>
    %110 = vector.extract_strided_slice %109 {offsets = [0, 0], sizes = [8, 384], strides = [1, 1]} : vector<8x512xf32> to vector<8x384xf32>
    %111 = arith.negf %110 : vector<8x384xf32>
    %112 = math.exp %111 : vector<8x384xf32>
    %cst_31 = arith.constant 1.000000e+00 : f32
    %113 = vector.broadcast %cst_31 : f32 to vector<8x384xf32>
    %114 = arith.addf %113, %112 : vector<8x384xf32>
    %115 = arith.divf %113, %114 : vector<8x384xf32>
    %116 = vector.extract_strided_slice %115 {offsets = [0, 0], sizes = [8, 128], strides = [1, 1]} : vector<8x384xf32> to vector<8x128xf32>
    %117 = vector.extract_strided_slice %115 {offsets = [0, 128], sizes = [8, 128], strides = [1, 1]} : vector<8x384xf32> to vector<8x128xf32>
    %118 = vector.extract_strided_slice %115 {offsets = [0, 256], sizes = [8, 128], strides = [1, 1]} : vector<8x384xf32> to vector<8x128xf32>
    %119 = vector.extract_strided_slice %109 {offsets = [0, 384], sizes = [8, 128], strides = [1, 1]} : vector<8x512xf32> to vector<8x128xf32>
    %120 = math.tanh %119 : vector<8x128xf32>
    %121 = arith.mulf %116, %100 : vector<8x128xf32>
    %122 = arith.mulf %117, %120 : vector<8x128xf32>
    %123 = arith.addf %121, %122 : vector<8x128xf32>
    %124 = math.tanh %123 : vector<8x128xf32>
    %125 = arith.mulf %118, %124 : vector<8x128xf32>
    %c0_32 = arith.constant 0 : index
    %c4 = arith.constant 4 : index
    %c0_33 = arith.constant 0 : index
    %126 = vector.load %arg6[%c0_32, %c4, %c0_33] : memref<8x8x128xf32, #tpu.memory_space<vmem>>, vector<8x1x128xf32>
    %127 = vector.shape_cast %126 : vector<8x1x128xf32> to vector<8x128xf32>
    %128 = vector.shape_cast %125 : vector<8x128xf32> to vector<8x1x128xf32>
    tpu.vector_store %arg6[%c0_32, %c4, %c0_33], %128 {strides = array<i32>} : memref<8x8x128xf32, #tpu.memory_space<vmem>>, vector<8x1x128xf32>,
    %129 = vector.extract_strided_slice %11 {offsets = [0, 5, 0], sizes = [8, 1, 512], strides = [1, 1, 1]} : vector<8x8x512xf32> to vector<8x1x512xf32>
    %130 = vector.shape_cast %129 : vector<8x1x512xf32> to vector<8x512xf32>
    %cst_34 = arith.constant dense<0.000000e+00> : vector<8x512xf32>
    %131 = tpu.matmul %125, %4, %cst_34 {dimension_numbers = #tpu.dot_dimension_numbers<[1], [0], [0], [1], [0, 0, 1, 1], [], []>} : vector<8x128xf32>, vector<128x512xf32>, vector<8x512xf32> -> vector<8x512xf32>
    %132 = arith.addf %130, %131 : vector<8x512xf32>
    %133 = vector.extract_strided_slice %132 {offsets = [0, 0], sizes = [8, 384], strides = [1, 1]} : vector<8x512xf32> to vector<8x384xf32>
    %134 = arith.negf %133 : vector<8x384xf32>
    %135 = math.exp %134 : vector<8x384xf32>
    %cst_35 = arith.constant 1.000000e+00 : f32
    %136 = vector.broadcast %cst_35 : f32 to vector<8x384xf32>
    %137 = arith.addf %136, %135 : vector<8x384xf32>
    %138 = arith.divf %136, %137 : vector<8x384xf32>
    %139 = vector.extract_strided_slice %138 {offsets = [0, 0], sizes = [8, 128], strides = [1, 1]} : vector<8x384xf32> to vector<8x128xf32>
    %140 = vector.extract_strided_slice %138 {offsets = [0, 128], sizes = [8, 128], strides = [1, 1]} : vector<8x384xf32> to vector<8x128xf32>
    %141 = vector.extract_strided_slice %138 {offsets = [0, 256], sizes = [8, 128], strides = [1, 1]} : vector<8x384xf32> to vector<8x128xf32>
    %142 = vector.extract_strided_slice %132 {offsets = [0, 384], sizes = [8, 128], strides = [1, 1]} : vector<8x512xf32> to vector<8x128xf32>
    %143 = math.tanh %142 : vector<8x128xf32>
    %144 = arith.mulf %139, %123 : vector<8x128xf32>
    %145 = arith.mulf %140, %143 : vector<8x128xf32>
    %146 = arith.addf %144, %145 : vector<8x128xf32>
    %147 = math.tanh %146 : vector<8x128xf32>
    %148 = arith.mulf %141, %147 : vector<8x128xf32>
    %c0_36 = arith.constant 0 : index
    %c5 = arith.constant 5 : index
    %c0_37 = arith.constant 0 : index
    %149 = vector.load %arg6[%c0_36, %c5, %c0_37] : memref<8x8x128xf32, #tpu.memory_space<vmem>>, vector<8x1x128xf32>
    %150 = vector.shape_cast %149 : vector<8x1x128xf32> to vector<8x128xf32>
    %151 = vector.shape_cast %148 : vector<8x128xf32> to vector<8x1x128xf32>
    tpu.vector_store %arg6[%c0_36, %c5, %c0_37], %151 {strides = array<i32>} : memref<8x8x128xf32, #tpu.memory_space<vmem>>, vector<8x1x128xf32>,
    %152 = vector.extract_strided_slice %11 {offsets = [0, 6, 0], sizes = [8, 1, 512], strides = [1, 1, 1]} : vector<8x8x512xf32> to vector<8x1x512xf32>
    %153 = vector.shape_cast %152 : vector<8x1x512xf32> to vector<8x512xf32>
    %cst_38 = arith.constant dense<0.000000e+00> : vector<8x512xf32>
    %154 = tpu.matmul %148, %4, %cst_38 {dimension_numbers = #tpu.dot_dimension_numbers<[1], [0], [0], [1], [0, 0, 1, 1], [], []>} : vector<8x128xf32>, vector<128x512xf32>, vector<8x512xf32> -> vector<8x512xf32>
    %155 = arith.addf %153, %154 : vector<8x512xf32>
    %156 = vector.extract_strided_slice %155 {offsets = [0, 0], sizes = [8, 384], strides = [1, 1]} : vector<8x512xf32> to vector<8x384xf32>
    %157 = arith.negf %156 : vector<8x384xf32>
    %158 = math.exp %157 : vector<8x384xf32>
    %cst_39 = arith.constant 1.000000e+00 : f32
    %159 = vector.broadcast %cst_39 : f32 to vector<8x384xf32>
    %160 = arith.addf %159, %158 : vector<8x384xf32>
    %161 = arith.divf %159, %160 : vector<8x384xf32>
    %162 = vector.extract_strided_slice %161 {offsets = [0, 0], sizes = [8, 128], strides = [1, 1]} : vector<8x384xf32> to vector<8x128xf32>
    %163 = vector.extract_strided_slice %161 {offsets = [0, 128], sizes = [8, 128], strides = [1, 1]} : vector<8x384xf32> to vector<8x128xf32>
    %164 = vector.extract_strided_slice %161 {offsets = [0, 256], sizes = [8, 128], strides = [1, 1]} : vector<8x384xf32> to vector<8x128xf32>
    %165 = vector.extract_strided_slice %155 {offsets = [0, 384], sizes = [8, 128], strides = [1, 1]} : vector<8x512xf32> to vector<8x128xf32>
    %166 = math.tanh %165 : vector<8x128xf32>
    %167 = arith.mulf %162, %146 : vector<8x128xf32>
    %168 = arith.mulf %163, %166 : vector<8x128xf32>
    %169 = arith.addf %167, %168 : vector<8x128xf32>
    %170 = math.tanh %169 : vector<8x128xf32>
    %171 = arith.mulf %164, %170 : vector<8x128xf32>
    %c0_40 = arith.constant 0 : index
    %c6 = arith.constant 6 : index
    %c0_41 = arith.constant 0 : index
    %172 = vector.load %arg6[%c0_40, %c6, %c0_41] : memref<8x8x128xf32, #tpu.memory_space<vmem>>, vector<8x1x128xf32>
    %173 = vector.shape_cast %172 : vector<8x1x128xf32> to vector<8x128xf32>
    %174 = vector.shape_cast %171 : vector<8x128xf32> to vector<8x1x128xf32>
    tpu.vector_store %arg6[%c0_40, %c6, %c0_41], %174 {strides = array<i32>} : memref<8x8x128xf32, #tpu.memory_space<vmem>>, vector<8x1x128xf32>,
    %175 = vector.extract_strided_slice %11 {offsets = [0, 7, 0], sizes = [8, 1, 512], strides = [1, 1, 1]} : vector<8x8x512xf32> to vector<8x1x512xf32>
    %176 = vector.shape_cast %175 : vector<8x1x512xf32> to vector<8x512xf32>
    %cst_42 = arith.constant dense<0.000000e+00> : vector<8x512xf32>
    %177 = tpu.matmul %171, %4, %cst_42 {dimension_numbers = #tpu.dot_dimension_numbers<[1], [0], [0], [1], [0, 0, 1, 1], [], []>} : vector<8x128xf32>, vector<128x512xf32>, vector<8x512xf32> -> vector<8x512xf32>
    %178 = arith.addf %176, %177 : vector<8x512xf32>
    %179 = vector.extract_strided_slice %178 {offsets = [0, 0], sizes = [8, 384], strides = [1, 1]} : vector<8x512xf32> to vector<8x384xf32>
    %180 = arith.negf %179 : vector<8x384xf32>
    %181 = math.exp %180 : vector<8x384xf32>
    %cst_43 = arith.constant 1.000000e+00 : f32
    %182 = vector.broadcast %cst_43 : f32 to vector<8x384xf32>
    %183 = arith.addf %182, %181 : vector<8x384xf32>
    %184 = arith.divf %182, %183 : vector<8x384xf32>
    %185 = vector.extract_strided_slice %184 {offsets = [0, 0], sizes = [8, 128], strides = [1, 1]} : vector<8x384xf32> to vector<8x128xf32>
    %186 = vector.extract_strided_slice %184 {offsets = [0, 128], sizes = [8, 128], strides = [1, 1]} : vector<8x384xf32> to vector<8x128xf32>
    %187 = vector.extract_strided_slice %184 {offsets = [0, 256], sizes = [8, 128], strides = [1, 1]} : vector<8x384xf32> to vector<8x128xf32>
    %188 = vector.extract_strided_slice %178 {offsets = [0, 384], sizes = [8, 128], strides = [1, 1]} : vector<8x512xf32> to vector<8x128xf32>
    %189 = math.tanh %188 : vector<8x128xf32>
    %190 = arith.mulf %185, %169 : vector<8x128xf32>
    %191 = arith.mulf %186, %189 : vector<8x128xf32>
    %192 = arith.addf %190, %191 : vector<8x128xf32>
    %193 = math.tanh %192 : vector<8x128xf32>
    %194 = arith.mulf %187, %193 : vector<8x128xf32>
    %c0_44 = arith.constant 0 : index
    %c7 = arith.constant 7 : index
    %c0_45 = arith.constant 0 : index
    %195 = vector.load %arg6[%c0_44, %c7, %c0_45] : memref<8x8x128xf32, #tpu.memory_space<vmem>>, vector<8x1x128xf32>
    %196 = vector.shape_cast %195 : vector<8x1x128xf32> to vector<8x128xf32>
    %197 = vector.shape_cast %194 : vector<8x128xf32> to vector<8x1x128xf32>
    tpu.vector_store %arg6[%c0_44, %c7, %c0_45], %197 {strides = array<i32>} : memref<8x8x128xf32, #tpu.memory_space<vmem>>, vector<8x1x128xf32>,
    %c0_46 = arith.constant 0 : index
    %c0_47 = arith.constant 0 : index
    %198 = vector.load %arg8[%c0_46, %c0_47] : memref<8x128xf32, #tpu.memory_space<vmem>>, vector<8x128xf32>
    tpu.vector_store %arg8[%c0_46, %c0_47], %194 {strides = array<i32>} : memref<8x128xf32, #tpu.memory_space<vmem>>, vector<8x128xf32>,
    %c0_48 = arith.constant 0 : index
    %c0_49 = arith.constant 0 : index
    %199 = vector.load %arg9[%c0_48, %c0_49] : memref<8x128xf32, #tpu.memory_space<vmem>>, vector<8x128xf32>
    tpu.vector_store %arg9[%c0_48, %c0_49], %192 {strides = array<i32>} : memref<8x128xf32, #tpu.memory_space<vmem>>, vector<8x128xf32>,
    %c0_i32_50 = arith.constant 0 : i32
    %200 = arith.cmpi eq, %arg1, %c0_i32_50 : i32
    %201 = arith.extui %200 : i1 to i32
    %c0_i32_51 = arith.constant 0 : i32
    %202 = arith.cmpi ne, %201, %c0_i32_51 : i32
    scf.if %202 {
      %c0_52 = arith.constant 0 : index
      %c0_53 = arith.constant 0 : index
      %203 = vector.load %arg7[%c0_52, %c0_53] : memref<8x128xf32, #tpu.memory_space<vmem>>, vector<8x128xf32>
      tpu.vector_store %arg7[%c0_52, %c0_53], %192 {strides = array<i32>} : memref<8x128xf32, #tpu.memory_space<vmem>>, vector<8x128xf32>,
    } else {
    }
    return
  }
  func.func @transform_0(%arg0: i32, %arg1: i32) -> (i32, i32, i32) {
    %c0_i32 = arith.constant 0 : i32
    %c0_i32_0 = arith.constant 0 : i32
    return %arg0, %arg1, %c0_i32 : i32, i32, i32
  }
  func.func @transform_1(%arg0: i32, %arg1: i32) -> (i32, i32) {
    %c0_i32 = arith.constant 0 : i32
    %c0_i32_0 = arith.constant 0 : i32
    %c0_i32_1 = arith.constant 0 : i32
    return %c0_i32, %c0_i32_0 : i32, i32
  }
  func.func @transform_2(%arg0: i32, %arg1: i32) -> (i32, i32) {
    %c0_i32 = arith.constant 0 : i32
    %c0_i32_0 = arith.constant 0 : i32
    %c0_i32_1 = arith.constant 0 : i32
    return %c0_i32, %c0_i32_0 : i32, i32
  }
  func.func @transform_3(%arg0: i32, %arg1: i32) -> (i32, i32) {
    %c0_i32 = arith.constant 0 : i32
    %c0_i32_0 = arith.constant 0 : i32
    %c0_i32_1 = arith.constant 0 : i32
    return %c0_i32, %c0_i32_0 : i32, i32
  }
  func.func @transform_4(%arg0: i32, %arg1: i32) -> (i32, i32, i32) {
    %c0_i32 = arith.constant 0 : i32
    %c0_i32_0 = arith.constant 0 : i32
    return %arg0, %arg1, %c0_i32 : i32, i32, i32
  }
  func.func @transform_5(%arg0: i32, %arg1: i32) -> (i32, i32) {
    %c0_i32 = arith.constant 0 : i32
    %c0_i32_0 = arith.constant 0 : i32
    return %arg0, %c0_i32 : i32, i32
  }
}

</mosaic_0001>

<llo_original>
// kernel: lstm_forward.1
$region0: #{lstm_forward.1}
  #allocation0 [shape = 'u32[]', space=smem, size = 0x4, offset = 0x4, fixed_abs, tag = 'smem constant byte address 0x4 - core index']
  #allocation1 [shape = 'u32[144,128]{1,0:T(1,128)}', space=vmem, size = 0x12000, scoped, tag = 'internal scratch']
  #allocation2 [shape = 'f32[8,128]{1,0:T(8,128)}', space=vmem, size = 0x1000, scoped, tag = 'scratch operand']
  #allocation3 [shape = 'f32[8,128]{1,0:T(8,128)}', space=vmem, size = 0x1000, scoped, tag = 'scratch operand']
  %s0 = inlined_call_operand.vmem [shape: f32[8,8,8], index: 0, kind: input, shape index: {}]
  %s1 = inlined_call_operand.vmem [shape: f32[8,512], index: 1, kind: input, shape index: {}]
  %s2 = inlined_call_operand.vmem [shape: f32[128,512], index: 2, kind: input, shape index: {}]
  %s3 = inlined_call_operand.vmem [shape: f32[1,512], index: 3, kind: input, shape index: {}]
  %s4 = inlined_call_operand.vmem [shape: f32[8,8,128], index: 4, kind: output, shape index: {0}]
  %s5 = inlined_call_operand.vmem [shape: f32[8,128], index: 5, kind: output, shape index: {1}]
  %6 = xla_tuple %s4, %s5
  %s7 = sld [smem:[#allocation0]]
  $region42: #{lstm_forward.1} parent=0
    _
  %s9 = ssub.s32 1, %s7
  %s10 = scalar_select 0, %s9, %s7
  // Predicated region
  $region2: #{lstm_forward.1} parent=0 // pred_check
    _
  $region3: #{lstm_forward.1} parent=0 // pred_check_branch
    %12 = sbr.rel (0) target = $region5
  $region4: #{lstm_forward.1} parent=0 // pred_region
    _
  $region5: #{lstm_forward.1} parent=0 // pred_fallthru
    _
  // Predicated region
  $region6: #{lstm_forward.1} parent=0 // pred_check
    _
  $region7: #{lstm_forward.1} parent=0 // pred_check_branch
    %14 = sbr.rel (0) target = $region9
  $region8: #{lstm_forward.1} parent=0 // pred_region
    _
  $region9: #{lstm_forward.1} parent=0 // pred_fallthru
    _
  // Predicated region
  $region10: #{lstm_forward.1} parent=0 // pred_check
    _
  $region11: #{lstm_forward.1} parent=0 // pred_check_branch
    %16 = sbr.rel (0) target = $region13
  $region12: #{lstm_forward.1} parent=0 // pred_region
    _
  $region13: #{lstm_forward.1} parent=0 // pred_fallthru
    _
  // Predicated region
  $region14: #{lstm_forward.1} parent=0 // pred_check
    _
  $region15: #{lstm_forward.1} parent=0 // pred_check_branch
    %18 = sbr.rel (0) target = $region17
  $region16: #{lstm_forward.1} parent=0 // pred_region
    _
  $region17: #{lstm_forward.1} parent=0 // pred_fallthru
    _
  %p19 = scmp.eq.s32.totalorder 0, 0
  // Predicated region
  $region18: #{lstm_forward.1} parent=0 // pred_check
    %p20 = pneg %p19
  $region19: #{lstm_forward.1} parent=0 // pred_check_branch
    %22 = sbr.rel (%p20) target = $region21
  $region20: #{lstm_forward.1} parent=0 // pred_region
    %23 = vst [vmem:[#allocation2] sm:$0xff] 0.0
    %24 = vst [vmem:[#allocation3] sm:$0xff] 0.0
  $region21: #{lstm_forward.1} parent=0 // pred_fallthru
    _
  %v25 = vld [vmem:[%s1] sm:$0xff]
  %v26 = vld [vmem:[%s1 + $0x8] sm:$0xff]
  %v27 = vld [vmem:[%s1 + $0x10] sm:$0xff]
  %v28 = vld [vmem:[%s1 + $0x18] sm:$0xff]
  %v29 = vld [vmem:[%s2] sm:$0xff]
  %v30 = vld [vmem:[%s2 + $0x8] sm:$0xff]
  %v31 = vld [vmem:[%s2 + $0x10] sm:$0xff]
  %v32 = vld [vmem:[%s2 + $0x18] sm:$0xff]
  %v33 = vld [vmem:[%s2 + $0x20] sm:$0xff]
  %v34 = vld [vmem:[%s2 + $0x28] sm:$0xff]
  %v35 = vld [vmem:[%s2 + $0x30] sm:$0xff]
  %v36 = vld [vmem:[%s2 + $0x38] sm:$0xff]
  %v37 = vld [vmem:[%s2 + $0x40] sm:$0xff]
  %v38 = vld [vmem:[%s2 + $0x48] sm:$0xff]
  %v39 = vld [vmem:[%s2 + $0x50] sm:$0xff]
  %v40 = vld [vmem:[%s2 + $0x58] sm:$0xff]
  %v41 = vld [vmem:[%s2 + $0x60] sm:$0xff]
  %v42 = vld [vmem:[%s2 + $0x68] sm:$0xff]
  %v43 = vld [vmem:[%s2 + $0x70] sm:$0xff]
  %v44 = vld [vmem:[%s2 + $0x78] sm:$0xff]
  %v45 = vld [vmem:[%s2 + $0x80] sm:$0xff]
  %v46 = vld [vmem:[%s2 + $0x88] sm:$0xff]
  %v47 = vld [vmem:[%s2 + $0x90] sm:$0xff]
  %v48 = vld [vmem:[%s2 + $0x98] sm:$0xff]
  %v49 = vld [vmem:[%s2 + $0xa0] sm:$0xff]
  %v50 = vld [vmem:[%s2 + $0xa8] sm:$0xff]
  %v51 = vld [vmem:[%s2 + $0xb0] sm:$0xff]
  %v52 = vld [vmem:[%s2 + $0xb8] sm:$0xff]
  %v53 = vld [vmem:[%s2 + $0xc0] sm:$0xff]
  %v54 = vld [vmem:[%s2 + $0xc8] sm:$0xff]
  %v55 = vld [vmem:[%s2 + $0xd0] sm:$0xff]
  %v56 = vld [vmem:[%s2 + $0xd8] sm:$0xff]
  %v57 = vld [vmem:[%s2 + $0xe0] sm:$0xff]
  %v58 = vld [vmem:[%s2 + $0xe8] sm:$0xff]
  %v59 = vld [vmem:[%s2 + $0xf0] sm:$0xff]
  %v60 = vld [vmem:[%s2 + $0xf8] sm:$0xff]
  %v61 = vld [vmem:[%s2 + $0x100] sm:$0xff]
  %v62 = vld [vmem:[%s2 + $0x108] sm:$0xff]
  %v63 = vld [vmem:[%s2 + $0x110] sm:$0xff]
  %v64 = vld [vmem:[%s2 + $0x118] sm:$0xff]
  %v65 = vld [vmem:[%s2 + $0x120] sm:$0xff]
  %v66 = vld [vmem:[%s2 + $0x128] sm:$0xff]
  %v67 = vld [vmem:[%s2 + $0x130] sm:$0xff]
  %v68 = vld [vmem:[%s2 + $0x138] sm:$0xff]
  %v69 = vld [vmem:[%s2 + $0x140] sm:$0xff]
  %v70 = vld [vmem:[%s2 + $0x148] sm:$0xff]
  %v71 = vld [vmem:[%s2 + $0x150] sm:$0xff]
  %v72 = vld [vmem:[%s2 + $0x158] sm:$0xff]
  %v73 = vld [vmem:[%s2 + $0x160] sm:$0xff]
  %v74 = vld [vmem:[%s2 + $0x168] sm:$0xff]
  %v75 = vld [vmem:[%s2 + $0x170] sm:$0xff]
  %v76 = vld [vmem:[%s2 + $0x178] sm:$0xff]
  %v77 = vld [vmem:[%s2 + $0x180] sm:$0xff]
  %v78 = vld [vmem:[%s2 + $0x188] sm:$0xff]
  %v79 = vld [vmem:[%s2 + $0x190] sm:$0xff]
  %v80 = vld [vmem:[%s2 + $0x198] sm:$0xff]
  %v81 = vld [vmem:[%s2 + $0x1a0] sm:$0xff]
  %v82 = vld [vmem:[%s2 + $0x1a8] sm:$0xff]
  %v83 = vld [vmem:[%s2 + $0x1b0] sm:$0xff]
  %v84 = vld [vmem:[%s2 + $0x1b8] sm:$0xff]
  %v85 = vld [vmem:[%s2 + $0x1c0] sm:$0xff]
  %v86 = vld [vmem:[%s2 + $0x1c8] sm:$0xff]
  %v87 = vld [vmem:[%s2 + $0x1d0] sm:$0xff]
  %v88 = vld [vmem:[%s2 + $0x1d8] sm:$0xff]
  %v89 = vld [vmem:[%s2 + $0x1e0] sm:$0xff]
  %v90 = vld [vmem:[%s2 + $0x1e8] sm:$0xff]
  %v91 = vld [vmem:[%s2 + $0x1f0] sm:$0xff]
  %v92 = vld [vmem:[%s2 + $0x1f8] sm:$0xff]
  %v93 = vld [vmem:[%s3] sm:$0xf]
  %v94 = vld [vmem:[%s0] sm:$0xff]
  %v95 = vld [vmem:[%s0 + $0x8] sm:$0xff]
  %v96 = vld [vmem:[%s0 + $0x10] sm:$0xff]
  %v97 = vld [vmem:[%s0 + $0x18] sm:$0xff]
  %v98 = vld [vmem:[%s0 + $0x20] sm:$0xff]
  %v99 = vld [vmem:[%s0 + $0x28] sm:$0xff]
  %v100 = vld [vmem:[%s0 + $0x30] sm:$0xff]
  %v101 = vld [vmem:[%s0 + $0x38] sm:$0xff]
  %v103 = vlaneseq
  %v104 = vshrl.u32 %v103, 7
  %v105 = vsub.s32 0, %v104
  %v106 = vrot.slane %v93, %v105
  %v107 = vlaneseq
  %v108 = vshrl.u32 %v107, 7
  %v109 = vsub.s32 1, %v108
  %v110 = vrot.slane %v93, %v109
  %v111 = vlaneseq
  %v112 = vshrl.u32 %v111, 7
  %v113 = vsub.s32 2, %v112
  %v114 = vrot.slane %v93, %v113
  %v115 = vlaneseq
  %v116 = vshrl.u32 %v115, 7
  %v117 = vsub.s32 3, %v116
  %v118 = vrot.slane %v93, %v117
  %vm123 = vcmask 64512
  %v125 = vsel %vm123, %v94, 0
  %v128 = vsel %vm123, %v95, 0
  %v131 = vsel %vm123, %v96, 0
  %v134 = vsel %vm123, %v97, 0
  %v137 = vsel %vm123, %v98, 0
  %v140 = vsel %vm123, %v99, 0
  %v143 = vsel %vm123, %v100, 0
  %v146 = vsel %vm123, %v101, 0
  %148 = vmatprep.subr.mxu0 %v26
  %149 = vmatpush1.msra.mxu0 %v25
  %150 = vmatprep.subr.mxu0 0.0
  %151 = vmatpush1.msra.mxu0 0.0
  %152 = vmatprep.subr.mxu0 0.0
  %153 = vmatpush1.msra.mxu0 0.0
  %154 = vmatprep.subr.mxu0 0.0
  %155 = vmatpush1.msra.mxu0 0.0
  %156 = vmatprep.subr.mxu0 0.0
  %157 = vmatpush1.msra.mxu0 0.0
  %158 = vmatprep.subr.mxu0 0.0
  %159 = vmatpush1.msra.mxu0 0.0
  %160 = vmatprep.subr.mxu0 0.0
  %161 = vmatpush1.msra.mxu0 0.0
  %162 = vmatprep.subr.mxu0 0.0
  %163 = vmatpush1.msra.mxu0 0.0
  %164 = vmatprep.subr.mxu0 0.0
  %165 = vmatpush1.msra.mxu0 0.0
  %166 = vmatprep.subr.mxu0 0.0
  %167 = vmatpush1.msra.mxu0 0.0
  %168 = vmatprep.subr.mxu0 0.0
  %169 = vmatpush1.msra.mxu0 0.0
  %170 = vmatprep.subr.mxu0 0.0
  %171 = vmatpush1.msra.mxu0 0.0
  %172 = vmatprep.subr.mxu0 0.0
  %173 = vmatpush1.msra.mxu0 0.0
  %174 = vmatprep.subr.mxu0 0.0
  %175 = vmatpush1.msra.mxu0 0.0
  %176 = vmatprep.subr.mxu0 0.0
  %177 = vmatpush1.msra.mxu0 0.0
  %178 = vmatprep.subr.mxu0 0.0
  %179 = vmatpush1.msra.mxu0 0.0
  %180 = vmatprep.subr.mxu0 0.0
  %181 = vmatpush1.msra.mxu0 0.0
  %182 = vmatprep.subr.mxu0 0.0
  %183 = vmatpush1.msra.mxu0 0.0
  %184 = vmatprep.subr.mxu0 0.0
  %185 = vmatpush1.msra.mxu0 0.0
  %186 = vmatprep.subr.mxu0 0.0
  %187 = vmatpush1.msra.mxu0 0.0
  %188 = vmatprep.subr.mxu0 0.0
  %189 = vmatpush1.msra.mxu0 0.0
  %190 = vmatprep.subr.mxu0 0.0
  %191 = vmatpush1.msra.mxu0 0.0
  %192 = vmatprep.subr.mxu0 0.0
  %193 = vmatpush1.msra.mxu0 0.0
  %194 = vmatprep.subr.mxu0 0.0
  %195 = vmatpush1.msra.mxu0 0.0
  %196 = vmatprep.subr.mxu0 0.0
  %197 = vmatpush1.msra.mxu0 0.0
  %198 = vmatprep.subr.mxu0 0.0
  %199 = vmatpush1.msra.mxu0 0.0
  %200 = vmatprep.subr.mxu0 0.0
  %201 = vmatpush1.msra.mxu0 0.0
  %202 = vmatprep.subr.mxu0 0.0
  %203 = vmatpush1.msra.mxu0 0.0
  %204 = vmatprep.subr.mxu0 0.0
  %205 = vmatpush1.msra.mxu0 0.0
  %206 = vmatprep.subr.mxu0 0.0
  %207 = vmatpush1.msra.mxu0 0.0
  %208 = vmatprep.subr.mxu0 0.0
  %209 = vmatpush1.msra.mxu0 0.0
  %210 = vmatprep.subr.mxu0 0.0
  %211 = vmatpush1.msra.mxu0 0.0
  %212 = vmatprep.mubr.f32.mxu0 0.0
  %213 = vmatmul.mubr.f32.gmra.mrb[0].mxu0 %v125
  %v214 = vpop.f32.mrb[0].mxu0
  %v215 = vadd.f32 %v106, %v214
  %v216 = vpop.f32.mrb[0].mxu0
  %v217 = vadd.f32 %v110, %v216
  %218 = vmatprep.mubr.f32.mxu0 0.0
  %219 = vmatmul.mubr.f32.gmra.mrb[0].mxu0 %v128
  %v220 = vpop.f32.mrb[0].mxu0
  %v221 = vadd.f32 %v106, %v220
  %v222 = vpop.f32.mrb[0].mxu0
  %v223 = vadd.f32 %v110, %v222
  %224 = vmatprep.mubr.f32.mxu0 0.0
  %225 = vmatmul.mubr.f32.gmra.mrb[0].mxu0 %v131
  %v226 = vpop.f32.mrb[0].mxu0
  %v227 = vadd.f32 %v106, %v226
  %v228 = vpop.f32.mrb[0].mxu0
  %v229 = vadd.f32 %v110, %v228
  %230 = vmatprep.mubr.f32.mxu0 0.0
  %231 = vmatmul.mubr.f32.gmra.mrb[0].mxu0 %v134
  %v232 = vpop.f32.mrb[0].mxu0
  %v233 = vadd.f32 %v106, %v232
  %v234 = vpop.f32.mrb[0].mxu0
  %v235 = vadd.f32 %v110, %v234
  %236 = vmatprep.mubr.f32.mxu0 0.0
  %237 = vmatmul.mubr.f32.gmra.mrb[0].mxu0 %v137
  %v238 = vpop.f32.mrb[0].mxu0
  %v239 = vadd.f32 %v106, %v238
  %v240 = vpop.f32.mrb[0].mxu0
  %v241 = vadd.f32 %v110, %v240
  %242 = vmatprep.mubr.f32.mxu0 0.0
  %243 = vmatmul.mubr.f32.gmra.mrb[0].mxu0 %v140
  %v244 = vpop.f32.mrb[0].mxu0
  %v245 = vadd.f32 %v106, %v244
  %v246 = vpop.f32.mrb[0].mxu0
  %v247 = vadd.f32 %v110, %v246
  %248 = vmatprep.mubr.f32.mxu0 0.0
  %249 = vmatmul.mubr.f32.gmra.mrb[0].mxu0 %v143
  %v250 = vpop.f32.mrb[0].mxu0
  %v251 = vadd.f32 %v106, %v250
  %v252 = vpop.f32.mrb[0].mxu0
  %v253 = vadd.f32 %v110, %v252
  %254 = vmatprep.mubr.f32.mxu0 0.0
  %255 = vmatmul.mubr.f32.gmra.mrb[0].mxu0 %v146
  %v256 = vpop.f32.mrb[0].mxu0
  %v257 = vadd.f32 %v106, %v256
  %v258 = vpop.f32.mrb[0].mxu0
  %v259 = vadd.f32 %v110, %v258
  %260 = vdwg.mxu0
  %261 = vmatprep.subr.mxu0 %v28
  %262 = vmatpush1.msra.mxu0 %v27
  %263 = vmatprep.subr.mxu0 0.0
  %264 = vmatpush1.msra.mxu0 0.0
  %265 = vmatprep.subr.mxu0 0.0
  %266 = vmatpush1.msra.mxu0 0.0
  %267 = vmatprep.subr.mxu0 0.0
  %268 = vmatpush1.msra.mxu0 0.0
  %269 = vmatprep.subr.mxu0 0.0
  %270 = vmatpush1.msra.mxu0 0.0
  %271 = vmatprep.subr.mxu0 0.0
  %272 = vmatpush1.msra.mxu0 0.0
  %273 = vmatprep.subr.mxu0 0.0
  %274 = vmatpush1.msra.mxu0 0.0
  %275 = vmatprep.subr.mxu0 0.0
  %276 = vmatpush1.msra.mxu0 0.0
  %277 = vmatprep.subr.mxu0 0.0
  %278 = vmatpush1.msra.mxu0 0.0
  %279 = vmatprep.subr.mxu0 0.0
  %280 = vmatpush1.msra.mxu0 0.0
  %281 = vmatprep.subr.mxu0 0.0
  %282 = vmatpush1.msra.mxu0 0.0
  %283 = vmatprep.subr.mxu0 0.0
  %284 = vmatpush1.msra.mxu0 0.0
  %285 = vmatprep.subr.mxu0 0.0
  %286 = vmatpush1.msra.mxu0 0.0
  %287 = vmatprep.subr.mxu0 0.0
  %288 = vmatpush1.msra.mxu0 0.0
  %289 = vmatprep.subr.mxu0 0.0
  %290 = vmatpush1.msra.mxu0 0.0
  %291 = vmatprep.subr.mxu0 0.0
  %292 = vmatpush1.msra.mxu0 0.0
  %293 = vmatprep.subr.mxu0 0.0
  %294 = vmatpush1.msra.mxu0 0.0
  %295 = vmatprep.subr.mxu0 0.0
  %296 = vmatpush1.msra.mxu0 0.0
  %297 = vmatprep.subr.mxu0 0.0
  %298 = vmatpush1.msra.mxu0 0.0
  %299 = vmatprep.subr.mxu0 0.0
  %300 = vmatpush1.msra.mxu0 0.0
  %301 = vmatprep.subr.mxu0 0.0
  %302 = vmatpush1.msra.mxu0 0.0
  %303 = vmatprep.subr.mxu0 0.0
  %304 = vmatpush1.msra.mxu0 0.0
  %305 = vmatprep.subr.mxu0 0.0
  %306 = vmatpush1.msra.mxu0 0.0
  %307 = vmatprep.subr.mxu0 0.0
  %308 = vmatpush1.msra.mxu0 0.0
  %309 = vmatprep.subr.mxu0 0.0
  %310 = vmatpush1.msra.mxu0 0.0
  %311 = vmatprep.subr.mxu0 0.0
  %312 = vmatpush1.msra.mxu0 0.0
  %313 = vmatprep.subr.mxu0 0.0
  %314 = vmatpush1.msra.mxu0 0.0
  %315 = vmatprep.subr.mxu0 0.0
  %316 = vmatpush1.msra.mxu0 0.0
  %317 = vmatprep.subr.mxu0 0.0
  %318 = vmatpush1.msra.mxu0 0.0
  %319 = vmatprep.subr.mxu0 0.0
  %320 = vmatpush1.msra.mxu0 0.0
  %321 = vmatprep.subr.mxu0 0.0
  %322 = vmatpush1.msra.mxu0 0.0
  %323 = vmatprep.subr.mxu0 0.0
  %324 = vmatpush1.msra.mxu0 0.0
  %325 = vmatprep.mubr.f32.mxu0 0.0
  %326 = vmatmul.mubr.f32.gmra.mrb[0].mxu0 %v125
  %v327 = vpop.f32.mrb[0].mxu0
  %v328 = vadd.f32 %v114, %v327
  %v329 = vpop.f32.mrb[0].mxu0
  %v330 = vadd.f32 %v118, %v329
  %331 = vmatprep.mubr.f32.mxu0 0.0
  %332 = vmatmul.mubr.f32.gmra.mrb[0].mxu0 %v128
  %v333 = vpop.f32.mrb[0].mxu0
  %v334 = vadd.f32 %v114, %v333
  %v335 = vpop.f32.mrb[0].mxu0
  %v336 = vadd.f32 %v118, %v335
  %337 = vmatprep.mubr.f32.mxu0 0.0
  %338 = vmatmul.mubr.f32.gmra.mrb[0].mxu0 %v131
  %v339 = vpop.f32.mrb[0].mxu0
  %v340 = vadd.f32 %v114, %v339
  %v341 = vpop.f32.mrb[0].mxu0
  %v342 = vadd.f32 %v118, %v341
  %343 = vmatprep.mubr.f32.mxu0 0.0
  %344 = vmatmul.mubr.f32.gmra.mrb[0].mxu0 %v134
  %v345 = vpop.f32.mrb[0].mxu0
  %v346 = vadd.f32 %v114, %v345
  %v347 = vpop.f32.mrb[0].mxu0
  %v348 = vadd.f32 %v118, %v347
  %349 = vmatprep.mubr.f32.mxu0 0.0
  %350 = vmatmul.mubr.f32.gmra.mrb[0].mxu0 %v137
  %v351 = vpop.f32.mrb[0].mxu0
  %v352 = vadd.f32 %v114, %v351
  %v353 = vpop.f32.mrb[0].mxu0
  %v354 = vadd.f32 %v118, %v353
  %355 = vmatprep.mubr.f32.mxu0 0.0
  %356 = vmatmul.mubr.f32.gmra.mrb[0].mxu0 %v140
  %v357 = vpop.f32.mrb[0].mxu0
  %v358 = vadd.f32 %v114, %v357
  %v359 = vpop.f32.mrb[0].mxu0
  %v360 = vadd.f32 %v118, %v359
  %361 = vmatprep.mubr.f32.mxu0 0.0
  %362 = vmatmul.mubr.f32.gmra.mrb[0].mxu0 %v143
  %v363 = vpop.f32.mrb[0].mxu0
  %v364 = vadd.f32 %v114, %v363
  %v365 = vpop.f32.mrb[0].mxu0
  %v366 = vadd.f32 %v118, %v365
  %367 = vmatprep.mubr.f32.mxu0 0.0
  %368 = vmatmul.mubr.f32.gmra.mrb[0].mxu0 %v146
  %v369 = vpop.f32.mrb[0].mxu0
  %v370 = vadd.f32 %v114, %v369
  %v371 = vpop.f32.mrb[0].mxu0
  %v372 = vadd.f32 %v118, %v371
  %373 = vdwg.mxu0
  %v374 = vld [vmem:[#allocation2] sm:$0xff]
  %v375 = vld [vmem:[#allocation3] sm:$0xff]
  %376 = vmatprep.subr.mxu0 %v30
  %377 = vmatpush1.msra.mxu0 %v29
  %378 = vmatprep.subr.mxu0 %v34
  %379 = vmatpush1.msra.mxu0 %v33
  %380 = vmatprep.subr.mxu0 %v38
  %381 = vmatpush1.msra.mxu0 %v37
  %382 = vmatprep.subr.mxu0 %v42
  %383 = vmatpush1.msra.mxu0 %v41
  %384 = vmatprep.subr.mxu0 %v46
  %385 = vmatpush1.msra.mxu0 %v45
  %386 = vmatprep.subr.mxu0 %v50
  %387 = vmatpush1.msra.mxu0 %v49
  %388 = vmatprep.subr.mxu0 %v54
  %389 = vmatpush1.msra.mxu0 %v53
  %390 = vmatprep.subr.mxu0 %v58
  %391 = vmatpush1.msra.mxu0 %v57
  %392 = vmatprep.subr.mxu0 %v62
  %393 = vmatpush1.msra.mxu0 %v61
  %394 = vmatprep.subr.mxu0 %v66
  %395 = vmatpush1.msra.mxu0 %v65
  %396 = vmatprep.subr.mxu0 %v70
  %397 = vmatpush1.msra.mxu0 %v69
  %398 = vmatprep.subr.mxu0 %v74
  %399 = vmatpush1.msra.mxu0 %v73
  %400 = vmatprep.subr.mxu0 %v78
  %401 = vmatpush1.msra.mxu0 %v77
  %402 = vmatprep.subr.mxu0 %v82
  %403 = vmatpush1.msra.mxu0 %v81
  %404 = vmatprep.subr.mxu0 %v86
  %405 = vmatpush1.msra.mxu0 %v85
  %406 = vmatprep.subr.mxu0 %v90
  %407 = vmatpush1.msra.mxu0 %v89
  %408 = vmatprep.subr.mxu0 0.0
  %409 = vmatpush1.msra.mxu0 0.0
  %410 = vmatprep.subr.mxu0 0.0
  %411 = vmatpush1.msra.mxu0 0.0
  %412 = vmatprep.subr.mxu0 0.0
  %413 = vmatpush1.msra.mxu0 0.0
  %414 = vmatprep.subr.mxu0 0.0
  %415 = vmatpush1.msra.mxu0 0.0
  %416 = vmatprep.subr.mxu0 0.0
  %417 = vmatpush1.msra.mxu0 0.0
  %418 = vmatprep.subr.mxu0 0.0
  %419 = vmatpush1.msra.mxu0 0.0
  %420 = vmatprep.subr.mxu0 0.0
  %421 = vmatpush1.msra.mxu0 0.0
  %422 = vmatprep.subr.mxu0 0.0
  %423 = vmatpush1.msra.mxu0 0.0
  %424 = vmatprep.subr.mxu0 0.0
  %425 = vmatpush1.msra.mxu0 0.0
  %426 = vmatprep.subr.mxu0 0.0
  %427 = vmatpush1.msra.mxu0 0.0
  %428 = vmatprep.subr.mxu0 0.0
  %429 = vmatpush1.msra.mxu0 0.0
  %430 = vmatprep.subr.mxu0 0.0
  %431 = vmatpush1.msra.mxu0 0.0
  %432 = vmatprep.subr.mxu0 0.0
  %433 = vmatpush1.msra.mxu0 0.0
  %434 = vmatprep.subr.mxu0 0.0
  %435 = vmatpush1.msra.mxu0 0.0
  %436 = vmatprep.subr.mxu0 0.0
  %437 = vmatpush1.msra.mxu0 0.0
  %438 = vmatprep.subr.mxu0 0.0
  %439 = vmatpush1.msra.mxu0 0.0
  %440 = vmatprep.mubr.f32.mxu0 0.0
  %441 = vmatmul.mubr.f32.gmra.mrb[0].mxu0 %v374
  %v442 = vpop.f32.mrb[0].mxu0
  %v443 = vadd.f32 0.0, %v442
  %v444 = vpop.f32.mrb[0].mxu0
  %v445 = vadd.f32 0.0, %v444
  %446 = vdwg.mxu0
  %447 = vmatprep.subr.mxu0 %v32
  %448 = vmatpush1.msra.mxu0 %v31
  %449 = vmatprep.subr.mxu0 %v36
  %450 = vmatpush1.msra.mxu0 %v35
  %451 = vmatprep.subr.mxu0 %v40
  %452 = vmatpush1.msra.mxu0 %v39
  %453 = vmatprep.subr.mxu0 %v44
  %454 = vmatpush1.msra.mxu0 %v43
  %455 = vmatprep.subr.mxu0 %v48
  %456 = vmatpush1.msra.mxu0 %v47
  %457 = vmatprep.subr.mxu0 %v52
  %458 = vmatpush1.msra.mxu0 %v51
  %459 = vmatprep.subr.mxu0 %v56
  %460 = vmatpush1.msra.mxu0 %v55
  %461 = vmatprep.subr.mxu0 %v60
  %462 = vmatpush1.msra.mxu0 %v59
  %463 = vmatprep.subr.mxu0 %v64
  %464 = vmatpush1.msra.mxu0 %v63
  %465 = vmatprep.subr.mxu0 %v68
  %466 = vmatpush1.msra.mxu0 %v67
  %467 = vmatprep.subr.mxu0 %v72
  %468 = vmatpush1.msra.mxu0 %v71
  %469 = vmatprep.subr.mxu0 %v76
  %470 = vmatpush1.msra.mxu0 %v75
  %471 = vmatprep.subr.mxu0 %v80
  %472 = vmatpush1.msra.mxu0 %v79
  %473 = vmatprep.subr.mxu0 %v84
  %474 = vmatpush1.msra.mxu0 %v83
  %475 = vmatprep.subr.mxu0 %v88
  %476 = vmatpush1.msra.mxu0 %v87
  %477 = vmatprep.subr.mxu0 %v92
  %478 = vmatpush1.msra.mxu0 %v91
  %479 = vmatprep.subr.mxu0 0.0
  %480 = vmatpush1.msra.mxu0 0.0
  %481 = vmatprep.subr.mxu0 0.0
  %482 = vmatpush1.msra.mxu0 0.0
  %483 = vmatprep.subr.mxu0 0.0
  %484 = vmatpush1.msra.mxu0 0.0
  %485 = vmatprep.subr.mxu0 0.0
  %486 = vmatpush1.msra.mxu0 0.0
  %487 = vmatprep.subr.mxu0 0.0
  %488 = vmatpush1.msra.mxu0 0.0
  %489 = vmatprep.subr.mxu0 0.0
  %490 = vmatpush1.msra.mxu0 0.0
  %491 = vmatprep.subr.mxu0 0.0
  %492 = vmatpush1.msra.mxu0 0.0
  %493 = vmatprep.subr.mxu0 0.0
  %494 = vmatpush1.msra.mxu0 0.0
  %495 = vmatprep.subr.mxu0 0.0
  %496 = vmatpush1.msra.mxu0 0.0
  %497 = vmatprep.subr.mxu0 0.0
  %498 = vmatpush1.msra.mxu0 0.0
  %499 = vmatprep.subr.mxu0 0.0
  %500 = vmatpush1.msra.mxu0 0.0
  %501 = vmatprep.subr.mxu0 0.0
  %502 = vmatpush1.msra.mxu0 0.0
  %503 = vmatprep.subr.mxu0 0.0
  %504 = vmatpush1.msra.mxu0 0.0
  %505 = vmatprep.subr.mxu0 0.0
  %506 = vmatpush1.msra.mxu0 0.0
  %507 = vmatprep.subr.mxu0 0.0
  %508 = vmatpush1.msra.mxu0 0.0
  %509 = vmatprep.subr.mxu0 0.0
  %510 = vmatpush1.msra.mxu0 0.0
  %511 = vmatprep.mubr.f32.mxu0 0.0
  %512 = vmatmul.mubr.f32.gmra.mrb[0].mxu0 %v374
  %v513 = vpop.f32.mrb[0].mxu0
  %v514 = vadd.f32 0.0, %v513
  %v515 = vpop.f32.mrb[0].mxu0
  %v516 = vadd.f32 0.0, %v515
  %517 = vdwg.mxu0
  %v522 = vrot.slane %v443, 1
  %v523 = vrot.slane %v445, 1
  %v524 = vrot.slane %v514, 1
  %v525 = vrot.slane %v516, 1
  %v526 = vrot.slane %v443, 2
  %v527 = vrot.slane %v445, 2
  %v528 = vrot.slane %v514, 2
  %v529 = vrot.slane %v516, 2
  %v530 = vrot.slane %v443, 3
  %v531 = vrot.slane %v445, 3
  %v532 = vrot.slane %v514, 3
  %v533 = vrot.slane %v516, 3
  %v534 = vrot.slane %v443, 4
  %v535 = vrot.slane %v445, 4
  %v536 = vrot.slane %v514, 4
  %v537 = vrot.slane %v516, 4
  %v538 = vrot.slane %v443, 5
  %v539 = vrot.slane %v445, 5
  %v540 = vrot.slane %v514, 5
  %v541 = vrot.slane %v516, 5
  %v542 = vrot.slane %v443, 6
  %v543 = vrot.slane %v445, 6
  %v544 = vrot.slane %v514, 6
  %v545 = vrot.slane %v516, 6
  %v546 = vrot.slane %v443, 7
  %v547 = vrot.slane %v445, 7
  %v548 = vrot.slane %v514, 7
  %v549 = vrot.slane %v516, 7
  %v582 = vadd.f32 %v215, %v443
  %v583 = vadd.f32 %v217, %v445
  %v584 = vadd.f32 %v328, %v514
  %v585 = vadd.f32 %v330, %v516
  %v586 = vadd.f32 %v221, %v522
  %v587 = vadd.f32 %v223, %v523
  %v588 = vadd.f32 %v334, %v524
  %v589 = vadd.f32 %v336, %v525
  %v590 = vadd.f32 %v227, %v526
  %v591 = vadd.f32 %v229, %v527
  %v592 = vadd.f32 %v340, %v528
  %v593 = vadd.f32 %v342, %v529
  %v594 = vadd.f32 %v233, %v530
  %v595 = vadd.f32 %v235, %v531
  %v596 = vadd.f32 %v346, %v532
  %v597 = vadd.f32 %v348, %v533
  %v598 = vadd.f32 %v239, %v534
  %v599 = vadd.f32 %v241, %v535
  %v600 = vadd.f32 %v352, %v536
  %v601 = vadd.f32 %v354, %v537
  %v602 = vadd.f32 %v245, %v538
  %v603 = vadd.f32 %v247, %v539
  %v604 = vadd.f32 %v358, %v540
  %v605 = vadd.f32 %v360, %v541
  %v606 = vadd.f32 %v251, %v542
  %v607 = vadd.f32 %v253, %v543
  %v608 = vadd.f32 %v364, %v544
  %v609 = vadd.f32 %v366, %v545
  %v610 = vadd.f32 %v257, %v546
  %v611 = vadd.f32 %v259, %v547
  %v612 = vadd.f32 %v370, %v548
  %v613 = vadd.f32 %v372, %v549
  %v614 = vxor.u32 %v582, 2147483648
  %v615 = vxor.u32 %v583, 2147483648
  %v616 = vxor.u32 %v584, 2147483648
  %v617 = vxor.u32 %v586, 2147483648
  %v618 = vxor.u32 %v587, 2147483648
  %v619 = vxor.u32 %v588, 2147483648
  %v620 = vxor.u32 %v590, 2147483648
  %v621 = vxor.u32 %v591, 2147483648
  %v622 = vxor.u32 %v592, 2147483648
  %v623 = vxor.u32 %v594, 2147483648
  %v624 = vxor.u32 %v595, 2147483648
  %v625 = vxor.u32 %v596, 2147483648
  %v626 = vxor.u32 %v598, 2147483648
  %v627 = vxor.u32 %v599, 2147483648
  %v628 = vxor.u32 %v600, 2147483648
  %v629 = vxor.u32 %v602, 2147483648
  %v630 = vxor.u32 %v603, 2147483648
  %v631 = vxor.u32 %v604, 2147483648
  %v632 = vxor.u32 %v606, 2147483648
  %v633 = vxor.u32 %v607, 2147483648
  %v634 = vxor.u32 %v608, 2147483648
  %v635 = vxor.u32 %v610, 2147483648
  %v636 = vxor.u32 %v611, 2147483648
  %v637 = vxor.u32 %v612, 2147483648
  %v638 = vmul.f32 %v614, 1.442695
  %v639 = vpow.pop %v638
  %v640 = vmul.f32 %v615, 1.442695
  %v641 = vpow.pop %v640
  %v642 = vmul.f32 %v616, 1.442695
  %v643 = vpow.pop %v642
  %v644 = vmul.f32 %v617, 1.442695
  %v645 = vpow.pop %v644
  %v646 = vmul.f32 %v618, 1.442695
  %v647 = vpow.pop %v646
  %v648 = vmul.f32 %v619, 1.442695
  %v649 = vpow.pop %v648
  %v650 = vmul.f32 %v620, 1.442695
  %v651 = vpow.pop %v650
  %v652 = vmul.f32 %v621, 1.442695
  %v653 = vpow.pop %v652
  %v654 = vmul.f32 %v622, 1.442695
  %v655 = vpow.pop %v654
  %v656 = vmul.f32 %v623, 1.442695
  %v657 = vpow.pop %v656
  %v658 = vmul.f32 %v624, 1.442695
  %v659 = vpow.pop %v658
  %v660 = vmul.f32 %v625, 1.442695
  %v661 = vpow.pop %v660
  %v662 = vmul.f32 %v626, 1.442695
  %v663 = vpow.pop %v662
  %v664 = vmul.f32 %v627, 1.442695
  %v665 = vpow.pop %v664
  %v666 = vmul.f32 %v628, 1.442695
  %v667 = vpow.pop %v666
  %v668 = vmul.f32 %v629, 1.442695
  %v669 = vpow.pop %v668
  %v670 = vmul.f32 %v630, 1.442695
  %v671 = vpow.pop %v670
  %v672 = vmul.f32 %v631, 1.442695
  %v673 = vpow.pop %v672
  %v674 = vmul.f32 %v632, 1.442695
  %v675 = vpow.pop %v674
  %v676 = vmul.f32 %v633, 1.442695
  %v677 = vpow.pop %v676
  %v678 = vmul.f32 %v634, 1.442695
  %v679 = vpow.pop %v678
  %v680 = vmul.f32 %v635, 1.442695
  %v681 = vpow.pop %v680
  %v682 = vmul.f32 %v636, 1.442695
  %v683 = vpow.pop %v682
  %v684 = vmul.f32 %v637, 1.442695
  %v685 = vpow.pop %v684
  %v686 = vadd.f32 %v639, 1.0
  %v687 = vadd.f32 %v641, 1.0
  %v688 = vadd.f32 %v643, 1.0
  %v689 = vadd.f32 %v645, 1.0
  %v690 = vadd.f32 %v647, 1.0
  %v691 = vadd.f32 %v649, 1.0
  %v692 = vadd.f32 %v651, 1.0
  %v693 = vadd.f32 %v653, 1.0
  %v694 = vadd.f32 %v655, 1.0
  %v695 = vadd.f32 %v657, 1.0
  %v696 = vadd.f32 %v659, 1.0
  %v697 = vadd.f32 %v661, 1.0
  %v698 = vadd.f32 %v663, 1.0
  %v699 = vadd.f32 %v665, 1.0
  %v700 = vadd.f32 %v667, 1.0
  %v701 = vadd.f32 %v669, 1.0
  %v702 = vadd.f32 %v671, 1.0
  %v703 = vadd.f32 %v673, 1.0
  %v704 = vadd.f32 %v675, 1.0
  %v705 = vadd.f32 %v677, 1.0
  %v706 = vadd.f32 %v679, 1.0
  %v707 = vadd.f32 %v681, 1.0
  %v708 = vadd.f32 %v683, 1.0
  %v709 = vadd.f32 %v685, 1.0
  %v710 = vrcp.pop %v686
  %v711 = vmul.f32 1.0, %v710
  %v712 = vrcp.pop %v687
  %v713 = vmul.f32 1.0, %v712
  %v714 = vrcp.pop %v688
  %v715 = vmul.f32 1.0, %v714
  %v716 = vrcp.pop %v689
  %v717 = vmul.f32 1.0, %v716
  %v718 = vrcp.pop %v690
  %v719 = vmul.f32 1.0, %v718
  %v720 = vrcp.pop %v691
  %v721 = vmul.f32 1.0, %v720
  %v722 = vrcp.pop %v692
  %v723 = vmul.f32 1.0, %v722
  %v724 = vrcp.pop %v693
  %v725 = vmul.f32 1.0, %v724
  %v726 = vrcp.pop %v694
  %v727 = vmul.f32 1.0, %v726
  %v728 = vrcp.pop %v695
  %v729 = vmul.f32 1.0, %v728
  %v730 = vrcp.pop %v696
  %v731 = vmul.f32 1.0, %v730
  %v732 = vrcp.pop %v697
  %v733 = vmul.f32 1.0, %v732
  %v734 = vrcp.pop %v698
  %v735 = vmul.f32 1.0, %v734
  %v736 = vrcp.pop %v699
  %v737 = vmul.f32 1.0, %v736
  %v738 = vrcp.pop %v700
  %v739 = vmul.f32 1.0, %v738
  %v740 = vrcp.pop %v701
  %v741 = vmul.f32 1.0, %v740
  %v742 = vrcp.pop %v702
  %v743 = vmul.f32 1.0, %v742
  %v744 = vrcp.pop %v703
  %v745 = vmul.f32 1.0, %v744
  %v746 = vrcp.pop %v704
  %v747 = vmul.f32 1.0, %v746
  %v748 = vrcp.pop %v705
  %v749 = vmul.f32 1.0, %v748
  %v750 = vrcp.pop %v706
  %v751 = vmul.f32 1.0, %v750
  %v752 = vrcp.pop %v707
  %v753 = vmul.f32 1.0, %v752
  %v754 = vrcp.pop %v708
  %v755 = vmul.f32 1.0, %v754
  %v756 = vrcp.pop %v709
  %v757 = vmul.f32 1.0, %v756
  %v758 = vtanh.pop %v585
  %v759 = vtanh.pop %v589
  %v760 = vtanh.pop %v593
  %v761 = vtanh.pop %v597
  %v762 = vtanh.pop %v601
  %v763 = vtanh.pop %v605
  %v764 = vtanh.pop %v609
  %v765 = vtanh.pop %v613
  %v767 = vrot.slane %v375, 1
  %v768 = vrot.slane %v375, 2
  %v769 = vrot.slane %v375, 3
  %v770 = vrot.slane %v375, 4
  %v771 = vrot.slane %v375, 5
  %v772 = vrot.slane %v375, 6
  %v773 = vrot.slane %v375, 7
  %v782 = vmul.f32 %v711, %v375
  %v783 = vmul.f32 %v717, %v767
  %v784 = vmul.f32 %v723, %v768
  %v785 = vmul.f32 %v729, %v769
  %v786 = vmul.f32 %v735, %v770
  %v787 = vmul.f32 %v741, %v771
  %v788 = vmul.f32 %v747, %v772
  %v789 = vmul.f32 %v753, %v773
  %v790 = vmul.f32 %v713, %v758
  %v791 = vmul.f32 %v719, %v759
  %v792 = vmul.f32 %v725, %v760
  %v793 = vmul.f32 %v731, %v761
  %v794 = vmul.f32 %v737, %v762
  %v795 = vmul.f32 %v743, %v763
  %v796 = vmul.f32 %v749, %v764
  %v797 = vmul.f32 %v755, %v765
  %v798 = vadd.f32 %v782, %v790
  %v799 = vadd.f32 %v783, %v791
  %v800 = vadd.f32 %v784, %v792
  %v801 = vadd.f32 %v785, %v793
  %v802 = vadd.f32 %v786, %v794
  %v803 = vadd.f32 %v787, %v795
  %v804 = vadd.f32 %v788, %v796
  %v805 = vadd.f32 %v789, %v797
  %v806 = vtanh.pop %v798
  %v807 = vtanh.pop %v799
  %v808 = vtanh.pop %v800
  %v809 = vtanh.pop %v801
  %v810 = vtanh.pop %v802
  %v811 = vtanh.pop %v803
  %v812 = vtanh.pop %v804
  %v813 = vtanh.pop %v805
  %v814 = vmul.f32 %v715, %v806
  %v815 = vmul.f32 %v721, %v807
  %v816 = vmul.f32 %v727, %v808
  %v817 = vmul.f32 %v733, %v809
  %v818 = vmul.f32 %v739, %v810
  %v819 = vmul.f32 %v745, %v811
  %v820 = vmul.f32 %v751, %v812
  %v821 = vmul.f32 %v757, %v813
  %822 = vst [vmem:[%s4] sm:$0x1] %v814
  %823 = vst [vmem:[%s4 + $0x8] sm:$0x1] %v815
  %824 = vst [vmem:[%s4 + $0x10] sm:$0x1] %v816
  %825 = vst [vmem:[%s4 + $0x18] sm:$0x1] %v817
  %826 = vst [vmem:[%s4 + $0x20] sm:$0x1] %v818
  %827 = vst [vmem:[%s4 + $0x28] sm:$0x1] %v819
  %828 = vst [vmem:[%s4 + $0x30] sm:$0x1] %v820
  %829 = vst [vmem:[%s4 + $0x38] sm:$0x1] %v821
  %v838 = vrot.slane %v815, 7
  %vm839 = vcmask 1041409
  %v840 = vsel %vm839, %v838, %v814
  %v841 = vrot.slane %v816, 6
  %vm842 = vcmask 1042434
  %v843 = vsel %vm842, %v841, %v840
  %v844 = vrot.slane %v817, 5
  %vm845 = vcmask 1043459
  %v846 = vsel %vm845, %v844, %v843
  %v847 = vrot.slane %v818, 4
  %vm848 = vcmask 1044484
  %v849 = vsel %vm848, %v847, %v846
  %v850 = vrot.slane %v819, 3
  %vm851 = vcmask 1045509
  %v852 = vsel %vm851, %v850, %v849
  %v853 = vrot.slane %v820, 2
  %vm854 = vcmask 1046534
  %v855 = vsel %vm854, %v853, %v852
  %v856 = vrot.slane %v821, 1
  %vm857 = vcmask 1047559
  %v858 = vsel %vm857, %v856, %v855
  %860 = vmatprep.subr.mxu0 %v30
  %861 = vmatpush1.msra.mxu0 %v29
  %862 = vmatprep.subr.mxu0 %v34
  %863 = vmatpush1.msra.mxu0 %v33
  %864 = vmatprep.subr.mxu0 %v38
  %865 = vmatpush1.msra.mxu0 %v37
  %866 = vmatprep.subr.mxu0 %v42
  %867 = vmatpush1.msra.mxu0 %v41
  %868 = vmatprep.subr.mxu0 %v46
  %869 = vmatpush1.msra.mxu0 %v45
  %870 = vmatprep.subr.mxu0 %v50
  %871 = vmatpush1.msra.mxu0 %v49
  %872 = vmatprep.subr.mxu0 %v54
  %873 = vmatpush1.msra.mxu0 %v53
  %874 = vmatprep.subr.mxu0 %v58
  %875 = vmatpush1.msra.mxu0 %v57
  %876 = vmatprep.subr.mxu0 %v62
  %877 = vmatpush1.msra.mxu0 %v61
  %878 = vmatprep.subr.mxu0 %v66
  %879 = vmatpush1.msra.mxu0 %v65
  %880 = vmatprep.subr.mxu0 %v70
  %881 = vmatpush1.msra.mxu0 %v69
  %882 = vmatprep.subr.mxu0 %v74
  %883 = vmatpush1.msra.mxu0 %v73
  %884 = vmatprep.subr.mxu0 %v78
  %885 = vmatpush1.msra.mxu0 %v77
  %886 = vmatprep.subr.mxu0 %v82
  %887 = vmatpush1.msra.mxu0 %v81
  %888 = vmatprep.subr.mxu0 %v86
  %889 = vmatpush1.msra.mxu0 %v85
  %890 = vmatprep.subr.mxu0 %v90
  %891 = vmatpush1.msra.mxu0 %v89
  %892 = vmatprep.subr.mxu0 0.0
  %893 = vmatpush1.msra.mxu0 0.0
  %894 = vmatprep.subr.mxu0 0.0
  %895 = vmatpush1.msra.mxu0 0.0
  %896 = vmatprep.subr.mxu0 0.0
  %897 = vmatpush1.msra.mxu0 0.0
  %898 = vmatprep.subr.mxu0 0.0
  %899 = vmatpush1.msra.mxu0 0.0
  %900 = vmatprep.subr.mxu0 0.0
  %901 = vmatpush1.msra.mxu0 0.0
  %902 = vmatprep.subr.mxu0 0.0
  %903 = vmatpush1.msra.mxu0 0.0
  %904 = vmatprep.subr.mxu0 0.0
  %905 = vmatpush1.msra.mxu0 0.0
  %906 = vmatprep.subr.mxu0 0.0
  %907 = vmatpush1.msra.mxu0 0.0
  %908 = vmatprep.subr.mxu0 0.0
  %909 = vmatpush1.msra.mxu0 0.0
  %910 = vmatprep.subr.mxu0 0.0
  %911 = vmatpush1.msra.mxu0 0.0
  %912 = vmatprep.subr.mxu0 0.0
  %913 = vmatpush1.msra.mxu0 0.0
  %914 = vmatprep.subr.mxu0 0.0
  %915 = vmatpush1.msra.mxu0 0.0
  %916 = vmatprep.subr.mxu0 0.0
  %917 = vmatpush1.msra.mxu0 0.0
  %918 = vmatprep.subr.mxu0 0.0
  %919 = vmatpush1.msra.mxu0 0.0
  %920 = vmatprep.subr.mxu0 0.0
  %921 = vmatpush1.msra.mxu0 0.0
  %922 = vmatprep.subr.mxu0 0.0
  %923 = vmatpush1.msra.mxu0 0.0
  %924 = vmatprep.mubr.f32.mxu0 0.0
  %925 = vmatmul.mubr.f32.gmra.mrb[0].mxu0 %v858
  %v926 = vpop.f32.mrb[0].mxu0
  %v927 = vadd.f32 0.0, %v926
  %v928 = vpop.f32.mrb[0].mxu0
  %v929 = vadd.f32 0.0, %v928
  %930 = vdwg.mxu0
  %931 = vmatprep.subr.mxu0 %v32
  %932 = vmatpush1.msra.mxu0 %v31
  %933 = vmatprep.subr.mxu0 %v36
  %934 = vmatpush1.msra.mxu0 %v35
  %935 = vmatprep.subr.mxu0 %v40
  %936 = vmatpush1.msra.mxu0 %v39
  %937 = vmatprep.subr.mxu0 %v44
  %938 = vmatpush1.msra.mxu0 %v43
  %939 = vmatprep.subr.mxu0 %v48
  %940 = vmatpush1.msra.mxu0 %v47
  %941 = vmatprep.subr.mxu0 %v52
  %942 = vmatpush1.msra.mxu0 %v51
  %943 = vmatprep.subr.mxu0 %v56
  %944 = vmatpush1.msra.mxu0 %v55
  %945 = vmatprep.subr.mxu0 %v60
  %946 = vmatpush1.msra.mxu0 %v59
  %947 = vmatprep.subr.mxu0 %v64
  %948 = vmatpush1.msra.mxu0 %v63
  %949 = vmatprep.subr.mxu0 %v68
  %950 = vmatpush1.msra.mxu0 %v67
  %951 = vmatprep.subr.mxu0 %v72
  %952 = vmatpush1.msra.mxu0 %v71
  %953 = vmatprep.subr.mxu0 %v76
  %954 = vmatpush1.msra.mxu0 %v75
  %955 = vmatprep.subr.mxu0 %v80
  %956 = vmatpush1.msra.mxu0 %v79
  %957 = vmatprep.subr.mxu0 %v84
  %958 = vmatpush1.msra.mxu0 %v83
  %959 = vmatprep.subr.mxu0 %v88
  %960 = vmatpush1.msra.mxu0 %v87
  %961 = vmatprep.subr.mxu0 %v92
  %962 = vmatpush1.msra.mxu0 %v91
  %963 = vmatprep.subr.mxu0 0.0
  %964 = vmatpush1.msra.mxu0 0.0
  %965 = vmatprep.subr.mxu0 0.0
  %966 = vmatpush1.msra.mxu0 0.0
  %967 = vmatprep.subr.mxu0 0.0
  %968 = vmatpush1.msra.mxu0 0.0
  %969 = vmatprep.subr.mxu0 0.0
  %970 = vmatpush1.msra.mxu0 0.0
  %971 = vmatprep.subr.mxu0 0.0
  %972 = vmatpush1.msra.mxu0 0.0
  %973 = vmatprep.subr.mxu0 0.0
  %974 = vmatpush1.msra.mxu0 0.0
  %975 = vmatprep.subr.mxu0 0.0
  %976 = vmatpush1.msra.mxu0 0.0
  %977 = vmatprep.subr.mxu0 0.0
  %978 = vmatpush1.msra.mxu0 0.0
  %979 = vmatprep.subr.mxu0 0.0
  %980 = vmatpush1.msra.mxu0 0.0
  %981 = vmatprep.subr.mxu0 0.0
  %982 = vmatpush1.msra.mxu0 0.0
  %983 = vmatprep.subr.mxu0 0.0
  %984 = vmatpush1.msra.mxu0 0.0
  %985 = vmatprep.subr.mxu0 0.0
  %986 = vmatpush1.msra.mxu0 0.0
  %987 = vmatprep.subr.mxu0 0.0
  %988 = vmatpush1.msra.mxu0 0.0
  %989 = vmatprep.subr.mxu0 0.0
  %990 = vmatpush1.msra.mxu0 0.0
  %991 = vmatprep.subr.mxu0 0.0
  %992 = vmatpush1.msra.mxu0 0.0
  %993 = vmatprep.subr.mxu0 0.0
  %994 = vmatpush1.msra.mxu0 0.0
  %995 = vmatprep.mubr.f32.mxu0 0.0
  %996 = vmatmul.mubr.f32.gmra.mrb[0].mxu0 %v858
  %v997 = vpop.f32.mrb[0].mxu0
  %v998 = vadd.f32 0.0, %v997
  %v999 = vpop.f32.mrb[0].mxu0
  %v1000 = vadd.f32 0.0, %v999
  %1001 = vdwg.mxu0
  %v1006 = vrot.slane %v927, 7
  %v1007 = vrot.slane %v929, 7
  %v1008 = vrot.slane %v998, 7
  %v1009 = vrot.slane %v1000, 7
  %v1010 = vrot.slane %v927, 1
  %v1011 = vrot.slane %v929, 1
  %v1012 = vrot.slane %v998, 1
  %v1013 = vrot.slane %v1000, 1
  %v1014 = vrot.slane %v927, 2
  %v1015 = vrot.slane %v929, 2
  %v1016 = vrot.slane %v998, 2
  %v1017 = vrot.slane %v1000, 2
  %v1018 = vrot.slane %v927, 3
  %v1019 = vrot.slane %v929, 3
  %v1020 = vrot.slane %v998, 3
  %v1021 = vrot.slane %v1000, 3
  %v1022 = vrot.slane %v927, 4
  %v1023 = vrot.slane %v929, 4
  %v1024 = vrot.slane %v998, 4
  %v1025 = vrot.slane %v1000, 4
  %v1026 = vrot.slane %v927, 5
  %v1027 = vrot.slane %v929, 5
  %v1028 = vrot.slane %v998, 5
  %v1029 = vrot.slane %v1000, 5
  %v1030 = vrot.slane %v927, 6
  %v1031 = vrot.slane %v929, 6
  %v1032 = vrot.slane %v998, 6
  %v1033 = vrot.slane %v1000, 6
  %v1066 = vadd.f32 %v215, %v1006
  %v1067 = vadd.f32 %v217, %v1007
  %v1068 = vadd.f32 %v328, %v1008
  %v1069 = vadd.f32 %v330, %v1009
  %v1070 = vadd.f32 %v221, %v927
  %v1071 = vadd.f32 %v223, %v929
  %v1072 = vadd.f32 %v334, %v998
  %v1073 = vadd.f32 %v336, %v1000
  %v1074 = vadd.f32 %v227, %v1010
  %v1075 = vadd.f32 %v229, %v1011
  %v1076 = vadd.f32 %v340, %v1012
  %v1077 = vadd.f32 %v342, %v1013
  %v1078 = vadd.f32 %v233, %v1014
  %v1079 = vadd.f32 %v235, %v1015
  %v1080 = vadd.f32 %v346, %v1016
  %v1081 = vadd.f32 %v348, %v1017
  %v1082 = vadd.f32 %v239, %v1018
  %v1083 = vadd.f32 %v241, %v1019
  %v1084 = vadd.f32 %v352, %v1020
  %v1085 = vadd.f32 %v354, %v1021
  %v1086 = vadd.f32 %v245, %v1022
  %v1087 = vadd.f32 %v247, %v1023
  %v1088 = vadd.f32 %v358, %v1024
  %v1089 = vadd.f32 %v360, %v1025
  %v1090 = vadd.f32 %v251, %v1026
  %v1091 = vadd.f32 %v253, %v1027
  %v1092 = vadd.f32 %v364, %v1028
  %v1093 = vadd.f32 %v366, %v1029
  %v1094 = vadd.f32 %v257, %v1030
  %v1095 = vadd.f32 %v259, %v1031
  %v1096 = vadd.f32 %v370, %v1032
  %v1097 = vadd.f32 %v372, %v1033
  %v1098 = vxor.u32 %v1066, 2147483648
  %v1099 = vxor.u32 %v1067, 2147483648
  %v1100 = vxor.u32 %v1068, 2147483648
  %v1101 = vxor.u32 %v1070, 2147483648
  %v1102 = vxor.u32 %v1071, 2147483648
  %v1103 = vxor.u32 %v1072, 2147483648
  %v1104 = vxor.u32 %v1074, 2147483648
  %v1105 = vxor.u32 %v1075, 2147483648
  %v1106 = vxor.u32 %v1076, 2147483648
  %v1107 = vxor.u32 %v1078, 2147483648
  %v1108 = vxor.u32 %v1079, 2147483648
  %v1109 = vxor.u32 %v1080, 2147483648
  %v1110 = vxor.u32 %v1082, 2147483648
  %v1111 = vxor.u32 %v1083, 2147483648
  %v1112 = vxor.u32 %v1084, 2147483648
  %v1113 = vxor.u32 %v1086, 2147483648
  %v1114 = vxor.u32 %v1087, 2147483648
  %v1115 = vxor.u32 %v1088, 2147483648
  %v1116 = vxor.u32 %v1090, 2147483648
  %v1117 = vxor.u32 %v1091, 2147483648
  %v1118 = vxor.u32 %v1092, 2147483648
  %v1119 = vxor.u32 %v1094, 2147483648
  %v1120 = vxor.u32 %v1095, 2147483648
  %v1121 = vxor.u32 %v1096, 2147483648
  %v1122 = vmul.f32 %v1098, 1.442695
  %v1123 = vpow.pop %v1122
  %v1124 = vmul.f32 %v1099, 1.442695
  %v1125 = vpow.pop %v1124
  %v1126 = vmul.f32 %v1100, 1.442695
  %v1127 = vpow.pop %v1126
  %v1128 = vmul.f32 %v1101, 1.442695
  %v1129 = vpow.pop %v1128
  %v1130 = vmul.f32 %v1102, 1.442695
  %v1131 = vpow.pop %v1130
  %v1132 = vmul.f32 %v1103, 1.442695
  %v1133 = vpow.pop %v1132
  %v1134 = vmul.f32 %v1104, 1.442695
  %v1135 = vpow.pop %v1134
  %v1136 = vmul.f32 %v1105, 1.442695
  %v1137 = vpow.pop %v1136
  %v1138 = vmul.f32 %v1106, 1.442695
  %v1139 = vpow.pop %v1138
  %v1140 = vmul.f32 %v1107, 1.442695
  %v1141 = vpow.pop %v1140
  %v1142 = vmul.f32 %v1108, 1.442695
  %v1143 = vpow.pop %v1142
  %v1144 = vmul.f32 %v1109, 1.442695
  %v1145 = vpow.pop %v1144
  %v1146 = vmul.f32 %v1110, 1.442695
  %v1147 = vpow.pop %v1146
  %v1148 = vmul.f32 %v1111, 1.442695
  %v1149 = vpow.pop %v1148
  %v1150 = vmul.f32 %v1112, 1.442695
  %v1151 = vpow.pop %v1150
  %v1152 = vmul.f32 %v1113, 1.442695
  %v1153 = vpow.pop %v1152
  %v1154 = vmul.f32 %v1114, 1.442695
  %v1155 = vpow.pop %v1154
  %v1156 = vmul.f32 %v1115, 1.442695
  %v1157 = vpow.pop %v1156
  %v1158 = vmul.f32 %v1116, 1.442695
  %v1159 = vpow.pop %v1158
  %v1160 = vmul.f32 %v1117, 1.442695
  %v1161 = vpow.pop %v1160
  %v1162 = vmul.f32 %v1118, 1.442695
  %v1163 = vpow.pop %v1162
  %v1164 = vmul.f32 %v1119, 1.442695
  %v1165 = vpow.pop %v1164
  %v1166 = vmul.f32 %v1120, 1.442695
  %v1167 = vpow.pop %v1166
  %v1168 = vmul.f32 %v1121, 1.442695
  %v1169 = vpow.pop %v1168
  %v1170 = vadd.f32 %v1123, 1.0
  %v1171 = vadd.f32 %v1125, 1.0
  %v1172 = vadd.f32 %v1127, 1.0
  %v1173 = vadd.f32 %v1129, 1.0
  %v1174 = vadd.f32 %v1131, 1.0
  %v1175 = vadd.f32 %v1133, 1.0
  %v1176 = vadd.f32 %v1135, 1.0
  %v1177 = vadd.f32 %v1137, 1.0
  %v1178 = vadd.f32 %v1139, 1.0
  %v1179 = vadd.f32 %v1141, 1.0
  %v1180 = vadd.f32 %v1143, 1.0
  %v1181 = vadd.f32 %v1145, 1.0
  %v1182 = vadd.f32 %v1147, 1.0
  %v1183 = vadd.f32 %v1149, 1.0
  %v1184 = vadd.f32 %v1151, 1.0
  %v1185 = vadd.f32 %v1153, 1.0
  %v1186 = vadd.f32 %v1155, 1.0
  %v1187 = vadd.f32 %v1157, 1.0
  %v1188 = vadd.f32 %v1159, 1.0
  %v1189 = vadd.f32 %v1161, 1.0
  %v1190 = vadd.f32 %v1163, 1.0
  %v1191 = vadd.f32 %v1165, 1.0
  %v1192 = vadd.f32 %v1167, 1.0
  %v1193 = vadd.f32 %v1169, 1.0
  %v1194 = vrcp.pop %v1170
  %v1195 = vmul.f32 1.0, %v1194
  %v1196 = vrcp.pop %v1171
  %v1197 = vmul.f32 1.0, %v1196
  %v1198 = vrcp.pop %v1172
  %v1199 = vmul.f32 1.0, %v1198
  %v1200 = vrcp.pop %v1173
  %v1201 = vmul.f32 1.0, %v1200
  %v1202 = vrcp.pop %v1174
  %v1203 = vmul.f32 1.0, %v1202
  %v1204 = vrcp.pop %v1175
  %v1205 = vmul.f32 1.0, %v1204
  %v1206 = vrcp.pop %v1176
  %v1207 = vmul.f32 1.0, %v1206
  %v1208 = vrcp.pop %v1177
  %v1209 = vmul.f32 1.0, %v1208
  %v1210 = vrcp.pop %v1178
  %v1211 = vmul.f32 1.0, %v1210
  %v1212 = vrcp.pop %v1179
  %v1213 = vmul.f32 1.0, %v1212
  %v1214 = vrcp.pop %v1180
  %v1215 = vmul.f32 1.0, %v1214
  %v1216 = vrcp.pop %v1181
  %v1217 = vmul.f32 1.0, %v1216
  %v1218 = vrcp.pop %v1182
  %v1219 = vmul.f32 1.0, %v1218
  %v1220 = vrcp.pop %v1183
  %v1221 = vmul.f32 1.0, %v1220
  %v1222 = vrcp.pop %v1184
  %v1223 = vmul.f32 1.0, %v1222
  %v1224 = vrcp.pop %v1185
  %v1225 = vmul.f32 1.0, %v1224
  %v1226 = vrcp.pop %v1186
  %v1227 = vmul.f32 1.0, %v1226
  %v1228 = vrcp.pop %v1187
  %v1229 = vmul.f32 1.0, %v1228
  %v1230 = vrcp.pop %v1188
  %v1231 = vmul.f32 1.0, %v1230
  %v1232 = vrcp.pop %v1189
  %v1233 = vmul.f32 1.0, %v1232
  %v1234 = vrcp.pop %v1190
  %v1235 = vmul.f32 1.0, %v1234
  %v1236 = vrcp.pop %v1191
  %v1237 = vmul.f32 1.0, %v1236
  %v1238 = vrcp.pop %v1192
  %v1239 = vmul.f32 1.0, %v1238
  %v1240 = vrcp.pop %v1193
  %v1241 = vmul.f32 1.0, %v1240
  %v1242 = vtanh.pop %v1069
  %v1243 = vtanh.pop %v1073
  %v1244 = vtanh.pop %v1077
  %v1245 = vtanh.pop %v1081
  %v1246 = vtanh.pop %v1085
  %v1247 = vtanh.pop %v1089
  %v1248 = vtanh.pop %v1093
  %v1249 = vtanh.pop %v1097
  %v1258 = vrot.slane %v798, 7
  %v1259 = vrot.slane %v799, 7
  %v1260 = vrot.slane %v800, 7
  %v1261 = vrot.slane %v801, 7
  %v1262 = vrot.slane %v802, 7
  %v1263 = vrot.slane %v803, 7
  %v1264 = vrot.slane %v804, 7
  %v1265 = vrot.slane %v805, 7
  %v1274 = vmul.f32 %v1195, %v1258
  %v1275 = vmul.f32 %v1201, %v1259
  %v1276 = vmul.f32 %v1207, %v1260
  %v1277 = vmul.f32 %v1213, %v1261
  %v1278 = vmul.f32 %v1219, %v1262
  %v1279 = vmul.f32 %v1225, %v1263
  %v1280 = vmul.f32 %v1231, %v1264
  %v1281 = vmul.f32 %v1237, %v1265
  %v1282 = vmul.f32 %v1197, %v1242
  %v1283 = vmul.f32 %v1203, %v1243
  %v1284 = vmul.f32 %v1209, %v1244
  %v1285 = vmul.f32 %v1215, %v1245
  %v1286 = vmul.f32 %v1221, %v1246
  %v1287 = vmul.f32 %v1227, %v1247
  %v1288 = vmul.f32 %v1233, %v1248
  %v1289 = vmul.f32 %v1239, %v1249
  %v1290 = vadd.f32 %v1274, %v1282
  %v1291 = vadd.f32 %v1275, %v1283
  %v1292 = vadd.f32 %v1276, %v1284
  %v1293 = vadd.f32 %v1277, %v1285
  %v1294 = vadd.f32 %v1278, %v1286
  %v1295 = vadd.f32 %v1279, %v1287
  %v1296 = vadd.f32 %v1280, %v1288
  %v1297 = vadd.f32 %v1281, %v1289
  %v1298 = vtanh.pop %v1290
  %v1299 = vtanh.pop %v1291
  %v1300 = vtanh.pop %v1292
  %v1301 = vtanh.pop %v1293
  %v1302 = vtanh.pop %v1294
  %v1303 = vtanh.pop %v1295
  %v1304 = vtanh.pop %v1296
  %v1305 = vtanh.pop %v1297
  %v1306 = vmul.f32 %v1199, %v1298
  %v1307 = vmul.f32 %v1205, %v1299
  %v1308 = vmul.f32 %v1211, %v1300
  %v1309 = vmul.f32 %v1217, %v1301
  %v1310 = vmul.f32 %v1223, %v1302
  %v1311 = vmul.f32 %v1229, %v1303
  %v1312 = vmul.f32 %v1235, %v1304
  %v1313 = vmul.f32 %v1241, %v1305
  %1314 = vst [vmem:[%s4] sm:$0x2] %v1306
  %1315 = vst [vmem:[%s4 + $0x8] sm:$0x2] %v1307
  %1316 = vst [vmem:[%s4 + $0x10] sm:$0x2] %v1308
  %1317 = vst [vmem:[%s4 + $0x18] sm:$0x2] %v1309
  %1318 = vst [vmem:[%s4 + $0x20] sm:$0x2] %v1310
  %1319 = vst [vmem:[%s4 + $0x28] sm:$0x2] %v1311
  %1320 = vst [vmem:[%s4 + $0x30] sm:$0x2] %v1312
  %1321 = vst [vmem:[%s4 + $0x38] sm:$0x2] %v1313
  %v1330 = vrot.slane %v1306, 1
  %v1331 = vsel %vm839, %v1307, %v1330
  %v1332 = vrot.slane %v1308, 7
  %v1333 = vsel %vm842, %v1332, %v1331
  %v1334 = vrot.slane %v1309, 6
  %v1335 = vsel %vm845, %v1334, %v1333
  %v1336 = vrot.slane %v1310, 5
  %v1337 = vsel %vm848, %v1336, %v1335
  %v1338 = vrot.slane %v1311, 4
  %v1339 = vsel %vm851, %v1338, %v1337
  %v1340 = vrot.slane %v1312, 3
  %v1341 = vsel %vm854, %v1340, %v1339
  %v1342 = vrot.slane %v1313, 2
  %v1343 = vsel %vm857, %v1342, %v1341
  %1345 = vmatprep.subr.mxu0 %v30
  %1346 = vmatpush1.msra.mxu0 %v29
  %1347 = vmatprep.subr.mxu0 %v34
  %1348 = vmatpush1.msra.mxu0 %v33
  %1349 = vmatprep.subr.mxu0 %v38
  %1350 = vmatpush1.msra.mxu0 %v37
  %1351 = vmatprep.subr.mxu0 %v42
  %1352 = vmatpush1.msra.mxu0 %v41
  %1353 = vmatprep.subr.mxu0 %v46
  %1354 = vmatpush1.msra.mxu0 %v45
  %1355 = vmatprep.subr.mxu0 %v50
  %1356 = vmatpush1.msra.mxu0 %v49
  %1357 = vmatprep.subr.mxu0 %v54
  %1358 = vmatpush1.msra.mxu0 %v53
  %1359 = vmatprep.subr.mxu0 %v58
  %1360 = vmatpush1.msra.mxu0 %v57
  %1361 = vmatprep.subr.mxu0 %v62
  %1362 = vmatpush1.msra.mxu0 %v61
  %1363 = vmatprep.subr.mxu0 %v66
  %1364 = vmatpush1.msra.mxu0 %v65
  %1365 = vmatprep.subr.mxu0 %v70
  %1366 = vmatpush1.msra.mxu0 %v69
  %1367 = vmatprep.subr.mxu0 %v74
  %1368 = vmatpush1.msra.mxu0 %v73
  %1369 = vmatprep.subr.mxu0 %v78
  %1370 = vmatpush1.msra.mxu0 %v77
  %1371 = vmatprep.subr.mxu0 %v82
  %1372 = vmatpush1.msra.mxu0 %v81
  %1373 = vmatprep.subr.mxu0 %v86
  %1374 = vmatpush1.msra.mxu0 %v85
  %1375 = vmatprep.subr.mxu0 %v90
  %1376 = vmatpush1.msra.mxu0 %v89
  %1377 = vmatprep.subr.mxu0 0.0
  %1378 = vmatpush1.msra.mxu0 0.0
  %1379 = vmatprep.subr.mxu0 0.0
  %1380 = vmatpush1.msra.mxu0 0.0
  %1381 = vmatprep.subr.mxu0 0.0
  %1382 = vmatpush1.msra.mxu0 0.0
  %1383 = vmatprep.subr.mxu0 0.0
  %1384 = vmatpush1.msra.mxu0 0.0
  %1385 = vmatprep.subr.mxu0 0.0
  %1386 = vmatpush1.msra.mxu0 0.0
  %1387 = vmatprep.subr.mxu0 0.0
  %1388 = vmatpush1.msra.mxu0 0.0
  %1389 = vmatprep.subr.mxu0 0.0
  %1390 = vmatpush1.msra.mxu0 0.0
  %1391 = vmatprep.subr.mxu0 0.0
  %1392 = vmatpush1.msra.mxu0 0.0
  %1393 = vmatprep.subr.mxu0 0.0
  %1394 = vmatpush1.msra.mxu0 0.0
  %1395 = vmatprep.subr.mxu0 0.0
  %1396 = vmatpush1.msra.mxu0 0.0
  %1397 = vmatprep.subr.mxu0 0.0
  %1398 = vmatpush1.msra.mxu0 0.0
  %1399 = vmatprep.subr.mxu0 0.0
  %1400 = vmatpush1.msra.mxu0 0.0
  %1401 = vmatprep.subr.mxu0 0.0
  %1402 = vmatpush1.msra.mxu0 0.0
  %1403 = vmatprep.subr.mxu0 0.0
  %1404 = vmatpush1.msra.mxu0 0.0
  %1405 = vmatprep.subr.mxu0 0.0
  %1406 = vmatpush1.msra.mxu0 0.0
  %1407 = vmatprep.subr.mxu0 0.0
  %1408 = vmatpush1.msra.mxu0 0.0
  %1409 = vmatprep.mubr.f32.mxu0 0.0
  %1410 = vmatmul.mubr.f32.gmra.mrb[0].mxu0 %v1343
  %v1411 = vpop.f32.mrb[0].mxu0
  %v1412 = vadd.f32 0.0, %v1411
  %v1413 = vpop.f32.mrb[0].mxu0
  %v1414 = vadd.f32 0.0, %v1413
  %1415 = vdwg.mxu0
  %1416 = vmatprep.subr.mxu0 %v32
  %1417 = vmatpush1.msra.mxu0 %v31
  %1418 = vmatprep.subr.mxu0 %v36
  %1419 = vmatpush1.msra.mxu0 %v35
  %1420 = vmatprep.subr.mxu0 %v40
  %1421 = vmatpush1.msra.mxu0 %v39
  %1422 = vmatprep.subr.mxu0 %v44
  %1423 = vmatpush1.msra.mxu0 %v43
  %1424 = vmatprep.subr.mxu0 %v48
  %1425 = vmatpush1.msra.mxu0 %v47
  %1426 = vmatprep.subr.mxu0 %v52
  %1427 = vmatpush1.msra.mxu0 %v51
  %1428 = vmatprep.subr.mxu0 %v56
  %1429 = vmatpush1.msra.mxu0 %v55
  %1430 = vmatprep.subr.mxu0 %v60
  %1431 = vmatpush1.msra.mxu0 %v59
  %1432 = vmatprep.subr.mxu0 %v64
  %1433 = vmatpush1.msra.mxu0 %v63
  %1434 = vmatprep.subr.mxu0 %v68
  %1435 = vmatpush1.msra.mxu0 %v67
  %1436 = vmatprep.subr.mxu0 %v72
  %1437 = vmatpush1.msra.mxu0 %v71
  %1438 = vmatprep.subr.mxu0 %v76
  %1439 = vmatpush1.msra.mxu0 %v75
  %1440 = vmatprep.subr.mxu0 %v80
  %1441 = vmatpush1.msra.mxu0 %v79
  %1442 = vmatprep.subr.mxu0 %v84
  %1443 = vmatpush1.msra.mxu0 %v83
  %1444 = vmatprep.subr.mxu0 %v88
  %1445 = vmatpush1.msra.mxu0 %v87
  %1446 = vmatprep.subr.mxu0 %v92
  %1447 = vmatpush1.msra.mxu0 %v91
  %1448 = vmatprep.subr.mxu0 0.0
  %1449 = vmatpush1.msra.mxu0 0.0
  %1450 = vmatprep.subr.mxu0 0.0
  %1451 = vmatpush1.msra.mxu0 0.0
  %1452 = vmatprep.subr.mxu0 0.0
  %1453 = vmatpush1.msra.mxu0 0.0
  %1454 = vmatprep.subr.mxu0 0.0
  %1455 = vmatpush1.msra.mxu0 0.0
  %1456 = vmatprep.subr.mxu0 0.0
  %1457 = vmatpush1.msra.mxu0 0.0
  %1458 = vmatprep.subr.mxu0 0.0
  %1459 = vmatpush1.msra.mxu0 0.0
  %1460 = vmatprep.subr.mxu0 0.0
  %1461 = vmatpush1.msra.mxu0 0.0
  %1462 = vmatprep.subr.mxu0 0.0
  %1463 = vmatpush1.msra.mxu0 0.0
  %1464 = vmatprep.subr.mxu0 0.0
  %1465 = vmatpush1.msra.mxu0 0.0
  %1466 = vmatprep.subr.mxu0 0.0
  %1467 = vmatpush1.msra.mxu0 0.0
  %1468 = vmatprep.subr.mxu0 0.0
  %1469 = vmatpush1.msra.mxu0 0.0
  %1470 = vmatprep.subr.mxu0 0.0
  %1471 = vmatpush1.msra.mxu0 0.0
  %1472 = vmatprep.subr.mxu0 0.0
  %1473 = vmatpush1.msra.mxu0 0.0
  %1474 = vmatprep.subr.mxu0 0.0
  %1475 = vmatpush1.msra.mxu0 0.0
  %1476 = vmatprep.subr.mxu0 0.0
  %1477 = vmatpush1.msra.mxu0 0.0
  %1478 = vmatprep.subr.mxu0 0.0
  %1479 = vmatpush1.msra.mxu0 0.0
  %1480 = vmatprep.mubr.f32.mxu0 0.0
  %1481 = vmatmul.mubr.f32.gmra.mrb[0].mxu0 %v1343
  %v1482 = vpop.f32.mrb[0].mxu0
  %v1483 = vadd.f32 0.0, %v1482
  %v1484 = vpop.f32.mrb[0].mxu0
  %v1485 = vadd.f32 0.0, %v1484
  %1486 = vdwg.mxu0
  %v1491 = vrot.slane %v1412, 6
  %v1492 = vrot.slane %v1414, 6
  %v1493 = vrot.slane %v1483, 6
  %v1494 = vrot.slane %v1485, 6
  %v1495 = vrot.slane %v1412, 7
  %v1496 = vrot.slane %v1414, 7
  %v1497 = vrot.slane %v1483, 7
  %v1498 = vrot.slane %v1485, 7
  %v1499 = vrot.slane %v1412, 1
  %v1500 = vrot.slane %v1414, 1
  %v1501 = vrot.slane %v1483, 1
  %v1502 = vrot.slane %v1485, 1
  %v1503 = vrot.slane %v1412, 2
  %v1504 = vrot.slane %v1414, 2
  %v1505 = vrot.slane %v1483, 2
  %v1506 = vrot.slane %v1485, 2
  %v1507 = vrot.slane %v1412, 3
  %v1508 = vrot.slane %v1414, 3
  %v1509 = vrot.slane %v1483, 3
  %v1510 = vrot.slane %v1485, 3
  %v1511 = vrot.slane %v1412, 4
  %v1512 = vrot.slane %v1414, 4
  %v1513 = vrot.slane %v1483, 4
  %v1514 = vrot.slane %v1485, 4
  %v1515 = vrot.slane %v1412, 5
  %v1516 = vrot.slane %v1414, 5
  %v1517 = vrot.slane %v1483, 5
  %v1518 = vrot.slane %v1485, 5
  %v1551 = vadd.f32 %v215, %v1491
  %v1552 = vadd.f32 %v217, %v1492
  %v1553 = vadd.f32 %v328, %v1493
  %v1554 = vadd.f32 %v330, %v1494
  %v1555 = vadd.f32 %v221, %v1495
  %v1556 = vadd.f32 %v223, %v1496
  %v1557 = vadd.f32 %v334, %v1497
  %v1558 = vadd.f32 %v336, %v1498
  %v1559 = vadd.f32 %v227, %v1412
  %v1560 = vadd.f32 %v229, %v1414
  %v1561 = vadd.f32 %v340, %v1483
  %v1562 = vadd.f32 %v342, %v1485
  %v1563 = vadd.f32 %v233, %v1499
  %v1564 = vadd.f32 %v235, %v1500
  %v1565 = vadd.f32 %v346, %v1501
  %v1566 = vadd.f32 %v348, %v1502
  %v1567 = vadd.f32 %v239, %v1503
  %v1568 = vadd.f32 %v241, %v1504
  %v1569 = vadd.f32 %v352, %v1505
  %v1570 = vadd.f32 %v354, %v1506
  %v1571 = vadd.f32 %v245, %v1507
  %v1572 = vadd.f32 %v247, %v1508
  %v1573 = vadd.f32 %v358, %v1509
  %v1574 = vadd.f32 %v360, %v1510
  %v1575 = vadd.f32 %v251, %v1511
  %v1576 = vadd.f32 %v253, %v1512
  %v1577 = vadd.f32 %v364, %v1513
  %v1578 = vadd.f32 %v366, %v1514
  %v1579 = vadd.f32 %v257, %v1515
  %v1580 = vadd.f32 %v259, %v1516
  %v1581 = vadd.f32 %v370, %v1517
  %v1582 = vadd.f32 %v372, %v1518
  %v1583 = vxor.u32 %v1551, 2147483648
  %v1584 = vxor.u32 %v1552, 2147483648
  %v1585 = vxor.u32 %v1553, 2147483648
  %v1586 = vxor.u32 %v1555, 2147483648
  %v1587 = vxor.u32 %v1556, 2147483648
  %v1588 = vxor.u32 %v1557, 2147483648
  %v1589 = vxor.u32 %v1559, 2147483648
  %v1590 = vxor.u32 %v1560, 2147483648
  %v1591 = vxor.u32 %v1561, 2147483648
  %v1592 = vxor.u32 %v1563, 2147483648
  %v1593 = vxor.u32 %v1564, 2147483648
  %v1594 = vxor.u32 %v1565, 2147483648
  %v1595 = vxor.u32 %v1567, 2147483648
  %v1596 = vxor.u32 %v1568, 2147483648
  %v1597 = vxor.u32 %v1569, 2147483648
  %v1598 = vxor.u32 %v1571, 2147483648
  %v1599 = vxor.u32 %v1572, 2147483648
  %v1600 = vxor.u32 %v1573, 2147483648
  %v1601 = vxor.u32 %v1575, 2147483648
  %v1602 = vxor.u32 %v1576, 2147483648
  %v1603 = vxor.u32 %v1577, 2147483648
  %v1604 = vxor.u32 %v1579, 2147483648
  %v1605 = vxor.u32 %v1580, 2147483648
  %v1606 = vxor.u32 %v1581, 2147483648
  %v1607 = vmul.f32 %v1583, 1.442695
  %v1608 = vpow.pop %v1607
  %v1609 = vmul.f32 %v1584, 1.442695
  %v1610 = vpow.pop %v1609
  %v1611 = vmul.f32 %v1585, 1.442695
  %v1612 = vpow.pop %v1611
  %v1613 = vmul.f32 %v1586, 1.442695
  %v1614 = vpow.pop %v1613
  %v1615 = vmul.f32 %v1587, 1.442695
  %v1616 = vpow.pop %v1615
  %v1617 = vmul.f32 %v1588, 1.442695
  %v1618 = vpow.pop %v1617
  %v1619 = vmul.f32 %v1589, 1.442695
  %v1620 = vpow.pop %v1619
  %v1621 = vmul.f32 %v1590, 1.442695
  %v1622 = vpow.pop %v1621
  %v1623 = vmul.f32 %v1591, 1.442695
  %v1624 = vpow.pop %v1623
  %v1625 = vmul.f32 %v1592, 1.442695
  %v1626 = vpow.pop %v1625
  %v1627 = vmul.f32 %v1593, 1.442695
  %v1628 = vpow.pop %v1627
  %v1629 = vmul.f32 %v1594, 1.442695
  %v1630 = vpow.pop %v1629
  %v1631 = vmul.f32 %v1595, 1.442695
  %v1632 = vpow.pop %v1631
  %v1633 = vmul.f32 %v1596, 1.442695
  %v1634 = vpow.pop %v1633
  %v1635 = vmul.f32 %v1597, 1.442695
  %v1636 = vpow.pop %v1635
  %v1637 = vmul.f32 %v1598, 1.442695
  %v1638 = vpow.pop %v1637
  %v1639 = vmul.f32 %v1599, 1.442695
  %v1640 = vpow.pop %v1639
  %v1641 = vmul.f32 %v1600, 1.442695
  %v1642 = vpow.pop %v1641
  %v1643 = vmul.f32 %v1601, 1.442695
  %v1644 = vpow.pop %v1643
  %v1645 = vmul.f32 %v1602, 1.442695
  %v1646 = vpow.pop %v1645
  %v1647 = vmul.f32 %v1603, 1.442695
  %v1648 = vpow.pop %v1647
  %v1649 = vmul.f32 %v1604, 1.442695
  %v1650 = vpow.pop %v1649
  %v1651 = vmul.f32 %v1605, 1.442695
  %v1652 = vpow.pop %v1651
  %v1653 = vmul.f32 %v1606, 1.442695
  %v1654 = vpow.pop %v1653
  %v1655 = vadd.f32 %v1608, 1.0
  %v1656 = vadd.f32 %v1610, 1.0
  %v1657 = vadd.f32 %v1612, 1.0
  %v1658 = vadd.f32 %v1614, 1.0
  %v1659 = vadd.f32 %v1616, 1.0
  %v1660 = vadd.f32 %v1618, 1.0
  %v1661 = vadd.f32 %v1620, 1.0
  %v1662 = vadd.f32 %v1622, 1.0
  %v1663 = vadd.f32 %v1624, 1.0
  %v1664 = vadd.f32 %v1626, 1.0
  %v1665 = vadd.f32 %v1628, 1.0
  %v1666 = vadd.f32 %v1630, 1.0
  %v1667 = vadd.f32 %v1632, 1.0
  %v1668 = vadd.f32 %v1634, 1.0
  %v1669 = vadd.f32 %v1636, 1.0
  %v1670 = vadd.f32 %v1638, 1.0
  %v1671 = vadd.f32 %v1640, 1.0
  %v1672 = vadd.f32 %v1642, 1.0
  %v1673 = vadd.f32 %v1644, 1.0
  %v1674 = vadd.f32 %v1646, 1.0
  %v1675 = vadd.f32 %v1648, 1.0
  %v1676 = vadd.f32 %v1650, 1.0
  %v1677 = vadd.f32 %v1652, 1.0
  %v1678 = vadd.f32 %v1654, 1.0
  %v1679 = vrcp.pop %v1655
  %v1680 = vmul.f32 1.0, %v1679
  %v1681 = vrcp.pop %v1656
  %v1682 = vmul.f32 1.0, %v1681
  %v1683 = vrcp.pop %v1657
  %v1684 = vmul.f32 1.0, %v1683
  %v1685 = vrcp.pop %v1658
  %v1686 = vmul.f32 1.0, %v1685
  %v1687 = vrcp.pop %v1659
  %v1688 = vmul.f32 1.0, %v1687
  %v1689 = vrcp.pop %v1660
  %v1690 = vmul.f32 1.0, %v1689
  %v1691 = vrcp.pop %v1661
  %v1692 = vmul.f32 1.0, %v1691
  %v1693 = vrcp.pop %v1662
  %v1694 = vmul.f32 1.0, %v1693
  %v1695 = vrcp.pop %v1663
  %v1696 = vmul.f32 1.0, %v1695
  %v1697 = vrcp.pop %v1664
  %v1698 = vmul.f32 1.0, %v1697
  %v1699 = vrcp.pop %v1665
  %v1700 = vmul.f32 1.0, %v1699
  %v1701 = vrcp.pop %v1666
  %v1702 = vmul.f32 1.0, %v1701
  %v1703 = vrcp.pop %v1667
  %v1704 = vmul.f32 1.0, %v1703
  %v1705 = vrcp.pop %v1668
  %v1706 = vmul.f32 1.0, %v1705
  %v1707 = vrcp.pop %v1669
  %v1708 = vmul.f32 1.0, %v1707
  %v1709 = vrcp.pop %v1670
  %v1710 = vmul.f32 1.0, %v1709
  %v1711 = vrcp.pop %v1671
  %v1712 = vmul.f32 1.0, %v1711
  %v1713 = vrcp.pop %v1672
  %v1714 = vmul.f32 1.0, %v1713
  %v1715 = vrcp.pop %v1673
  %v1716 = vmul.f32 1.0, %v1715
  %v1717 = vrcp.pop %v1674
  %v1718 = vmul.f32 1.0, %v1717
  %v1719 = vrcp.pop %v1675
  %v1720 = vmul.f32 1.0, %v1719
  %v1721 = vrcp.pop %v1676
  %v1722 = vmul.f32 1.0, %v1721
  %v1723 = vrcp.pop %v1677
  %v1724 = vmul.f32 1.0, %v1723
  %v1725 = vrcp.pop %v1678
  %v1726 = vmul.f32 1.0, %v1725
  %v1727 = vtanh.pop %v1554
  %v1728 = vtanh.pop %v1558
  %v1729 = vtanh.pop %v1562
  %v1730 = vtanh.pop %v1566
  %v1731 = vtanh.pop %v1570
  %v1732 = vtanh.pop %v1574
  %v1733 = vtanh.pop %v1578
  %v1734 = vtanh.pop %v1582
  %v1743 = vrot.slane %v1290, 7
  %v1744 = vrot.slane %v1291, 7
  %v1745 = vrot.slane %v1292, 7
  %v1746 = vrot.slane %v1293, 7
  %v1747 = vrot.slane %v1294, 7
  %v1748 = vrot.slane %v1295, 7
  %v1749 = vrot.slane %v1296, 7
  %v1750 = vrot.slane %v1297, 7
  %v1759 = vmul.f32 %v1680, %v1743
  %v1760 = vmul.f32 %v1686, %v1744
  %v1761 = vmul.f32 %v1692, %v1745
  %v1762 = vmul.f32 %v1698, %v1746
  %v1763 = vmul.f32 %v1704, %v1747
  %v1764 = vmul.f32 %v1710, %v1748
  %v1765 = vmul.f32 %v1716, %v1749
  %v1766 = vmul.f32 %v1722, %v1750
  %v1767 = vmul.f32 %v1682, %v1727
  %v1768 = vmul.f32 %v1688, %v1728
  %v1769 = vmul.f32 %v1694, %v1729
  %v1770 = vmul.f32 %v1700, %v1730
  %v1771 = vmul.f32 %v1706, %v1731
  %v1772 = vmul.f32 %v1712, %v1732
  %v1773 = vmul.f32 %v1718, %v1733
  %v1774 = vmul.f32 %v1724, %v1734
  %v1775 = vadd.f32 %v1759, %v1767
  %v1776 = vadd.f32 %v1760, %v1768
  %v1777 = vadd.f32 %v1761, %v1769
  %v1778 = vadd.f32 %v1762, %v1770
  %v1779 = vadd.f32 %v1763, %v1771
  %v1780 = vadd.f32 %v1764, %v1772
  %v1781 = vadd.f32 %v1765, %v1773
  %v1782 = vadd.f32 %v1766, %v1774
  %v1783 = vtanh.pop %v1775
  %v1784 = vtanh.pop %v1776
  %v1785 = vtanh.pop %v1777
  %v1786 = vtanh.pop %v1778
  %v1787 = vtanh.pop %v1779
  %v1788 = vtanh.pop %v1780
  %v1789 = vtanh.pop %v1781
  %v1790 = vtanh.pop %v1782
  %v1791 = vmul.f32 %v1684, %v1783
  %v1792 = vmul.f32 %v1690, %v1784
  %v1793 = vmul.f32 %v1696, %v1785
  %v1794 = vmul.f32 %v1702, %v1786
  %v1795 = vmul.f32 %v1708, %v1787
  %v1796 = vmul.f32 %v1714, %v1788
  %v1797 = vmul.f32 %v1720, %v1789
  %v1798 = vmul.f32 %v1726, %v1790
  %1799 = vst [vmem:[%s4] sm:$0x4] %v1791
  %1800 = vst [vmem:[%s4 + $0x8] sm:$0x4] %v1792
  %1801 = vst [vmem:[%s4 + $0x10] sm:$0x4] %v1793
  %1802 = vst [vmem:[%s4 + $0x18] sm:$0x4] %v1794
  %1803 = vst [vmem:[%s4 + $0x20] sm:$0x4] %v1795
  %1804 = vst [vmem:[%s4 + $0x28] sm:$0x4] %v1796
  %1805 = vst [vmem:[%s4 + $0x30] sm:$0x4] %v1797
  %1806 = vst [vmem:[%s4 + $0x38] sm:$0x4] %v1798
  %v1815 = vrot.slane %v1791, 2
  %v1816 = vrot.slane %v1792, 1
  %v1817 = vsel %vm839, %v1816, %v1815
  %v1818 = vsel %vm842, %v1793, %v1817
  %v1819 = vrot.slane %v1794, 7
  %v1820 = vsel %vm845, %v1819, %v1818
  %v1821 = vrot.slane %v1795, 6
  %v1822 = vsel %vm848, %v1821, %v1820
  %v1823 = vrot.slane %v1796, 5
  %v1824 = vsel %vm851, %v1823, %v1822
  %v1825 = vrot.slane %v1797, 4
  %v1826 = vsel %vm854, %v1825, %v1824
  %v1827 = vrot.slane %v1798, 3
  %v1828 = vsel %vm857, %v1827, %v1826
  %1830 = vmatprep.subr.mxu0 %v30
  %1831 = vmatpush1.msra.mxu0 %v29
  %1832 = vmatprep.subr.mxu0 %v34
  %1833 = vmatpush1.msra.mxu0 %v33
  %1834 = vmatprep.subr.mxu0 %v38
  %1835 = vmatpush1.msra.mxu0 %v37
  %1836 = vmatprep.subr.mxu0 %v42
  %1837 = vmatpush1.msra.mxu0 %v41
  %1838 = vmatprep.subr.mxu0 %v46
  %1839 = vmatpush1.msra.mxu0 %v45
  %1840 = vmatprep.subr.mxu0 %v50
  %1841 = vmatpush1.msra.mxu0 %v49
  %1842 = vmatprep.subr.mxu0 %v54
  %1843 = vmatpush1.msra.mxu0 %v53
  %1844 = vmatprep.subr.mxu0 %v58
  %1845 = vmatpush1.msra.mxu0 %v57
  %1846 = vmatprep.subr.mxu0 %v62
  %1847 = vmatpush1.msra.mxu0 %v61
  %1848 = vmatprep.subr.mxu0 %v66
  %1849 = vmatpush1.msra.mxu0 %v65
  %1850 = vmatprep.subr.mxu0 %v70
  %1851 = vmatpush1.msra.mxu0 %v69
  %1852 = vmatprep.subr.mxu0 %v74
  %1853 = vmatpush1.msra.mxu0 %v73
  %1854 = vmatprep.subr.mxu0 %v78
  %1855 = vmatpush1.msra.mxu0 %v77
  %1856 = vmatprep.subr.mxu0 %v82
  %1857 = vmatpush1.msra.mxu0 %v81
  %1858 = vmatprep.subr.mxu0 %v86
  %1859 = vmatpush1.msra.mxu0 %v85
  %1860 = vmatprep.subr.mxu0 %v90
  %1861 = vmatpush1.msra.mxu0 %v89
  %1862 = vmatprep.subr.mxu0 0.0
  %1863 = vmatpush1.msra.mxu0 0.0
  %1864 = vmatprep.subr.mxu0 0.0
  %1865 = vmatpush1.msra.mxu0 0.0
  %1866 = vmatprep.subr.mxu0 0.0
  %1867 = vmatpush1.msra.mxu0 0.0
  %1868 = vmatprep.subr.mxu0 0.0
  %1869 = vmatpush1.msra.mxu0 0.0
  %1870 = vmatprep.subr.mxu0 0.0
  %1871 = vmatpush1.msra.mxu0 0.0
  %1872 = vmatprep.subr.mxu0 0.0
  %1873 = vmatpush1.msra.mxu0 0.0
  %1874 = vmatprep.subr.mxu0 0.0
  %1875 = vmatpush1.msra.mxu0 0.0
  %1876 = vmatprep.subr.mxu0 0.0
  %1877 = vmatpush1.msra.mxu0 0.0
  %1878 = vmatprep.subr.mxu0 0.0
  %1879 = vmatpush1.msra.mxu0 0.0
  %1880 = vmatprep.subr.mxu0 0.0
  %1881 = vmatpush1.msra.mxu0 0.0
  %1882 = vmatprep.subr.mxu0 0.0
  %1883 = vmatpush1.msra.mxu0 0.0
  %1884 = vmatprep.subr.mxu0 0.0
  %1885 = vmatpush1.msra.mxu0 0.0
  %1886 = vmatprep.subr.mxu0 0.0
  %1887 = vmatpush1.msra.mxu0 0.0
  %1888 = vmatprep.subr.mxu0 0.0
  %1889 = vmatpush1.msra.mxu0 0.0
  %1890 = vmatprep.subr.mxu0 0.0
  %1891 = vmatpush1.msra.mxu0 0.0
  %1892 = vmatprep.subr.mxu0 0.0
  %1893 = vmatpush1.msra.mxu0 0.0
  %1894 = vmatprep.mubr.f32.mxu0 0.0
  %1895 = vmatmul.mubr.f32.gmra.mrb[0].mxu0 %v1828
  %v1896 = vpop.f32.mrb[0].mxu0
  %v1897 = vadd.f32 0.0, %v1896
  %v1898 = vpop.f32.mrb[0].mxu0
  %v1899 = vadd.f32 0.0, %v1898
  %1900 = vdwg.mxu0
  %1901 = vmatprep.subr.mxu0 %v32
  %1902 = vmatpush1.msra.mxu0 %v31
  %1903 = vmatprep.subr.mxu0 %v36
  %1904 = vmatpush1.msra.mxu0 %v35
  %1905 = vmatprep.subr.mxu0 %v40
  %1906 = vmatpush1.msra.mxu0 %v39
  %1907 = vmatprep.subr.mxu0 %v44
  %1908 = vmatpush1.msra.mxu0 %v43
  %1909 = vmatprep.subr.mxu0 %v48
  %1910 = vmatpush1.msra.mxu0 %v47
  %1911 = vmatprep.subr.mxu0 %v52
  %1912 = vmatpush1.msra.mxu0 %v51
  %1913 = vmatprep.subr.mxu0 %v56
  %1914 = vmatpush1.msra.mxu0 %v55
  %1915 = vmatprep.subr.mxu0 %v60
  %1916 = vmatpush1.msra.mxu0 %v59
  %1917 = vmatprep.subr.mxu0 %v64
  %1918 = vmatpush1.msra.mxu0 %v63
  %1919 = vmatprep.subr.mxu0 %v68
  %1920 = vmatpush1.msra.mxu0 %v67
  %1921 = vmatprep.subr.mxu0 %v72
  %1922 = vmatpush1.msra.mxu0 %v71
  %1923 = vmatprep.subr.mxu0 %v76
  %1924 = vmatpush1.msra.mxu0 %v75
  %1925 = vmatprep.subr.mxu0 %v80
  %1926 = vmatpush1.msra.mxu0 %v79
  %1927 = vmatprep.subr.mxu0 %v84
  %1928 = vmatpush1.msra.mxu0 %v83
  %1929 = vmatprep.subr.mxu0 %v88
  %1930 = vmatpush1.msra.mxu0 %v87
  %1931 = vmatprep.subr.mxu0 %v92
  %1932 = vmatpush1.msra.mxu0 %v91
  %1933 = vmatprep.subr.mxu0 0.0
  %1934 = vmatpush1.msra.mxu0 0.0
  %1935 = vmatprep.subr.mxu0 0.0
  %1936 = vmatpush1.msra.mxu0 0.0
  %1937 = vmatprep.subr.mxu0 0.0
  %1938 = vmatpush1.msra.mxu0 0.0
  %1939 = vmatprep.subr.mxu0 0.0
  %1940 = vmatpush1.msra.mxu0 0.0
  %1941 = vmatprep.subr.mxu0 0.0
  %1942 = vmatpush1.msra.mxu0 0.0
  %1943 = vmatprep.subr.mxu0 0.0
  %1944 = vmatpush1.msra.mxu0 0.0
  %1945 = vmatprep.subr.mxu0 0.0
  %1946 = vmatpush1.msra.mxu0 0.0
  %1947 = vmatprep.subr.mxu0 0.0
  %1948 = vmatpush1.msra.mxu0 0.0
  %1949 = vmatprep.subr.mxu0 0.0
  %1950 = vmatpush1.msra.mxu0 0.0
  %1951 = vmatprep.subr.mxu0 0.0
  %1952 = vmatpush1.msra.mxu0 0.0
  %1953 = vmatprep.subr.mxu0 0.0
  %1954 = vmatpush1.msra.mxu0 0.0
  %1955 = vmatprep.subr.mxu0 0.0
  %1956 = vmatpush1.msra.mxu0 0.0
  %1957 = vmatprep.subr.mxu0 0.0
  %1958 = vmatpush1.msra.mxu0 0.0
  %1959 = vmatprep.subr.mxu0 0.0
  %1960 = vmatpush1.msra.mxu0 0.0
  %1961 = vmatprep.subr.mxu0 0.0
  %1962 = vmatpush1.msra.mxu0 0.0
  %1963 = vmatprep.subr.mxu0 0.0
  %1964 = vmatpush1.msra.mxu0 0.0
  %1965 = vmatprep.mubr.f32.mxu0 0.0
  %1966 = vmatmul.mubr.f32.gmra.mrb[0].mxu0 %v1828
  %v1967 = vpop.f32.mrb[0].mxu0
  %v1968 = vadd.f32 0.0, %v1967
  %v1969 = vpop.f32.mrb[0].mxu0
  %v1970 = vadd.f32 0.0, %v1969
  %1971 = vdwg.mxu0
  %v1976 = vrot.slane %v1897, 5
  %v1977 = vrot.slane %v1899, 5
  %v1978 = vrot.slane %v1968, 5
  %v1979 = vrot.slane %v1970, 5
  %v1980 = vrot.slane %v1897, 6
  %v1981 = vrot.slane %v1899, 6
  %v1982 = vrot.slane %v1968, 6
  %v1983 = vrot.slane %v1970, 6
  %v1984 = vrot.slane %v1897, 7
  %v1985 = vrot.slane %v1899, 7
  %v1986 = vrot.slane %v1968, 7
  %v1987 = vrot.slane %v1970, 7
  %v1988 = vrot.slane %v1897, 1
  %v1989 = vrot.slane %v1899, 1
  %v1990 = vrot.slane %v1968, 1
  %v1991 = vrot.slane %v1970, 1
  %v1992 = vrot.slane %v1897, 2
  %v1993 = vrot.slane %v1899, 2
  %v1994 = vrot.slane %v1968, 2
  %v1995 = vrot.slane %v1970, 2
  %v1996 = vrot.slane %v1897, 3
  %v1997 = vrot.slane %v1899, 3
  %v1998 = vrot.slane %v1968, 3
  %v1999 = vrot.slane %v1970, 3
  %v2000 = vrot.slane %v1897, 4
  %v2001 = vrot.slane %v1899, 4
  %v2002 = vrot.slane %v1968, 4
  %v2003 = vrot.slane %v1970, 4
  %v2036 = vadd.f32 %v215, %v1976
  %v2037 = vadd.f32 %v217, %v1977
  %v2038 = vadd.f32 %v328, %v1978
  %v2039 = vadd.f32 %v330, %v1979
  %v2040 = vadd.f32 %v221, %v1980
  %v2041 = vadd.f32 %v223, %v1981
  %v2042 = vadd.f32 %v334, %v1982
  %v2043 = vadd.f32 %v336, %v1983
  %v2044 = vadd.f32 %v227, %v1984
  %v2045 = vadd.f32 %v229, %v1985
  %v2046 = vadd.f32 %v340, %v1986
  %v2047 = vadd.f32 %v342, %v1987
  %v2048 = vadd.f32 %v233, %v1897
  %v2049 = vadd.f32 %v235, %v1899
  %v2050 = vadd.f32 %v346, %v1968
  %v2051 = vadd.f32 %v348, %v1970
  %v2052 = vadd.f32 %v239, %v1988
  %v2053 = vadd.f32 %v241, %v1989
  %v2054 = vadd.f32 %v352, %v1990
  %v2055 = vadd.f32 %v354, %v1991
  %v2056 = vadd.f32 %v245, %v1992
  %v2057 = vadd.f32 %v247, %v1993
  %v2058 = vadd.f32 %v358, %v1994
  %v2059 = vadd.f32 %v360, %v1995
  %v2060 = vadd.f32 %v251, %v1996
  %v2061 = vadd.f32 %v253, %v1997
  %v2062 = vadd.f32 %v364, %v1998
  %v2063 = vadd.f32 %v366, %v1999
  %v2064 = vadd.f32 %v257, %v2000
  %v2065 = vadd.f32 %v259, %v2001
  %v2066 = vadd.f32 %v370, %v2002
  %v2067 = vadd.f32 %v372, %v2003
  %v2068 = vxor.u32 %v2036, 2147483648
  %v2069 = vxor.u32 %v2037, 2147483648
  %v2070 = vxor.u32 %v2038, 2147483648
  %v2071 = vxor.u32 %v2040, 2147483648
  %v2072 = vxor.u32 %v2041, 2147483648
  %v2073 = vxor.u32 %v2042, 2147483648
  %v2074 = vxor.u32 %v2044, 2147483648
  %v2075 = vxor.u32 %v2045, 2147483648
  %v2076 = vxor.u32 %v2046, 2147483648
  %v2077 = vxor.u32 %v2048, 2147483648
  %v2078 = vxor.u32 %v2049, 2147483648
  %v2079 = vxor.u32 %v2050, 2147483648
  %v2080 = vxor.u32 %v2052, 2147483648
  %v2081 = vxor.u32 %v2053, 2147483648
  %v2082 = vxor.u32 %v2054, 2147483648
  %v2083 = vxor.u32 %v2056, 2147483648
  %v2084 = vxor.u32 %v2057, 2147483648
  %v2085 = vxor.u32 %v2058, 2147483648
  %v2086 = vxor.u32 %v2060, 2147483648
  %v2087 = vxor.u32 %v2061, 2147483648
  %v2088 = vxor.u32 %v2062, 2147483648
  %v2089 = vxor.u32 %v2064, 2147483648
  %v2090 = vxor.u32 %v2065, 2147483648
  %v2091 = vxor.u32 %v2066, 2147483648
  %v2092 = vmul.f32 %v2068, 1.442695
  %v2093 = vpow.pop %v2092
  %v2094 = vmul.f32 %v2069, 1.442695
  %v2095 = vpow.pop %v2094
  %v2096 = vmul.f32 %v2070, 1.442695
  %v2097 = vpow.pop %v2096
  %v2098 = vmul.f32 %v2071, 1.442695
  %v2099 = vpow.pop %v2098
  %v2100 = vmul.f32 %v2072, 1.442695
  %v2101 = vpow.pop %v2100
  %v2102 = vmul.f32 %v2073, 1.442695
  %v2103 = vpow.pop %v2102
  %v2104 = vmul.f32 %v2074, 1.442695
  %v2105 = vpow.pop %v2104
  %v2106 = vmul.f32 %v2075, 1.442695
  %v2107 = vpow.pop %v2106
  %v2108 = vmul.f32 %v2076, 1.442695
  %v2109 = vpow.pop %v2108
  %v2110 = vmul.f32 %v2077, 1.442695
  %v2111 = vpow.pop %v2110
  %v2112 = vmul.f32 %v2078, 1.442695
  %v2113 = vpow.pop %v2112
  %v2114 = vmul.f32 %v2079, 1.442695
  %v2115 = vpow.pop %v2114
  %v2116 = vmul.f32 %v2080, 1.442695
  %v2117 = vpow.pop %v2116
  %v2118 = vmul.f32 %v2081, 1.442695
  %v2119 = vpow.pop %v2118
  %v2120 = vmul.f32 %v2082, 1.442695
  %v2121 = vpow.pop %v2120
  %v2122 = vmul.f32 %v2083, 1.442695
  %v2123 = vpow.pop %v2122
  %v2124 = vmul.f32 %v2084, 1.442695
  %v2125 = vpow.pop %v2124
  %v2126 = vmul.f32 %v2085, 1.442695
  %v2127 = vpow.pop %v2126
  %v2128 = vmul.f32 %v2086, 1.442695
  %v2129 = vpow.pop %v2128
  %v2130 = vmul.f32 %v2087, 1.442695
  %v2131 = vpow.pop %v2130
  %v2132 = vmul.f32 %v2088, 1.442695
  %v2133 = vpow.pop %v2132
  %v2134 = vmul.f32 %v2089, 1.442695
  %v2135 = vpow.pop %v2134
  %v2136 = vmul.f32 %v2090, 1.442695
  %v2137 = vpow.pop %v2136
  %v2138 = vmul.f32 %v2091, 1.442695
  %v2139 = vpow.pop %v2138
  %v2140 = vadd.f32 %v2093, 1.0
  %v2141 = vadd.f32 %v2095, 1.0
  %v2142 = vadd.f32 %v2097, 1.0
  %v2143 = vadd.f32 %v2099, 1.0
  %v2144 = vadd.f32 %v2101, 1.0
  %v2145 = vadd.f32 %v2103, 1.0
  %v2146 = vadd.f32 %v2105, 1.0
  %v2147 = vadd.f32 %v2107, 1.0
  %v2148 = vadd.f32 %v2109, 1.0
  %v2149 = vadd.f32 %v2111, 1.0
  %v2150 = vadd.f32 %v2113, 1.0
  %v2151 = vadd.f32 %v2115, 1.0
  %v2152 = vadd.f32 %v2117, 1.0
  %v2153 = vadd.f32 %v2119, 1.0
  %v2154 = vadd.f32 %v2121, 1.0
  %v2155 = vadd.f32 %v2123, 1.0
  %v2156 = vadd.f32 %v2125, 1.0
  %v2157 = vadd.f32 %v2127, 1.0
  %v2158 = vadd.f32 %v2129, 1.0
  %v2159 = vadd.f32 %v2131, 1.0
  %v2160 = vadd.f32 %v2133, 1.0
  %v2161 = vadd.f32 %v2135, 1.0
  %v2162 = vadd.f32 %v2137, 1.0
  %v2163 = vadd.f32 %v2139, 1.0
  %v2164 = vrcp.pop %v2140
  %v2165 = vmul.f32 1.0, %v2164
  %v2166 = vrcp.pop %v2141
  %v2167 = vmul.f32 1.0, %v2166
  %v2168 = vrcp.pop %v2142
  %v2169 = vmul.f32 1.0, %v2168
  %v2170 = vrcp.pop %v2143
  %v2171 = vmul.f32 1.0, %v2170
  %v2172 = vrcp.pop %v2144
  %v2173 = vmul.f32 1.0, %v2172
  %v2174 = vrcp.pop %v2145
  %v2175 = vmul.f32 1.0, %v2174
  %v2176 = vrcp.pop %v2146
  %v2177 = vmul.f32 1.0, %v2176
  %v2178 = vrcp.pop %v2147
  %v2179 = vmul.f32 1.0, %v2178
  %v2180 = vrcp.pop %v2148
  %v2181 = vmul.f32 1.0, %v2180
  %v2182 = vrcp.pop %v2149
  %v2183 = vmul.f32 1.0, %v2182
  %v2184 = vrcp.pop %v2150
  %v2185 = vmul.f32 1.0, %v2184
  %v2186 = vrcp.pop %v2151
  %v2187 = vmul.f32 1.0, %v2186
  %v2188 = vrcp.pop %v2152
  %v2189 = vmul.f32 1.0, %v2188
  %v2190 = vrcp.pop %v2153
  %v2191 = vmul.f32 1.0, %v2190
  %v2192 = vrcp.pop %v2154
  %v2193 = vmul.f32 1.0, %v2192
  %v2194 = vrcp.pop %v2155
  %v2195 = vmul.f32 1.0, %v2194
  %v2196 = vrcp.pop %v2156
  %v2197 = vmul.f32 1.0, %v2196
  %v2198 = vrcp.pop %v2157
  %v2199 = vmul.f32 1.0, %v2198
  %v2200 = vrcp.pop %v2158
  %v2201 = vmul.f32 1.0, %v2200
  %v2202 = vrcp.pop %v2159
  %v2203 = vmul.f32 1.0, %v2202
  %v2204 = vrcp.pop %v2160
  %v2205 = vmul.f32 1.0, %v2204
  %v2206 = vrcp.pop %v2161
  %v2207 = vmul.f32 1.0, %v2206
  %v2208 = vrcp.pop %v2162
  %v2209 = vmul.f32 1.0, %v2208
  %v2210 = vrcp.pop %v2163
  %v2211 = vmul.f32 1.0, %v2210
  %v2212 = vtanh.pop %v2039
  %v2213 = vtanh.pop %v2043
  %v2214 = vtanh.pop %v2047
  %v2215 = vtanh.pop %v2051
  %v2216 = vtanh.pop %v2055
  %v2217 = vtanh.pop %v2059
  %v2218 = vtanh.pop %v2063
  %v2219 = vtanh.pop %v2067
  %v2228 = vrot.slane %v1775, 7
  %v2229 = vrot.slane %v1776, 7
  %v2230 = vrot.slane %v1777, 7
  %v2231 = vrot.slane %v1778, 7
  %v2232 = vrot.slane %v1779, 7
  %v2233 = vrot.slane %v1780, 7
  %v2234 = vrot.slane %v1781, 7
  %v2235 = vrot.slane %v1782, 7
  %v2244 = vmul.f32 %v2165, %v2228
  %v2245 = vmul.f32 %v2171, %v2229
  %v2246 = vmul.f32 %v2177, %v2230
  %v2247 = vmul.f32 %v2183, %v2231
  %v2248 = vmul.f32 %v2189, %v2232
  %v2249 = vmul.f32 %v2195, %v2233
  %v2250 = vmul.f32 %v2201, %v2234
  %v2251 = vmul.f32 %v2207, %v2235
  %v2252 = vmul.f32 %v2167, %v2212
  %v2253 = vmul.f32 %v2173, %v2213
  %v2254 = vmul.f32 %v2179, %v2214
  %v2255 = vmul.f32 %v2185, %v2215
  %v2256 = vmul.f32 %v2191, %v2216
  %v2257 = vmul.f32 %v2197, %v2217
  %v2258 = vmul.f32 %v2203, %v2218
  %v2259 = vmul.f32 %v2209, %v2219
  %v2260 = vadd.f32 %v2244, %v2252
  %v2261 = vadd.f32 %v2245, %v2253
  %v2262 = vadd.f32 %v2246, %v2254
  %v2263 = vadd.f32 %v2247, %v2255
  %v2264 = vadd.f32 %v2248, %v2256
  %v2265 = vadd.f32 %v2249, %v2257
  %v2266 = vadd.f32 %v2250, %v2258
  %v2267 = vadd.f32 %v2251, %v2259
  %v2268 = vtanh.pop %v2260
  %v2269 = vtanh.pop %v2261
  %v2270 = vtanh.pop %v2262
  %v2271 = vtanh.pop %v2263
  %v2272 = vtanh.pop %v2264
  %v2273 = vtanh.pop %v2265
  %v2274 = vtanh.pop %v2266
  %v2275 = vtanh.pop %v2267
  %v2276 = vmul.f32 %v2169, %v2268
  %v2277 = vmul.f32 %v2175, %v2269
  %v2278 = vmul.f32 %v2181, %v2270
  %v2279 = vmul.f32 %v2187, %v2271
  %v2280 = vmul.f32 %v2193, %v2272
  %v2281 = vmul.f32 %v2199, %v2273
  %v2282 = vmul.f32 %v2205, %v2274
  %v2283 = vmul.f32 %v2211, %v2275
  %2284 = vst [vmem:[%s4] sm:$0x8] %v2276
  %2285 = vst [vmem:[%s4 + $0x8] sm:$0x8] %v2277
  %2286 = vst [vmem:[%s4 + $0x10] sm:$0x8] %v2278
  %2287 = vst [vmem:[%s4 + $0x18] sm:$0x8] %v2279
  %2288 = vst [vmem:[%s4 + $0x20] sm:$0x8] %v2280
  %2289 = vst [vmem:[%s4 + $0x28] sm:$0x8] %v2281
  %2290 = vst [vmem:[%s4 + $0x30] sm:$0x8] %v2282
  %2291 = vst [vmem:[%s4 + $0x38] sm:$0x8] %v2283
  %v2300 = vrot.slane %v2276, 3
  %v2301 = vrot.slane %v2277, 2
  %v2302 = vsel %vm839, %v2301, %v2300
  %v2303 = vrot.slane %v2278, 1
  %v2304 = vsel %vm842, %v2303, %v2302
  %v2305 = vsel %vm845, %v2279, %v2304
  %v2306 = vrot.slane %v2280, 7
  %v2307 = vsel %vm848, %v2306, %v2305
  %v2308 = vrot.slane %v2281, 6
  %v2309 = vsel %vm851, %v2308, %v2307
  %v2310 = vrot.slane %v2282, 5
  %v2311 = vsel %vm854, %v2310, %v2309
  %v2312 = vrot.slane %v2283, 4
  %v2313 = vsel %vm857, %v2312, %v2311
  %2315 = vmatprep.subr.mxu0 %v30
  %2316 = vmatpush1.msra.mxu0 %v29
  %2317 = vmatprep.subr.mxu0 %v34
  %2318 = vmatpush1.msra.mxu0 %v33
  %2319 = vmatprep.subr.mxu0 %v38
  %2320 = vmatpush1.msra.mxu0 %v37
  %2321 = vmatprep.subr.mxu0 %v42
  %2322 = vmatpush1.msra.mxu0 %v41
  %2323 = vmatprep.subr.mxu0 %v46
  %2324 = vmatpush1.msra.mxu0 %v45
  %2325 = vmatprep.subr.mxu0 %v50
  %2326 = vmatpush1.msra.mxu0 %v49
  %2327 = vmatprep.subr.mxu0 %v54
  %2328 = vmatpush1.msra.mxu0 %v53
  %2329 = vmatprep.subr.mxu0 %v58
  %2330 = vmatpush1.msra.mxu0 %v57
  %2331 = vmatprep.subr.mxu0 %v62
  %2332 = vmatpush1.msra.mxu0 %v61
  %2333 = vmatprep.subr.mxu0 %v66
  %2334 = vmatpush1.msra.mxu0 %v65
  %2335 = vmatprep.subr.mxu0 %v70
  %2336 = vmatpush1.msra.mxu0 %v69
  %2337 = vmatprep.subr.mxu0 %v74
  %2338 = vmatpush1.msra.mxu0 %v73
  %2339 = vmatprep.subr.mxu0 %v78
  %2340 = vmatpush1.msra.mxu0 %v77
  %2341 = vmatprep.subr.mxu0 %v82
  %2342 = vmatpush1.msra.mxu0 %v81
  %2343 = vmatprep.subr.mxu0 %v86
  %2344 = vmatpush1.msra.mxu0 %v85
  %2345 = vmatprep.subr.mxu0 %v90
  %2346 = vmatpush1.msra.mxu0 %v89
  %2347 = vmatprep.subr.mxu0 0.0
  %2348 = vmatpush1.msra.mxu0 0.0
  %2349 = vmatprep.subr.mxu0 0.0
  %2350 = vmatpush1.msra.mxu0 0.0
  %2351 = vmatprep.subr.mxu0 0.0
  %2352 = vmatpush1.msra.mxu0 0.0
  %2353 = vmatprep.subr.mxu0 0.0
  %2354 = vmatpush1.msra.mxu0 0.0
  %2355 = vmatprep.subr.mxu0 0.0
  %2356 = vmatpush1.msra.mxu0 0.0
  %2357 = vmatprep.subr.mxu0 0.0
  %2358 = vmatpush1.msra.mxu0 0.0
  %2359 = vmatprep.subr.mxu0 0.0
  %2360 = vmatpush1.msra.mxu0 0.0
  %2361 = vmatprep.subr.mxu0 0.0
  %2362 = vmatpush1.msra.mxu0 0.0
  %2363 = vmatprep.subr.mxu0 0.0
  %2364 = vmatpush1.msra.mxu0 0.0
  %2365 = vmatprep.subr.mxu0 0.0
  %2366 = vmatpush1.msra.mxu0 0.0
  %2367 = vmatprep.subr.mxu0 0.0
  %2368 = vmatpush1.msra.mxu0 0.0
  %2369 = vmatprep.subr.mxu0 0.0
  %2370 = vmatpush1.msra.mxu0 0.0
  %2371 = vmatprep.subr.mxu0 0.0
  %2372 = vmatpush1.msra.mxu0 0.0
  %2373 = vmatprep.subr.mxu0 0.0
  %2374 = vmatpush1.msra.mxu0 0.0
  %2375 = vmatprep.subr.mxu0 0.0
  %2376 = vmatpush1.msra.mxu0 0.0
  %2377 = vmatprep.subr.mxu0 0.0
  %2378 = vmatpush1.msra.mxu0 0.0
  %2379 = vmatprep.mubr.f32.mxu0 0.0
  %2380 = vmatmul.mubr.f32.gmra.mrb[0].mxu0 %v2313
  %v2381 = vpop.f32.mrb[0].mxu0
  %v2382 = vadd.f32 0.0, %v2381
  %v2383 = vpop.f32.mrb[0].mxu0
  %v2384 = vadd.f32 0.0, %v2383
  %2385 = vdwg.mxu0
  %2386 = vmatprep.subr.mxu0 %v32
  %2387 = vmatpush1.msra.mxu0 %v31
  %2388 = vmatprep.subr.mxu0 %v36
  %2389 = vmatpush1.msra.mxu0 %v35
  %2390 = vmatprep.subr.mxu0 %v40
  %2391 = vmatpush1.msra.mxu0 %v39
  %2392 = vmatprep.subr.mxu0 %v44
  %2393 = vmatpush1.msra.mxu0 %v43
  %2394 = vmatprep.subr.mxu0 %v48
  %2395 = vmatpush1.msra.mxu0 %v47
  %2396 = vmatprep.subr.mxu0 %v52
  %2397 = vmatpush1.msra.mxu0 %v51
  %2398 = vmatprep.subr.mxu0 %v56
  %2399 = vmatpush1.msra.mxu0 %v55
  %2400 = vmatprep.subr.mxu0 %v60
  %2401 = vmatpush1.msra.mxu0 %v59
  %2402 = vmatprep.subr.mxu0 %v64
  %2403 = vmatpush1.msra.mxu0 %v63
  %2404 = vmatprep.subr.mxu0 %v68
  %2405 = vmatpush1.msra.mxu0 %v67
  %2406 = vmatprep.subr.mxu0 %v72
  %2407 = vmatpush1.msra.mxu0 %v71
  %2408 = vmatprep.subr.mxu0 %v76
  %2409 = vmatpush1.msra.mxu0 %v75
  %2410 = vmatprep.subr.mxu0 %v80
  %2411 = vmatpush1.msra.mxu0 %v79
  %2412 = vmatprep.subr.mxu0 %v84
  %2413 = vmatpush1.msra.mxu0 %v83
  %2414 = vmatprep.subr.mxu0 %v88
  %2415 = vmatpush1.msra.mxu0 %v87
  %2416 = vmatprep.subr.mxu0 %v92
  %2417 = vmatpush1.msra.mxu0 %v91
  %2418 = vmatprep.subr.mxu0 0.0
  %2419 = vmatpush1.msra.mxu0 0.0
  %2420 = vmatprep.subr.mxu0 0.0
  %2421 = vmatpush1.msra.mxu0 0.0
  %2422 = vmatprep.subr.mxu0 0.0
  %2423 = vmatpush1.msra.mxu0 0.0
  %2424 = vmatprep.subr.mxu0 0.0
  %2425 = vmatpush1.msra.mxu0 0.0
  %2426 = vmatprep.subr.mxu0 0.0
  %2427 = vmatpush1.msra.mxu0 0.0
  %2428 = vmatprep.subr.mxu0 0.0
  %2429 = vmatpush1.msra.mxu0 0.0
  %2430 = vmatprep.subr.mxu0 0.0
  %2431 = vmatpush1.msra.mxu0 0.0
  %2432 = vmatprep.subr.mxu0 0.0
  %2433 = vmatpush1.msra.mxu0 0.0
  %2434 = vmatprep.subr.mxu0 0.0
  %2435 = vmatpush1.msra.mxu0 0.0
  %2436 = vmatprep.subr.mxu0 0.0
  %2437 = vmatpush1.msra.mxu0 0.0
  %2438 = vmatprep.subr.mxu0 0.0
  %2439 = vmatpush1.msra.mxu0 0.0
  %2440 = vmatprep.subr.mxu0 0.0
  %2441 = vmatpush1.msra.mxu0 0.0
  %2442 = vmatprep.subr.mxu0 0.0
  %2443 = vmatpush1.msra.mxu0 0.0
  %2444 = vmatprep.subr.mxu0 0.0
  %2445 = vmatpush1.msra.mxu0 0.0
  %2446 = vmatprep.subr.mxu0 0.0
  %2447 = vmatpush1.msra.mxu0 0.0
  %2448 = vmatprep.subr.mxu0 0.0
  %2449 = vmatpush1.msra.mxu0 0.0
  %2450 = vmatprep.mubr.f32.mxu0 0.0
  %2451 = vmatmul.mubr.f32.gmra.mrb[0].mxu0 %v2313
  %v2452 = vpop.f32.mrb[0].mxu0
  %v2453 = vadd.f32 0.0, %v2452
  %v2454 = vpop.f32.mrb[0].mxu0
  %v2455 = vadd.f32 0.0, %v2454
  %2456 = vdwg.mxu0
  %v2461 = vrot.slane %v2382, 4
  %v2462 = vrot.slane %v2384, 4
  %v2463 = vrot.slane %v2453, 4
  %v2464 = vrot.slane %v2455, 4
  %v2465 = vrot.slane %v2382, 5
  %v2466 = vrot.slane %v2384, 5
  %v2467 = vrot.slane %v2453, 5
  %v2468 = vrot.slane %v2455, 5
  %v2469 = vrot.slane %v2382, 6
  %v2470 = vrot.slane %v2384, 6
  %v2471 = vrot.slane %v2453, 6
  %v2472 = vrot.slane %v2455, 6
  %v2473 = vrot.slane %v2382, 7
  %v2474 = vrot.slane %v2384, 7
  %v2475 = vrot.slane %v2453, 7
  %v2476 = vrot.slane %v2455, 7
  %v2477 = vrot.slane %v2382, 1
  %v2478 = vrot.slane %v2384, 1
  %v2479 = vrot.slane %v2453, 1
  %v2480 = vrot.slane %v2455, 1
  %v2481 = vrot.slane %v2382, 2
  %v2482 = vrot.slane %v2384, 2
  %v2483 = vrot.slane %v2453, 2
  %v2484 = vrot.slane %v2455, 2
  %v2485 = vrot.slane %v2382, 3
  %v2486 = vrot.slane %v2384, 3
  %v2487 = vrot.slane %v2453, 3
  %v2488 = vrot.slane %v2455, 3
  %v2521 = vadd.f32 %v215, %v2461
  %v2522 = vadd.f32 %v217, %v2462
  %v2523 = vadd.f32 %v328, %v2463
  %v2524 = vadd.f32 %v330, %v2464
  %v2525 = vadd.f32 %v221, %v2465
  %v2526 = vadd.f32 %v223, %v2466
  %v2527 = vadd.f32 %v334, %v2467
  %v2528 = vadd.f32 %v336, %v2468
  %v2529 = vadd.f32 %v227, %v2469
  %v2530 = vadd.f32 %v229, %v2470
  %v2531 = vadd.f32 %v340, %v2471
  %v2532 = vadd.f32 %v342, %v2472
  %v2533 = vadd.f32 %v233, %v2473
  %v2534 = vadd.f32 %v235, %v2474
  %v2535 = vadd.f32 %v346, %v2475
  %v2536 = vadd.f32 %v348, %v2476
  %v2537 = vadd.f32 %v239, %v2382
  %v2538 = vadd.f32 %v241, %v2384
  %v2539 = vadd.f32 %v352, %v2453
  %v2540 = vadd.f32 %v354, %v2455
  %v2541 = vadd.f32 %v245, %v2477
  %v2542 = vadd.f32 %v247, %v2478
  %v2543 = vadd.f32 %v358, %v2479
  %v2544 = vadd.f32 %v360, %v2480
  %v2545 = vadd.f32 %v251, %v2481
  %v2546 = vadd.f32 %v253, %v2482
  %v2547 = vadd.f32 %v364, %v2483
  %v2548 = vadd.f32 %v366, %v2484
  %v2549 = vadd.f32 %v257, %v2485
  %v2550 = vadd.f32 %v259, %v2486
  %v2551 = vadd.f32 %v370, %v2487
  %v2552 = vadd.f32 %v372, %v2488
  %v2553 = vxor.u32 %v2521, 2147483648
  %v2554 = vxor.u32 %v2522, 2147483648
  %v2555 = vxor.u32 %v2523, 2147483648
  %v2556 = vxor.u32 %v2525, 2147483648
  %v2557 = vxor.u32 %v2526, 2147483648
  %v2558 = vxor.u32 %v2527, 2147483648
  %v2559 = vxor.u32 %v2529, 2147483648
  %v2560 = vxor.u32 %v2530, 2147483648
  %v2561 = vxor.u32 %v2531, 2147483648
  %v2562 = vxor.u32 %v2533, 2147483648
  %v2563 = vxor.u32 %v2534, 2147483648
  %v2564 = vxor.u32 %v2535, 2147483648
  %v2565 = vxor.u32 %v2537, 2147483648
  %v2566 = vxor.u32 %v2538, 2147483648
  %v2567 = vxor.u32 %v2539, 2147483648
  %v2568 = vxor.u32 %v2541, 2147483648
  %v2569 = vxor.u32 %v2542, 2147483648
  %v2570 = vxor.u32 %v2543, 2147483648
  %v2571 = vxor.u32 %v2545, 2147483648
  %v2572 = vxor.u32 %v2546, 2147483648
  %v2573 = vxor.u32 %v2547, 2147483648
  %v2574 = vxor.u32 %v2549, 2147483648
  %v2575 = vxor.u32 %v2550, 2147483648
  %v2576 = vxor.u32 %v2551, 2147483648
  %v2577 = vmul.f32 %v2553, 1.442695
  %v2578 = vpow.pop %v2577
  %v2579 = vmul.f32 %v2554, 1.442695
  %v2580 = vpow.pop %v2579
  %v2581 = vmul.f32 %v2555, 1.442695
  %v2582 = vpow.pop %v2581
  %v2583 = vmul.f32 %v2556, 1.442695
  %v2584 = vpow.pop %v2583
  %v2585 = vmul.f32 %v2557, 1.442695
  %v2586 = vpow.pop %v2585
  %v2587 = vmul.f32 %v2558, 1.442695
  %v2588 = vpow.pop %v2587
  %v2589 = vmul.f32 %v2559, 1.442695
  %v2590 = vpow.pop %v2589
  %v2591 = vmul.f32 %v2560, 1.442695
  %v2592 = vpow.pop %v2591
  %v2593 = vmul.f32 %v2561, 1.442695
  %v2594 = vpow.pop %v2593
  %v2595 = vmul.f32 %v2562, 1.442695
  %v2596 = vpow.pop %v2595
  %v2597 = vmul.f32 %v2563, 1.442695
  %v2598 = vpow.pop %v2597
  %v2599 = vmul.f32 %v2564, 1.442695
  %v2600 = vpow.pop %v2599
  %v2601 = vmul.f32 %v2565, 1.442695
  %v2602 = vpow.pop %v2601
  %v2603 = vmul.f32 %v2566, 1.442695
  %v2604 = vpow.pop %v2603
  %v2605 = vmul.f32 %v2567, 1.442695
  %v2606 = vpow.pop %v2605
  %v2607 = vmul.f32 %v2568, 1.442695
  %v2608 = vpow.pop %v2607
  %v2609 = vmul.f32 %v2569, 1.442695
  %v2610 = vpow.pop %v2609
  %v2611 = vmul.f32 %v2570, 1.442695
  %v2612 = vpow.pop %v2611
  %v2613 = vmul.f32 %v2571, 1.442695
  %v2614 = vpow.pop %v2613
  %v2615 = vmul.f32 %v2572, 1.442695
  %v2616 = vpow.pop %v2615
  %v2617 = vmul.f32 %v2573, 1.442695
  %v2618 = vpow.pop %v2617
  %v2619 = vmul.f32 %v2574, 1.442695
  %v2620 = vpow.pop %v2619
  %v2621 = vmul.f32 %v2575, 1.442695
  %v2622 = vpow.pop %v2621
  %v2623 = vmul.f32 %v2576, 1.442695
  %v2624 = vpow.pop %v2623
  %v2625 = vadd.f32 %v2578, 1.0
  %v2626 = vadd.f32 %v2580, 1.0
  %v2627 = vadd.f32 %v2582, 1.0
  %v2628 = vadd.f32 %v2584, 1.0
  %v2629 = vadd.f32 %v2586, 1.0
  %v2630 = vadd.f32 %v2588, 1.0
  %v2631 = vadd.f32 %v2590, 1.0
  %v2632 = vadd.f32 %v2592, 1.0
  %v2633 = vadd.f32 %v2594, 1.0
  %v2634 = vadd.f32 %v2596, 1.0
  %v2635 = vadd.f32 %v2598, 1.0
  %v2636 = vadd.f32 %v2600, 1.0
  %v2637 = vadd.f32 %v2602, 1.0
  %v2638 = vadd.f32 %v2604, 1.0
  %v2639 = vadd.f32 %v2606, 1.0
  %v2640 = vadd.f32 %v2608, 1.0
  %v2641 = vadd.f32 %v2610, 1.0
  %v2642 = vadd.f32 %v2612, 1.0
  %v2643 = vadd.f32 %v2614, 1.0
  %v2644 = vadd.f32 %v2616, 1.0
  %v2645 = vadd.f32 %v2618, 1.0
  %v2646 = vadd.f32 %v2620, 1.0
  %v2647 = vadd.f32 %v2622, 1.0
  %v2648 = vadd.f32 %v2624, 1.0
  %v2649 = vrcp.pop %v2625
  %v2650 = vmul.f32 1.0, %v2649
  %v2651 = vrcp.pop %v2626
  %v2652 = vmul.f32 1.0, %v2651
  %v2653 = vrcp.pop %v2627
  %v2654 = vmul.f32 1.0, %v2653
  %v2655 = vrcp.pop %v2628
  %v2656 = vmul.f32 1.0, %v2655
  %v2657 = vrcp.pop %v2629
  %v2658 = vmul.f32 1.0, %v2657
  %v2659 = vrcp.pop %v2630
  %v2660 = vmul.f32 1.0, %v2659
  %v2661 = vrcp.pop %v2631
  %v2662 = vmul.f32 1.0, %v2661
  %v2663 = vrcp.pop %v2632
  %v2664 = vmul.f32 1.0, %v2663
  %v2665 = vrcp.pop %v2633
  %v2666 = vmul.f32 1.0, %v2665
  %v2667 = vrcp.pop %v2634
  %v2668 = vmul.f32 1.0, %v2667
  %v2669 = vrcp.pop %v2635
  %v2670 = vmul.f32 1.0, %v2669
  %v2671 = vrcp.pop %v2636
  %v2672 = vmul.f32 1.0, %v2671
  %v2673 = vrcp.pop %v2637
  %v2674 = vmul.f32 1.0, %v2673
  %v2675 = vrcp.pop %v2638
  %v2676 = vmul.f32 1.0, %v2675
  %v2677 = vrcp.pop %v2639
  %v2678 = vmul.f32 1.0, %v2677
  %v2679 = vrcp.pop %v2640
  %v2680 = vmul.f32 1.0, %v2679
  %v2681 = vrcp.pop %v2641
  %v2682 = vmul.f32 1.0, %v2681
  %v2683 = vrcp.pop %v2642
  %v2684 = vmul.f32 1.0, %v2683
  %v2685 = vrcp.pop %v2643
  %v2686 = vmul.f32 1.0, %v2685
  %v2687 = vrcp.pop %v2644
  %v2688 = vmul.f32 1.0, %v2687
  %v2689 = vrcp.pop %v2645
  %v2690 = vmul.f32 1.0, %v2689
  %v2691 = vrcp.pop %v2646
  %v2692 = vmul.f32 1.0, %v2691
  %v2693 = vrcp.pop %v2647
  %v2694 = vmul.f32 1.0, %v2693
  %v2695 = vrcp.pop %v2648
  %v2696 = vmul.f32 1.0, %v2695
  %v2697 = vtanh.pop %v2524
  %v2698 = vtanh.pop %v2528
  %v2699 = vtanh.pop %v2532
  %v2700 = vtanh.pop %v2536
  %v2701 = vtanh.pop %v2540
  %v2702 = vtanh.pop %v2544
  %v2703 = vtanh.pop %v2548
  %v2704 = vtanh.pop %v2552
  %v2713 = vrot.slane %v2260, 7
  %v2714 = vrot.slane %v2261, 7
  %v2715 = vrot.slane %v2262, 7
  %v2716 = vrot.slane %v2263, 7
  %v2717 = vrot.slane %v2264, 7
  %v2718 = vrot.slane %v2265, 7
  %v2719 = vrot.slane %v2266, 7
  %v2720 = vrot.slane %v2267, 7
  %v2729 = vmul.f32 %v2650, %v2713
  %v2730 = vmul.f32 %v2656, %v2714
  %v2731 = vmul.f32 %v2662, %v2715
  %v2732 = vmul.f32 %v2668, %v2716
  %v2733 = vmul.f32 %v2674, %v2717
  %v2734 = vmul.f32 %v2680, %v2718
  %v2735 = vmul.f32 %v2686, %v2719
  %v2736 = vmul.f32 %v2692, %v2720
  %v2737 = vmul.f32 %v2652, %v2697
  %v2738 = vmul.f32 %v2658, %v2698
  %v2739 = vmul.f32 %v2664, %v2699
  %v2740 = vmul.f32 %v2670, %v2700
  %v2741 = vmul.f32 %v2676, %v2701
  %v2742 = vmul.f32 %v2682, %v2702
  %v2743 = vmul.f32 %v2688, %v2703
  %v2744 = vmul.f32 %v2694, %v2704
  %v2745 = vadd.f32 %v2729, %v2737
  %v2746 = vadd.f32 %v2730, %v2738
  %v2747 = vadd.f32 %v2731, %v2739
  %v2748 = vadd.f32 %v2732, %v2740
  %v2749 = vadd.f32 %v2733, %v2741
  %v2750 = vadd.f32 %v2734, %v2742
  %v2751 = vadd.f32 %v2735, %v2743
  %v2752 = vadd.f32 %v2736, %v2744
  %v2753 = vtanh.pop %v2745
  %v2754 = vtanh.pop %v2746
  %v2755 = vtanh.pop %v2747
  %v2756 = vtanh.pop %v2748
  %v2757 = vtanh.pop %v2749
  %v2758 = vtanh.pop %v2750
  %v2759 = vtanh.pop %v2751
  %v2760 = vtanh.pop %v2752
  %v2761 = vmul.f32 %v2654, %v2753
  %v2762 = vmul.f32 %v2660, %v2754
  %v2763 = vmul.f32 %v2666, %v2755
  %v2764 = vmul.f32 %v2672, %v2756
  %v2765 = vmul.f32 %v2678, %v2757
  %v2766 = vmul.f32 %v2684, %v2758
  %v2767 = vmul.f32 %v2690, %v2759
  %v2768 = vmul.f32 %v2696, %v2760
  %2769 = vst [vmem:[%s4] sm:$0x10] %v2761
  %2770 = vst [vmem:[%s4 + $0x8] sm:$0x10] %v2762
  %2771 = vst [vmem:[%s4 + $0x10] sm:$0x10] %v2763
  %2772 = vst [vmem:[%s4 + $0x18] sm:$0x10] %v2764
  %2773 = vst [vmem:[%s4 + $0x20] sm:$0x10] %v2765
  %2774 = vst [vmem:[%s4 + $0x28] sm:$0x10] %v2766
  %2775 = vst [vmem:[%s4 + $0x30] sm:$0x10] %v2767
  %2776 = vst [vmem:[%s4 + $0x38] sm:$0x10] %v2768
  %v2785 = vrot.slane %v2761, 4
  %v2786 = vrot.slane %v2762, 3
  %v2787 = vsel %vm839, %v2786, %v2785
  %v2788 = vrot.slane %v2763, 2
  %v2789 = vsel %vm842, %v2788, %v2787
  %v2790 = vrot.slane %v2764, 1
  %v2791 = vsel %vm845, %v2790, %v2789
  %v2792 = vsel %vm848, %v2765, %v2791
  %v2793 = vrot.slane %v2766, 7
  %v2794 = vsel %vm851, %v2793, %v2792
  %v2795 = vrot.slane %v2767, 6
  %v2796 = vsel %vm854, %v2795, %v2794
  %v2797 = vrot.slane %v2768, 5
  %v2798 = vsel %vm857, %v2797, %v2796
  %2800 = vmatprep.subr.mxu0 %v30
  %2801 = vmatpush1.msra.mxu0 %v29
  %2802 = vmatprep.subr.mxu0 %v34
  %2803 = vmatpush1.msra.mxu0 %v33
  %2804 = vmatprep.subr.mxu0 %v38
  %2805 = vmatpush1.msra.mxu0 %v37
  %2806 = vmatprep.subr.mxu0 %v42
  %2807 = vmatpush1.msra.mxu0 %v41
  %2808 = vmatprep.subr.mxu0 %v46
  %2809 = vmatpush1.msra.mxu0 %v45
  %2810 = vmatprep.subr.mxu0 %v50
  %2811 = vmatpush1.msra.mxu0 %v49
  %2812 = vmatprep.subr.mxu0 %v54
  %2813 = vmatpush1.msra.mxu0 %v53
  %2814 = vmatprep.subr.mxu0 %v58
  %2815 = vmatpush1.msra.mxu0 %v57
  %2816 = vmatprep.subr.mxu0 %v62
  %2817 = vmatpush1.msra.mxu0 %v61
  %2818 = vmatprep.subr.mxu0 %v66
  %2819 = vmatpush1.msra.mxu0 %v65
  %2820 = vmatprep.subr.mxu0 %v70
  %2821 = vmatpush1.msra.mxu0 %v69
  %2822 = vmatprep.subr.mxu0 %v74
  %2823 = vmatpush1.msra.mxu0 %v73
  %2824 = vmatprep.subr.mxu0 %v78
  %2825 = vmatpush1.msra.mxu0 %v77
  %2826 = vmatprep.subr.mxu0 %v82
  %2827 = vmatpush1.msra.mxu0 %v81
  %2828 = vmatprep.subr.mxu0 %v86
  %2829 = vmatpush1.msra.mxu0 %v85
  %2830 = vmatprep.subr.mxu0 %v90
  %2831 = vmatpush1.msra.mxu0 %v89
  %2832 = vmatprep.subr.mxu0 0.0
  %2833 = vmatpush1.msra.mxu0 0.0
  %2834 = vmatprep.subr.mxu0 0.0
  %2835 = vmatpush1.msra.mxu0 0.0
  %2836 = vmatprep.subr.mxu0 0.0
  %2837 = vmatpush1.msra.mxu0 0.0
  %2838 = vmatprep.subr.mxu0 0.0
  %2839 = vmatpush1.msra.mxu0 0.0
  %2840 = vmatprep.subr.mxu0 0.0
  %2841 = vmatpush1.msra.mxu0 0.0
  %2842 = vmatprep.subr.mxu0 0.0
  %2843 = vmatpush1.msra.mxu0 0.0
  %2844 = vmatprep.subr.mxu0 0.0
  %2845 = vmatpush1.msra.mxu0 0.0
  %2846 = vmatprep.subr.mxu0 0.0
  %2847 = vmatpush1.msra.mxu0 0.0
  %2848 = vmatprep.subr.mxu0 0.0
  %2849 = vmatpush1.msra.mxu0 0.0
  %2850 = vmatprep.subr.mxu0 0.0
  %2851 = vmatpush1.msra.mxu0 0.0
  %2852 = vmatprep.subr.mxu0 0.0
  %2853 = vmatpush1.msra.mxu0 0.0
  %2854 = vmatprep.subr.mxu0 0.0
  %2855 = vmatpush1.msra.mxu0 0.0
  %2856 = vmatprep.subr.mxu0 0.0
  %2857 = vmatpush1.msra.mxu0 0.0
  %2858 = vmatprep.subr.mxu0 0.0
  %2859 = vmatpush1.msra.mxu0 0.0
  %2860 = vmatprep.subr.mxu0 0.0
  %2861 = vmatpush1.msra.mxu0 0.0
  %2862 = vmatprep.subr.mxu0 0.0
  %2863 = vmatpush1.msra.mxu0 0.0
  %2864 = vmatprep.mubr.f32.mxu0 0.0
  %2865 = vmatmul.mubr.f32.gmra.mrb[0].mxu0 %v2798
  %v2866 = vpop.f32.mrb[0].mxu0
  %v2867 = vadd.f32 0.0, %v2866
  %v2868 = vpop.f32.mrb[0].mxu0
  %v2869 = vadd.f32 0.0, %v2868
  %2870 = vdwg.mxu0
  %2871 = vmatprep.subr.mxu0 %v32
  %2872 = vmatpush1.msra.mxu0 %v31
  %2873 = vmatprep.subr.mxu0 %v36
  %2874 = vmatpush1.msra.mxu0 %v35
  %2875 = vmatprep.subr.mxu0 %v40
  %2876 = vmatpush1.msra.mxu0 %v39
  %2877 = vmatprep.subr.mxu0 %v44
  %2878 = vmatpush1.msra.mxu0 %v43
  %2879 = vmatprep.subr.mxu0 %v48
  %2880 = vmatpush1.msra.mxu0 %v47
  %2881 = vmatprep.subr.mxu0 %v52
  %2882 = vmatpush1.msra.mxu0 %v51
  %2883 = vmatprep.subr.mxu0 %v56
  %2884 = vmatpush1.msra.mxu0 %v55
  %2885 = vmatprep.subr.mxu0 %v60
  %2886 = vmatpush1.msra.mxu0 %v59
  %2887 = vmatprep.subr.mxu0 %v64
  %2888 = vmatpush1.msra.mxu0 %v63
  %2889 = vmatprep.subr.mxu0 %v68
  %2890 = vmatpush1.msra.mxu0 %v67
  %2891 = vmatprep.subr.mxu0 %v72
  %2892 = vmatpush1.msra.mxu0 %v71
  %2893 = vmatprep.subr.mxu0 %v76
  %2894 = vmatpush1.msra.mxu0 %v75
  %2895 = vmatprep.subr.mxu0 %v80
  %2896 = vmatpush1.msra.mxu0 %v79
  %2897 = vmatprep.subr.mxu0 %v84
  %2898 = vmatpush1.msra.mxu0 %v83
  %2899 = vmatprep.subr.mxu0 %v88
  %2900 = vmatpush1.msra.mxu0 %v87
  %2901 = vmatprep.subr.mxu0 %v92
  %2902 = vmatpush1.msra.mxu0 %v91
  %2903 = vmatprep.subr.mxu0 0.0
  %2904 = vmatpush1.msra.mxu0 0.0
  %2905 = vmatprep.subr.mxu0 0.0
  %2906 = vmatpush1.msra.mxu0 0.0
  %2907 = vmatprep.subr.mxu0 0.0
  %2908 = vmatpush1.msra.mxu0 0.0
  %2909 = vmatprep.subr.mxu0 0.0
  %2910 = vmatpush1.msra.mxu0 0.0
  %2911 = vmatprep.subr.mxu0 0.0
  %2912 = vmatpush1.msra.mxu0 0.0
  %2913 = vmatprep.subr.mxu0 0.0
  %2914 = vmatpush1.msra.mxu0 0.0
  %2915 = vmatprep.subr.mxu0 0.0
  %2916 = vmatpush1.msra.mxu0 0.0
  %2917 = vmatprep.subr.mxu0 0.0
  %2918 = vmatpush1.msra.mxu0 0.0
  %2919 = vmatprep.subr.mxu0 0.0
  %2920 = vmatpush1.msra.mxu0 0.0
  %2921 = vmatprep.subr.mxu0 0.0
  %2922 = vmatpush1.msra.mxu0 0.0
  %2923 = vmatprep.subr.mxu0 0.0
  %2924 = vmatpush1.msra.mxu0 0.0
  %2925 = vmatprep.subr.mxu0 0.0
  %2926 = vmatpush1.msra.mxu0 0.0
  %2927 = vmatprep.subr.mxu0 0.0
  %2928 = vmatpush1.msra.mxu0 0.0
  %2929 = vmatprep.subr.mxu0 0.0
  %2930 = vmatpush1.msra.mxu0 0.0
  %2931 = vmatprep.subr.mxu0 0.0
  %2932 = vmatpush1.msra.mxu0 0.0
  %2933 = vmatprep.subr.mxu0 0.0
  %2934 = vmatpush1.msra.mxu0 0.0
  %2935 = vmatprep.mubr.f32.mxu0 0.0
  %2936 = vmatmul.mubr.f32.gmra.mrb[0].mxu0 %v2798
  %v2937 = vpop.f32.mrb[0].mxu0
  %v2938 = vadd.f32 0.0, %v2937
  %v2939 = vpop.f32.mrb[0].mxu0
  %v2940 = vadd.f32 0.0, %v2939
  %2941 = vdwg.mxu0
  %v2946 = vrot.slane %v2867, 3
  %v2947 = vrot.slane %v2869, 3
  %v2948 = vrot.slane %v2938, 3
  %v2949 = vrot.slane %v2940, 3
  %v2950 = vrot.slane %v2867, 4
  %v2951 = vrot.slane %v2869, 4
  %v2952 = vrot.slane %v2938, 4
  %v2953 = vrot.slane %v2940, 4
  %v2954 = vrot.slane %v2867, 5
  %v2955 = vrot.slane %v2869, 5
  %v2956 = vrot.slane %v2938, 5
  %v2957 = vrot.slane %v2940, 5
  %v2958 = vrot.slane %v2867, 6
  %v2959 = vrot.slane %v2869, 6
  %v2960 = vrot.slane %v2938, 6
  %v2961 = vrot.slane %v2940, 6
  %v2962 = vrot.slane %v2867, 7
  %v2963 = vrot.slane %v2869, 7
  %v2964 = vrot.slane %v2938, 7
  %v2965 = vrot.slane %v2940, 7
  %v2966 = vrot.slane %v2867, 1
  %v2967 = vrot.slane %v2869, 1
  %v2968 = vrot.slane %v2938, 1
  %v2969 = vrot.slane %v2940, 1
  %v2970 = vrot.slane %v2867, 2
  %v2971 = vrot.slane %v2869, 2
  %v2972 = vrot.slane %v2938, 2
  %v2973 = vrot.slane %v2940, 2
  %v3006 = vadd.f32 %v215, %v2946
  %v3007 = vadd.f32 %v217, %v2947
  %v3008 = vadd.f32 %v328, %v2948
  %v3009 = vadd.f32 %v330, %v2949
  %v3010 = vadd.f32 %v221, %v2950
  %v3011 = vadd.f32 %v223, %v2951
  %v3012 = vadd.f32 %v334, %v2952
  %v3013 = vadd.f32 %v336, %v2953
  %v3014 = vadd.f32 %v227, %v2954
  %v3015 = vadd.f32 %v229, %v2955
  %v3016 = vadd.f32 %v340, %v2956
  %v3017 = vadd.f32 %v342, %v2957
  %v3018 = vadd.f32 %v233, %v2958
  %v3019 = vadd.f32 %v235, %v2959
  %v3020 = vadd.f32 %v346, %v2960
  %v3021 = vadd.f32 %v348, %v2961
  %v3022 = vadd.f32 %v239, %v2962
  %v3023 = vadd.f32 %v241, %v2963
  %v3024 = vadd.f32 %v352, %v2964
  %v3025 = vadd.f32 %v354, %v2965
  %v3026 = vadd.f32 %v245, %v2867
  %v3027 = vadd.f32 %v247, %v2869
  %v3028 = vadd.f32 %v358, %v2938
  %v3029 = vadd.f32 %v360, %v2940
  %v3030 = vadd.f32 %v251, %v2966
  %v3031 = vadd.f32 %v253, %v2967
  %v3032 = vadd.f32 %v364, %v2968
  %v3033 = vadd.f32 %v366, %v2969
  %v3034 = vadd.f32 %v257, %v2970
  %v3035 = vadd.f32 %v259, %v2971
  %v3036 = vadd.f32 %v370, %v2972
  %v3037 = vadd.f32 %v372, %v2973
  %v3038 = vxor.u32 %v3006, 2147483648
  %v3039 = vxor.u32 %v3007, 2147483648
  %v3040 = vxor.u32 %v3008, 2147483648
  %v3041 = vxor.u32 %v3010, 2147483648
  %v3042 = vxor.u32 %v3011, 2147483648
  %v3043 = vxor.u32 %v3012, 2147483648
  %v3044 = vxor.u32 %v3014, 2147483648
  %v3045 = vxor.u32 %v3015, 2147483648
  %v3046 = vxor.u32 %v3016, 2147483648
  %v3047 = vxor.u32 %v3018, 2147483648
  %v3048 = vxor.u32 %v3019, 2147483648
  %v3049 = vxor.u32 %v3020, 2147483648
  %v3050 = vxor.u32 %v3022, 2147483648
  %v3051 = vxor.u32 %v3023, 2147483648
  %v3052 = vxor.u32 %v3024, 2147483648
  %v3053 = vxor.u32 %v3026, 2147483648
  %v3054 = vxor.u32 %v3027, 2147483648
  %v3055 = vxor.u32 %v3028, 2147483648
  %v3056 = vxor.u32 %v3030, 2147483648
  %v3057 = vxor.u32 %v3031, 2147483648
  %v3058 = vxor.u32 %v3032, 2147483648
  %v3059 = vxor.u32 %v3034, 2147483648
  %v3060 = vxor.u32 %v3035, 2147483648
  %v3061 = vxor.u32 %v3036, 2147483648
  %v3062 = vmul.f32 %v3038, 1.442695
  %v3063 = vpow.pop %v3062
  %v3064 = vmul.f32 %v3039, 1.442695
  %v3065 = vpow.pop %v3064
  %v3066 = vmul.f32 %v3040, 1.442695
  %v3067 = vpow.pop %v3066
  %v3068 = vmul.f32 %v3041, 1.442695
  %v3069 = vpow.pop %v3068
  %v3070 = vmul.f32 %v3042, 1.442695
  %v3071 = vpow.pop %v3070
  %v3072 = vmul.f32 %v3043, 1.442695
  %v3073 = vpow.pop %v3072
  %v3074 = vmul.f32 %v3044, 1.442695
  %v3075 = vpow.pop %v3074
  %v3076 = vmul.f32 %v3045, 1.442695
  %v3077 = vpow.pop %v3076
  %v3078 = vmul.f32 %v3046, 1.442695
  %v3079 = vpow.pop %v3078
  %v3080 = vmul.f32 %v3047, 1.442695
  %v3081 = vpow.pop %v3080
  %v3082 = vmul.f32 %v3048, 1.442695
  %v3083 = vpow.pop %v3082
  %v3084 = vmul.f32 %v3049, 1.442695
  %v3085 = vpow.pop %v3084
  %v3086 = vmul.f32 %v3050, 1.442695
  %v3087 = vpow.pop %v3086
  %v3088 = vmul.f32 %v3051, 1.442695
  %v3089 = vpow.pop %v3088
  %v3090 = vmul.f32 %v3052, 1.442695
  %v3091 = vpow.pop %v3090
  %v3092 = vmul.f32 %v3053, 1.442695
  %v3093 = vpow.pop %v3092
  %v3094 = vmul.f32 %v3054, 1.442695
  %v3095 = vpow.pop %v3094
  %v3096 = vmul.f32 %v3055, 1.442695
  %v3097 = vpow.pop %v3096
  %v3098 = vmul.f32 %v3056, 1.442695
  %v3099 = vpow.pop %v3098
  %v3100 = vmul.f32 %v3057, 1.442695
  %v3101 = vpow.pop %v3100
  %v3102 = vmul.f32 %v3058, 1.442695
  %v3103 = vpow.pop %v3102
  %v3104 = vmul.f32 %v3059, 1.442695
  %v3105 = vpow.pop %v3104
  %v3106 = vmul.f32 %v3060, 1.442695
  %v3107 = vpow.pop %v3106
  %v3108 = vmul.f32 %v3061, 1.442695
  %v3109 = vpow.pop %v3108
  %v3110 = vadd.f32 %v3063, 1.0
  %v3111 = vadd.f32 %v3065, 1.0
  %v3112 = vadd.f32 %v3067, 1.0
  %v3113 = vadd.f32 %v3069, 1.0
  %v3114 = vadd.f32 %v3071, 1.0
  %v3115 = vadd.f32 %v3073, 1.0
  %v3116 = vadd.f32 %v3075, 1.0
  %v3117 = vadd.f32 %v3077, 1.0
  %v3118 = vadd.f32 %v3079, 1.0
  %v3119 = vadd.f32 %v3081, 1.0
  %v3120 = vadd.f32 %v3083, 1.0
  %v3121 = vadd.f32 %v3085, 1.0
  %v3122 = vadd.f32 %v3087, 1.0
  %v3123 = vadd.f32 %v3089, 1.0
  %v3124 = vadd.f32 %v3091, 1.0
  %v3125 = vadd.f32 %v3093, 1.0
  %v3126 = vadd.f32 %v3095, 1.0
  %v3127 = vadd.f32 %v3097, 1.0
  %v3128 = vadd.f32 %v3099, 1.0
  %v3129 = vadd.f32 %v3101, 1.0
  %v3130 = vadd.f32 %v3103, 1.0
  %v3131 = vadd.f32 %v3105, 1.0
  %v3132 = vadd.f32 %v3107, 1.0
  %v3133 = vadd.f32 %v3109, 1.0
  %v3134 = vrcp.pop %v3110
  %v3135 = vmul.f32 1.0, %v3134
  %v3136 = vrcp.pop %v3111
  %v3137 = vmul.f32 1.0, %v3136
  %v3138 = vrcp.pop %v3112
  %v3139 = vmul.f32 1.0, %v3138
  %v3140 = vrcp.pop %v3113
  %v3141 = vmul.f32 1.0, %v3140
  %v3142 = vrcp.pop %v3114
  %v3143 = vmul.f32 1.0, %v3142
  %v3144 = vrcp.pop %v3115
  %v3145 = vmul.f32 1.0, %v3144
  %v3146 = vrcp.pop %v3116
  %v3147 = vmul.f32 1.0, %v3146
  %v3148 = vrcp.pop %v3117
  %v3149 = vmul.f32 1.0, %v3148
  %v3150 = vrcp.pop %v3118
  %v3151 = vmul.f32 1.0, %v3150
  %v3152 = vrcp.pop %v3119
  %v3153 = vmul.f32 1.0, %v3152
  %v3154 = vrcp.pop %v3120
  %v3155 = vmul.f32 1.0, %v3154
  %v3156 = vrcp.pop %v3121
  %v3157 = vmul.f32 1.0, %v3156
  %v3158 = vrcp.pop %v3122
  %v3159 = vmul.f32 1.0, %v3158
  %v3160 = vrcp.pop %v3123
  %v3161 = vmul.f32 1.0, %v3160
  %v3162 = vrcp.pop %v3124
  %v3163 = vmul.f32 1.0, %v3162
  %v3164 = vrcp.pop %v3125
  %v3165 = vmul.f32 1.0, %v3164
  %v3166 = vrcp.pop %v3126
  %v3167 = vmul.f32 1.0, %v3166
  %v3168 = vrcp.pop %v3127
  %v3169 = vmul.f32 1.0, %v3168
  %v3170 = vrcp.pop %v3128
  %v3171 = vmul.f32 1.0, %v3170
  %v3172 = vrcp.pop %v3129
  %v3173 = vmul.f32 1.0, %v3172
  %v3174 = vrcp.pop %v3130
  %v3175 = vmul.f32 1.0, %v3174
  %v3176 = vrcp.pop %v3131
  %v3177 = vmul.f32 1.0, %v3176
  %v3178 = vrcp.pop %v3132
  %v3179 = vmul.f32 1.0, %v3178
  %v3180 = vrcp.pop %v3133
  %v3181 = vmul.f32 1.0, %v3180
  %v3182 = vtanh.pop %v3009
  %v3183 = vtanh.pop %v3013
  %v3184 = vtanh.pop %v3017
  %v3185 = vtanh.pop %v3021
  %v3186 = vtanh.pop %v3025
  %v3187 = vtanh.pop %v3029
  %v3188 = vtanh.pop %v3033
  %v3189 = vtanh.pop %v3037
  %v3198 = vrot.slane %v2745, 7
  %v3199 = vrot.slane %v2746, 7
  %v3200 = vrot.slane %v2747, 7
  %v3201 = vrot.slane %v2748, 7
  %v3202 = vrot.slane %v2749, 7
  %v3203 = vrot.slane %v2750, 7
  %v3204 = vrot.slane %v2751, 7
  %v3205 = vrot.slane %v2752, 7
  %v3214 = vmul.f32 %v3135, %v3198
  %v3215 = vmul.f32 %v3141, %v3199
  %v3216 = vmul.f32 %v3147, %v3200
  %v3217 = vmul.f32 %v3153, %v3201
  %v3218 = vmul.f32 %v3159, %v3202
  %v3219 = vmul.f32 %v3165, %v3203
  %v3220 = vmul.f32 %v3171, %v3204
  %v3221 = vmul.f32 %v3177, %v3205
  %v3222 = vmul.f32 %v3137, %v3182
  %v3223 = vmul.f32 %v3143, %v3183
  %v3224 = vmul.f32 %v3149, %v3184
  %v3225 = vmul.f32 %v3155, %v3185
  %v3226 = vmul.f32 %v3161, %v3186
  %v3227 = vmul.f32 %v3167, %v3187
  %v3228 = vmul.f32 %v3173, %v3188
  %v3229 = vmul.f32 %v3179, %v3189
  %v3230 = vadd.f32 %v3214, %v3222
  %v3231 = vadd.f32 %v3215, %v3223
  %v3232 = vadd.f32 %v3216, %v3224
  %v3233 = vadd.f32 %v3217, %v3225
  %v3234 = vadd.f32 %v3218, %v3226
  %v3235 = vadd.f32 %v3219, %v3227
  %v3236 = vadd.f32 %v3220, %v3228
  %v3237 = vadd.f32 %v3221, %v3229
  %v3238 = vtanh.pop %v3230
  %v3239 = vtanh.pop %v3231
  %v3240 = vtanh.pop %v3232
  %v3241 = vtanh.pop %v3233
  %v3242 = vtanh.pop %v3234
  %v3243 = vtanh.pop %v3235
  %v3244 = vtanh.pop %v3236
  %v3245 = vtanh.pop %v3237
  %v3246 = vmul.f32 %v3139, %v3238
  %v3247 = vmul.f32 %v3145, %v3239
  %v3248 = vmul.f32 %v3151, %v3240
  %v3249 = vmul.f32 %v3157, %v3241
  %v3250 = vmul.f32 %v3163, %v3242
  %v3251 = vmul.f32 %v3169, %v3243
  %v3252 = vmul.f32 %v3175, %v3244
  %v3253 = vmul.f32 %v3181, %v3245
  %3254 = vst [vmem:[%s4] sm:$0x20] %v3246
  %3255 = vst [vmem:[%s4 + $0x8] sm:$0x20] %v3247
  %3256 = vst [vmem:[%s4 + $0x10] sm:$0x20] %v3248
  %3257 = vst [vmem:[%s4 + $0x18] sm:$0x20] %v3249
  %3258 = vst [vmem:[%s4 + $0x20] sm:$0x20] %v3250
  %3259 = vst [vmem:[%s4 + $0x28] sm:$0x20] %v3251
  %3260 = vst [vmem:[%s4 + $0x30] sm:$0x20] %v3252
  %3261 = vst [vmem:[%s4 + $0x38] sm:$0x20] %v3253
  %v3270 = vrot.slane %v3246, 5
  %v3271 = vrot.slane %v3247, 4
  %v3272 = vsel %vm839, %v3271, %v3270
  %v3273 = vrot.slane %v3248, 3
  %v3274 = vsel %vm842, %v3273, %v3272
  %v3275 = vrot.slane %v3249, 2
  %v3276 = vsel %vm845, %v3275, %v3274
  %v3277 = vrot.slane %v3250, 1
  %v3278 = vsel %vm848, %v3277, %v3276
  %v3279 = vsel %vm851, %v3251, %v3278
  %v3280 = vrot.slane %v3252, 7
  %v3281 = vsel %vm854, %v3280, %v3279
  %v3282 = vrot.slane %v3253, 6
  %v3283 = vsel %vm857, %v3282, %v3281
  %3285 = vmatprep.subr.mxu0 %v30
  %3286 = vmatpush1.msra.mxu0 %v29
  %3287 = vmatprep.subr.mxu0 %v34
  %3288 = vmatpush1.msra.mxu0 %v33
  %3289 = vmatprep.subr.mxu0 %v38
  %3290 = vmatpush1.msra.mxu0 %v37
  %3291 = vmatprep.subr.mxu0 %v42
  %3292 = vmatpush1.msra.mxu0 %v41
  %3293 = vmatprep.subr.mxu0 %v46
  %3294 = vmatpush1.msra.mxu0 %v45
  %3295 = vmatprep.subr.mxu0 %v50
  %3296 = vmatpush1.msra.mxu0 %v49
  %3297 = vmatprep.subr.mxu0 %v54
  %3298 = vmatpush1.msra.mxu0 %v53
  %3299 = vmatprep.subr.mxu0 %v58
  %3300 = vmatpush1.msra.mxu0 %v57
  %3301 = vmatprep.subr.mxu0 %v62
  %3302 = vmatpush1.msra.mxu0 %v61
  %3303 = vmatprep.subr.mxu0 %v66
  %3304 = vmatpush1.msra.mxu0 %v65
  %3305 = vmatprep.subr.mxu0 %v70
  %3306 = vmatpush1.msra.mxu0 %v69
  %3307 = vmatprep.subr.mxu0 %v74
  %3308 = vmatpush1.msra.mxu0 %v73
  %3309 = vmatprep.subr.mxu0 %v78
  %3310 = vmatpush1.msra.mxu0 %v77
  %3311 = vmatprep.subr.mxu0 %v82
  %3312 = vmatpush1.msra.mxu0 %v81
  %3313 = vmatprep.subr.mxu0 %v86
  %3314 = vmatpush1.msra.mxu0 %v85
  %3315 = vmatprep.subr.mxu0 %v90
  %3316 = vmatpush1.msra.mxu0 %v89
  %3317 = vmatprep.subr.mxu0 0.0
  %3318 = vmatpush1.msra.mxu0 0.0
  %3319 = vmatprep.subr.mxu0 0.0
  %3320 = vmatpush1.msra.mxu0 0.0
  %3321 = vmatprep.subr.mxu0 0.0
  %3322 = vmatpush1.msra.mxu0 0.0
  %3323 = vmatprep.subr.mxu0 0.0
  %3324 = vmatpush1.msra.mxu0 0.0
  %3325 = vmatprep.subr.mxu0 0.0
  %3326 = vmatpush1.msra.mxu0 0.0
  %3327 = vmatprep.subr.mxu0 0.0
  %3328 = vmatpush1.msra.mxu0 0.0
  %3329 = vmatprep.subr.mxu0 0.0
  %3330 = vmatpush1.msra.mxu0 0.0
  %3331 = vmatprep.subr.mxu0 0.0
  %3332 = vmatpush1.msra.mxu0 0.0
  %3333 = vmatprep.subr.mxu0 0.0
  %3334 = vmatpush1.msra.mxu0 0.0
  %3335 = vmatprep.subr.mxu0 0.0
  %3336 = vmatpush1.msra.mxu0 0.0
  %3337 = vmatprep.subr.mxu0 0.0
  %3338 = vmatpush1.msra.mxu0 0.0
  %3339 = vmatprep.subr.mxu0 0.0
  %3340 = vmatpush1.msra.mxu0 0.0
  %3341 = vmatprep.subr.mxu0 0.0
  %3342 = vmatpush1.msra.mxu0 0.0
  %3343 = vmatprep.subr.mxu0 0.0
  %3344 = vmatpush1.msra.mxu0 0.0
  %3345 = vmatprep.subr.mxu0 0.0
  %3346 = vmatpush1.msra.mxu0 0.0
  %3347 = vmatprep.subr.mxu0 0.0
  %3348 = vmatpush1.msra.mxu0 0.0
  %3349 = vmatprep.mubr.f32.mxu0 0.0
  %3350 = vmatmul.mubr.f32.gmra.mrb[0].mxu0 %v3283
  %v3351 = vpop.f32.mrb[0].mxu0
  %v3352 = vadd.f32 0.0, %v3351
  %v3353 = vpop.f32.mrb[0].mxu0
  %v3354 = vadd.f32 0.0, %v3353
  %3355 = vdwg.mxu0
  %3356 = vmatprep.subr.mxu0 %v32
  %3357 = vmatpush1.msra.mxu0 %v31
  %3358 = vmatprep.subr.mxu0 %v36
  %3359 = vmatpush1.msra.mxu0 %v35
  %3360 = vmatprep.subr.mxu0 %v40
  %3361 = vmatpush1.msra.mxu0 %v39
  %3362 = vmatprep.subr.mxu0 %v44
  %3363 = vmatpush1.msra.mxu0 %v43
  %3364 = vmatprep.subr.mxu0 %v48
  %3365 = vmatpush1.msra.mxu0 %v47
  %3366 = vmatprep.subr.mxu0 %v52
  %3367 = vmatpush1.msra.mxu0 %v51
  %3368 = vmatprep.subr.mxu0 %v56
  %3369 = vmatpush1.msra.mxu0 %v55
  %3370 = vmatprep.subr.mxu0 %v60
  %3371 = vmatpush1.msra.mxu0 %v59
  %3372 = vmatprep.subr.mxu0 %v64
  %3373 = vmatpush1.msra.mxu0 %v63
  %3374 = vmatprep.subr.mxu0 %v68
  %3375 = vmatpush1.msra.mxu0 %v67
  %3376 = vmatprep.subr.mxu0 %v72
  %3377 = vmatpush1.msra.mxu0 %v71
  %3378 = vmatprep.subr.mxu0 %v76
  %3379 = vmatpush1.msra.mxu0 %v75
  %3380 = vmatprep.subr.mxu0 %v80
  %3381 = vmatpush1.msra.mxu0 %v79
  %3382 = vmatprep.subr.mxu0 %v84
  %3383 = vmatpush1.msra.mxu0 %v83
  %3384 = vmatprep.subr.mxu0 %v88
  %3385 = vmatpush1.msra.mxu0 %v87
  %3386 = vmatprep.subr.mxu0 %v92
  %3387 = vmatpush1.msra.mxu0 %v91
  %3388 = vmatprep.subr.mxu0 0.0
  %3389 = vmatpush1.msra.mxu0 0.0
  %3390 = vmatprep.subr.mxu0 0.0
  %3391 = vmatpush1.msra.mxu0 0.0
  %3392 = vmatprep.subr.mxu0 0.0
  %3393 = vmatpush1.msra.mxu0 0.0
  %3394 = vmatprep.subr.mxu0 0.0
  %3395 = vmatpush1.msra.mxu0 0.0
  %3396 = vmatprep.subr.mxu0 0.0
  %3397 = vmatpush1.msra.mxu0 0.0
  %3398 = vmatprep.subr.mxu0 0.0
  %3399 = vmatpush1.msra.mxu0 0.0
  %3400 = vmatprep.subr.mxu0 0.0
  %3401 = vmatpush1.msra.mxu0 0.0
  %3402 = vmatprep.subr.mxu0 0.0
  %3403 = vmatpush1.msra.mxu0 0.0
  %3404 = vmatprep.subr.mxu0 0.0
  %3405 = vmatpush1.msra.mxu0 0.0
  %3406 = vmatprep.subr.mxu0 0.0
  %3407 = vmatpush1.msra.mxu0 0.0
  %3408 = vmatprep.subr.mxu0 0.0
  %3409 = vmatpush1.msra.mxu0 0.0
  %3410 = vmatprep.subr.mxu0 0.0
  %3411 = vmatpush1.msra.mxu0 0.0
  %3412 = vmatprep.subr.mxu0 0.0
  %3413 = vmatpush1.msra.mxu0 0.0
  %3414 = vmatprep.subr.mxu0 0.0
  %3415 = vmatpush1.msra.mxu0 0.0
  %3416 = vmatprep.subr.mxu0 0.0
  %3417 = vmatpush1.msra.mxu0 0.0
  %3418 = vmatprep.subr.mxu0 0.0
  %3419 = vmatpush1.msra.mxu0 0.0
  %3420 = vmatprep.mubr.f32.mxu0 0.0
  %3421 = vmatmul.mubr.f32.gmra.mrb[0].mxu0 %v3283
  %v3422 = vpop.f32.mrb[0].mxu0
  %v3423 = vadd.f32 0.0, %v3422
  %v3424 = vpop.f32.mrb[0].mxu0
  %v3425 = vadd.f32 0.0, %v3424
  %3426 = vdwg.mxu0
  %v3431 = vrot.slane %v3352, 2
  %v3432 = vrot.slane %v3354, 2
  %v3433 = vrot.slane %v3423, 2
  %v3434 = vrot.slane %v3425, 2
  %v3435 = vrot.slane %v3352, 3
  %v3436 = vrot.slane %v3354, 3
  %v3437 = vrot.slane %v3423, 3
  %v3438 = vrot.slane %v3425, 3
  %v3439 = vrot.slane %v3352, 4
  %v3440 = vrot.slane %v3354, 4
  %v3441 = vrot.slane %v3423, 4
  %v3442 = vrot.slane %v3425, 4
  %v3443 = vrot.slane %v3352, 5
  %v3444 = vrot.slane %v3354, 5
  %v3445 = vrot.slane %v3423, 5
  %v3446 = vrot.slane %v3425, 5
  %v3447 = vrot.slane %v3352, 6
  %v3448 = vrot.slane %v3354, 6
  %v3449 = vrot.slane %v3423, 6
  %v3450 = vrot.slane %v3425, 6
  %v3451 = vrot.slane %v3352, 7
  %v3452 = vrot.slane %v3354, 7
  %v3453 = vrot.slane %v3423, 7
  %v3454 = vrot.slane %v3425, 7
  %v3455 = vrot.slane %v3352, 1
  %v3456 = vrot.slane %v3354, 1
  %v3457 = vrot.slane %v3423, 1
  %v3458 = vrot.slane %v3425, 1
  %v3491 = vadd.f32 %v215, %v3431
  %v3492 = vadd.f32 %v217, %v3432
  %v3493 = vadd.f32 %v328, %v3433
  %v3494 = vadd.f32 %v330, %v3434
  %v3495 = vadd.f32 %v221, %v3435
  %v3496 = vadd.f32 %v223, %v3436
  %v3497 = vadd.f32 %v334, %v3437
  %v3498 = vadd.f32 %v336, %v3438
  %v3499 = vadd.f32 %v227, %v3439
  %v3500 = vadd.f32 %v229, %v3440
  %v3501 = vadd.f32 %v340, %v3441
  %v3502 = vadd.f32 %v342, %v3442
  %v3503 = vadd.f32 %v233, %v3443
  %v3504 = vadd.f32 %v235, %v3444
  %v3505 = vadd.f32 %v346, %v3445
  %v3506 = vadd.f32 %v348, %v3446
  %v3507 = vadd.f32 %v239, %v3447
  %v3508 = vadd.f32 %v241, %v3448
  %v3509 = vadd.f32 %v352, %v3449
  %v3510 = vadd.f32 %v354, %v3450
  %v3511 = vadd.f32 %v245, %v3451
  %v3512 = vadd.f32 %v247, %v3452
  %v3513 = vadd.f32 %v358, %v3453
  %v3514 = vadd.f32 %v360, %v3454
  %v3515 = vadd.f32 %v251, %v3352
  %v3516 = vadd.f32 %v253, %v3354
  %v3517 = vadd.f32 %v364, %v3423
  %v3518 = vadd.f32 %v366, %v3425
  %v3519 = vadd.f32 %v257, %v3455
  %v3520 = vadd.f32 %v259, %v3456
  %v3521 = vadd.f32 %v370, %v3457
  %v3522 = vadd.f32 %v372, %v3458
  %v3523 = vxor.u32 %v3491, 2147483648
  %v3524 = vxor.u32 %v3492, 2147483648
  %v3525 = vxor.u32 %v3493, 2147483648
  %v3526 = vxor.u32 %v3495, 2147483648
  %v3527 = vxor.u32 %v3496, 2147483648
  %v3528 = vxor.u32 %v3497, 2147483648
  %v3529 = vxor.u32 %v3499, 2147483648
  %v3530 = vxor.u32 %v3500, 2147483648
  %v3531 = vxor.u32 %v3501, 2147483648
  %v3532 = vxor.u32 %v3503, 2147483648
  %v3533 = vxor.u32 %v3504, 2147483648
  %v3534 = vxor.u32 %v3505, 2147483648
  %v3535 = vxor.u32 %v3507, 2147483648
  %v3536 = vxor.u32 %v3508, 2147483648
  %v3537 = vxor.u32 %v3509, 2147483648
  %v3538 = vxor.u32 %v3511, 2147483648
  %v3539 = vxor.u32 %v3512, 2147483648
  %v3540 = vxor.u32 %v3513, 2147483648
  %v3541 = vxor.u32 %v3515, 2147483648
  %v3542 = vxor.u32 %v3516, 2147483648
  %v3543 = vxor.u32 %v3517, 2147483648
  %v3544 = vxor.u32 %v3519, 2147483648
  %v3545 = vxor.u32 %v3520, 2147483648
  %v3546 = vxor.u32 %v3521, 2147483648
  %v3547 = vmul.f32 %v3523, 1.442695
  %v3548 = vpow.pop %v3547
  %v3549 = vmul.f32 %v3524, 1.442695
  %v3550 = vpow.pop %v3549
  %v3551 = vmul.f32 %v3525, 1.442695
  %v3552 = vpow.pop %v3551
  %v3553 = vmul.f32 %v3526, 1.442695
  %v3554 = vpow.pop %v3553
  %v3555 = vmul.f32 %v3527, 1.442695
  %v3556 = vpow.pop %v3555
  %v3557 = vmul.f32 %v3528, 1.442695
  %v3558 = vpow.pop %v3557
  %v3559 = vmul.f32 %v3529, 1.442695
  %v3560 = vpow.pop %v3559
  %v3561 = vmul.f32 %v3530, 1.442695
  %v3562 = vpow.pop %v3561
  %v3563 = vmul.f32 %v3531, 1.442695
  %v3564 = vpow.pop %v3563
  %v3565 = vmul.f32 %v3532, 1.442695
  %v3566 = vpow.pop %v3565
  %v3567 = vmul.f32 %v3533, 1.442695
  %v3568 = vpow.pop %v3567
  %v3569 = vmul.f32 %v3534, 1.442695
  %v3570 = vpow.pop %v3569
  %v3571 = vmul.f32 %v3535, 1.442695
  %v3572 = vpow.pop %v3571
  %v3573 = vmul.f32 %v3536, 1.442695
  %v3574 = vpow.pop %v3573
  %v3575 = vmul.f32 %v3537, 1.442695
  %v3576 = vpow.pop %v3575
  %v3577 = vmul.f32 %v3538, 1.442695
  %v3578 = vpow.pop %v3577
  %v3579 = vmul.f32 %v3539, 1.442695
  %v3580 = vpow.pop %v3579
  %v3581 = vmul.f32 %v3540, 1.442695
  %v3582 = vpow.pop %v3581
  %v3583 = vmul.f32 %v3541, 1.442695
  %v3584 = vpow.pop %v3583
  %v3585 = vmul.f32 %v3542, 1.442695
  %v3586 = vpow.pop %v3585
  %v3587 = vmul.f32 %v3543, 1.442695
  %v3588 = vpow.pop %v3587
  %v3589 = vmul.f32 %v3544, 1.442695
  %v3590 = vpow.pop %v3589
  %v3591 = vmul.f32 %v3545, 1.442695
  %v3592 = vpow.pop %v3591
  %v3593 = vmul.f32 %v3546, 1.442695
  %v3594 = vpow.pop %v3593
  %v3595 = vadd.f32 %v3548, 1.0
  %v3596 = vadd.f32 %v3550, 1.0
  %v3597 = vadd.f32 %v3552, 1.0
  %v3598 = vadd.f32 %v3554, 1.0
  %v3599 = vadd.f32 %v3556, 1.0
  %v3600 = vadd.f32 %v3558, 1.0
  %v3601 = vadd.f32 %v3560, 1.0
  %v3602 = vadd.f32 %v3562, 1.0
  %v3603 = vadd.f32 %v3564, 1.0
  %v3604 = vadd.f32 %v3566, 1.0
  %v3605 = vadd.f32 %v3568, 1.0
  %v3606 = vadd.f32 %v3570, 1.0
  %v3607 = vadd.f32 %v3572, 1.0
  %v3608 = vadd.f32 %v3574, 1.0
  %v3609 = vadd.f32 %v3576, 1.0
  %v3610 = vadd.f32 %v3578, 1.0
  %v3611 = vadd.f32 %v3580, 1.0
  %v3612 = vadd.f32 %v3582, 1.0
  %v3613 = vadd.f32 %v3584, 1.0
  %v3614 = vadd.f32 %v3586, 1.0
  %v3615 = vadd.f32 %v3588, 1.0
  %v3616 = vadd.f32 %v3590, 1.0
  %v3617 = vadd.f32 %v3592, 1.0
  %v3618 = vadd.f32 %v3594, 1.0
  %v3619 = vrcp.pop %v3595
  %v3620 = vmul.f32 1.0, %v3619
  %v3621 = vrcp.pop %v3596
  %v3622 = vmul.f32 1.0, %v3621
  %v3623 = vrcp.pop %v3597
  %v3624 = vmul.f32 1.0, %v3623
  %v3625 = vrcp.pop %v3598
  %v3626 = vmul.f32 1.0, %v3625
  %v3627 = vrcp.pop %v3599
  %v3628 = vmul.f32 1.0, %v3627
  %v3629 = vrcp.pop %v3600
  %v3630 = vmul.f32 1.0, %v3629
  %v3631 = vrcp.pop %v3601
  %v3632 = vmul.f32 1.0, %v3631
  %v3633 = vrcp.pop %v3602
  %v3634 = vmul.f32 1.0, %v3633
  %v3635 = vrcp.pop %v3603
  %v3636 = vmul.f32 1.0, %v3635
  %v3637 = vrcp.pop %v3604
  %v3638 = vmul.f32 1.0, %v3637
  %v3639 = vrcp.pop %v3605
  %v3640 = vmul.f32 1.0, %v3639
  %v3641 = vrcp.pop %v3606
  %v3642 = vmul.f32 1.0, %v3641
  %v3643 = vrcp.pop %v3607
  %v3644 = vmul.f32 1.0, %v3643
  %v3645 = vrcp.pop %v3608
  %v3646 = vmul.f32 1.0, %v3645
  %v3647 = vrcp.pop %v3609
  %v3648 = vmul.f32 1.0, %v3647
  %v3649 = vrcp.pop %v3610
  %v3650 = vmul.f32 1.0, %v3649
  %v3651 = vrcp.pop %v3611
  %v3652 = vmul.f32 1.0, %v3651
  %v3653 = vrcp.pop %v3612
  %v3654 = vmul.f32 1.0, %v3653
  %v3655 = vrcp.pop %v3613
  %v3656 = vmul.f32 1.0, %v3655
  %v3657 = vrcp.pop %v3614
  %v3658 = vmul.f32 1.0, %v3657
  %v3659 = vrcp.pop %v3615
  %v3660 = vmul.f32 1.0, %v3659
  %v3661 = vrcp.pop %v3616
  %v3662 = vmul.f32 1.0, %v3661
  %v3663 = vrcp.pop %v3617
  %v3664 = vmul.f32 1.0, %v3663
  %v3665 = vrcp.pop %v3618
  %v3666 = vmul.f32 1.0, %v3665
  %v3667 = vtanh.pop %v3494
  %v3668 = vtanh.pop %v3498
  %v3669 = vtanh.pop %v3502
  %v3670 = vtanh.pop %v3506
  %v3671 = vtanh.pop %v3510
  %v3672 = vtanh.pop %v3514
  %v3673 = vtanh.pop %v3518
  %v3674 = vtanh.pop %v3522
  %v3683 = vrot.slane %v3230, 7
  %v3684 = vrot.slane %v3231, 7
  %v3685 = vrot.slane %v3232, 7
  %v3686 = vrot.slane %v3233, 7
  %v3687 = vrot.slane %v3234, 7
  %v3688 = vrot.slane %v3235, 7
  %v3689 = vrot.slane %v3236, 7
  %v3690 = vrot.slane %v3237, 7
  %v3699 = vmul.f32 %v3620, %v3683
  %v3700 = vmul.f32 %v3626, %v3684
  %v3701 = vmul.f32 %v3632, %v3685
  %v3702 = vmul.f32 %v3638, %v3686
  %v3703 = vmul.f32 %v3644, %v3687
  %v3704 = vmul.f32 %v3650, %v3688
  %v3705 = vmul.f32 %v3656, %v3689
  %v3706 = vmul.f32 %v3662, %v3690
  %v3707 = vmul.f32 %v3622, %v3667
  %v3708 = vmul.f32 %v3628, %v3668
  %v3709 = vmul.f32 %v3634, %v3669
  %v3710 = vmul.f32 %v3640, %v3670
  %v3711 = vmul.f32 %v3646, %v3671
  %v3712 = vmul.f32 %v3652, %v3672
  %v3713 = vmul.f32 %v3658, %v3673
  %v3714 = vmul.f32 %v3664, %v3674
  %v3715 = vadd.f32 %v3699, %v3707
  %v3716 = vadd.f32 %v3700, %v3708
  %v3717 = vadd.f32 %v3701, %v3709
  %v3718 = vadd.f32 %v3702, %v3710
  %v3719 = vadd.f32 %v3703, %v3711
  %v3720 = vadd.f32 %v3704, %v3712
  %v3721 = vadd.f32 %v3705, %v3713
  %v3722 = vadd.f32 %v3706, %v3714
  %v3723 = vtanh.pop %v3715
  %v3724 = vtanh.pop %v3716
  %v3725 = vtanh.pop %v3717
  %v3726 = vtanh.pop %v3718
  %v3727 = vtanh.pop %v3719
  %v3728 = vtanh.pop %v3720
  %v3729 = vtanh.pop %v3721
  %v3730 = vtanh.pop %v3722
  %v3731 = vmul.f32 %v3624, %v3723
  %v3732 = vmul.f32 %v3630, %v3724
  %v3733 = vmul.f32 %v3636, %v3725
  %v3734 = vmul.f32 %v3642, %v3726
  %v3735 = vmul.f32 %v3648, %v3727
  %v3736 = vmul.f32 %v3654, %v3728
  %v3737 = vmul.f32 %v3660, %v3729
  %v3738 = vmul.f32 %v3666, %v3730
  %3739 = vst [vmem:[%s4] sm:$0x40] %v3731
  %3740 = vst [vmem:[%s4 + $0x8] sm:$0x40] %v3732
  %3741 = vst [vmem:[%s4 + $0x10] sm:$0x40] %v3733
  %3742 = vst [vmem:[%s4 + $0x18] sm:$0x40] %v3734
  %3743 = vst [vmem:[%s4 + $0x20] sm:$0x40] %v3735
  %3744 = vst [vmem:[%s4 + $0x28] sm:$0x40] %v3736
  %3745 = vst [vmem:[%s4 + $0x30] sm:$0x40] %v3737
  %3746 = vst [vmem:[%s4 + $0x38] sm:$0x40] %v3738
  %v3755 = vrot.slane %v3731, 6
  %v3756 = vrot.slane %v3732, 5
  %v3757 = vsel %vm839, %v3756, %v3755
  %v3758 = vrot.slane %v3733, 4
  %v3759 = vsel %vm842, %v3758, %v3757
  %v3760 = vrot.slane %v3734, 3
  %v3761 = vsel %vm845, %v3760, %v3759
  %v3762 = vrot.slane %v3735, 2
  %v3763 = vsel %vm848, %v3762, %v3761
  %v3764 = vrot.slane %v3736, 1
  %v3765 = vsel %vm851, %v3764, %v3763
  %v3766 = vsel %vm854, %v3737, %v3765
  %v3767 = vrot.slane %v3738, 7
  %v3768 = vsel %vm857, %v3767, %v3766
  %3770 = vmatprep.subr.mxu0 %v30
  %3771 = vmatpush1.msra.mxu0 %v29
  %3772 = vmatprep.subr.mxu0 %v34
  %3773 = vmatpush1.msra.mxu0 %v33
  %3774 = vmatprep.subr.mxu0 %v38
  %3775 = vmatpush1.msra.mxu0 %v37
  %3776 = vmatprep.subr.mxu0 %v42
  %3777 = vmatpush1.msra.mxu0 %v41
  %3778 = vmatprep.subr.mxu0 %v46
  %3779 = vmatpush1.msra.mxu0 %v45
  %3780 = vmatprep.subr.mxu0 %v50
  %3781 = vmatpush1.msra.mxu0 %v49
  %3782 = vmatprep.subr.mxu0 %v54
  %3783 = vmatpush1.msra.mxu0 %v53
  %3784 = vmatprep.subr.mxu0 %v58
  %3785 = vmatpush1.msra.mxu0 %v57
  %3786 = vmatprep.subr.mxu0 %v62
  %3787 = vmatpush1.msra.mxu0 %v61
  %3788 = vmatprep.subr.mxu0 %v66
  %3789 = vmatpush1.msra.mxu0 %v65
  %3790 = vmatprep.subr.mxu0 %v70
  %3791 = vmatpush1.msra.mxu0 %v69
  %3792 = vmatprep.subr.mxu0 %v74
  %3793 = vmatpush1.msra.mxu0 %v73
  %3794 = vmatprep.subr.mxu0 %v78
  %3795 = vmatpush1.msra.mxu0 %v77
  %3796 = vmatprep.subr.mxu0 %v82
  %3797 = vmatpush1.msra.mxu0 %v81
  %3798 = vmatprep.subr.mxu0 %v86
  %3799 = vmatpush1.msra.mxu0 %v85
  %3800 = vmatprep.subr.mxu0 %v90
  %3801 = vmatpush1.msra.mxu0 %v89
  %3802 = vmatprep.subr.mxu0 0.0
  %3803 = vmatpush1.msra.mxu0 0.0
  %3804 = vmatprep.subr.mxu0 0.0
  %3805 = vmatpush1.msra.mxu0 0.0
  %3806 = vmatprep.subr.mxu0 0.0
  %3807 = vmatpush1.msra.mxu0 0.0
  %3808 = vmatprep.subr.mxu0 0.0
  %3809 = vmatpush1.msra.mxu0 0.0
  %3810 = vmatprep.subr.mxu0 0.0
  %3811 = vmatpush1.msra.mxu0 0.0
  %3812 = vmatprep.subr.mxu0 0.0
  %3813 = vmatpush1.msra.mxu0 0.0
  %3814 = vmatprep.subr.mxu0 0.0
  %3815 = vmatpush1.msra.mxu0 0.0
  %3816 = vmatprep.subr.mxu0 0.0
  %3817 = vmatpush1.msra.mxu0 0.0
  %3818 = vmatprep.subr.mxu0 0.0
  %3819 = vmatpush1.msra.mxu0 0.0
  %3820 = vmatprep.subr.mxu0 0.0
  %3821 = vmatpush1.msra.mxu0 0.0
  %3822 = vmatprep.subr.mxu0 0.0
  %3823 = vmatpush1.msra.mxu0 0.0
  %3824 = vmatprep.subr.mxu0 0.0
  %3825 = vmatpush1.msra.mxu0 0.0
  %3826 = vmatprep.subr.mxu0 0.0
  %3827 = vmatpush1.msra.mxu0 0.0
  %3828 = vmatprep.subr.mxu0 0.0
  %3829 = vmatpush1.msra.mxu0 0.0
  %3830 = vmatprep.subr.mxu0 0.0
  %3831 = vmatpush1.msra.mxu0 0.0
  %3832 = vmatprep.subr.mxu0 0.0
  %3833 = vmatpush1.msra.mxu0 0.0
  %3834 = vmatprep.mubr.f32.mxu0 0.0
  %3835 = vmatmul.mubr.f32.gmra.mrb[0].mxu0 %v3768
  %v3836 = vpop.f32.mrb[0].mxu0
  %v3837 = vadd.f32 0.0, %v3836
  %v3838 = vpop.f32.mrb[0].mxu0
  %v3839 = vadd.f32 0.0, %v3838
  %3840 = vdwg.mxu0
  %3841 = vmatprep.subr.mxu0 %v32
  %3842 = vmatpush1.msra.mxu0 %v31
  %3843 = vmatprep.subr.mxu0 %v36
  %3844 = vmatpush1.msra.mxu0 %v35
  %3845 = vmatprep.subr.mxu0 %v40
  %3846 = vmatpush1.msra.mxu0 %v39
  %3847 = vmatprep.subr.mxu0 %v44
  %3848 = vmatpush1.msra.mxu0 %v43
  %3849 = vmatprep.subr.mxu0 %v48
  %3850 = vmatpush1.msra.mxu0 %v47
  %3851 = vmatprep.subr.mxu0 %v52
  %3852 = vmatpush1.msra.mxu0 %v51
  %3853 = vmatprep.subr.mxu0 %v56
  %3854 = vmatpush1.msra.mxu0 %v55
  %3855 = vmatprep.subr.mxu0 %v60
  %3856 = vmatpush1.msra.mxu0 %v59
  %3857 = vmatprep.subr.mxu0 %v64
  %3858 = vmatpush1.msra.mxu0 %v63
  %3859 = vmatprep.subr.mxu0 %v68
  %3860 = vmatpush1.msra.mxu0 %v67
  %3861 = vmatprep.subr.mxu0 %v72
  %3862 = vmatpush1.msra.mxu0 %v71
  %3863 = vmatprep.subr.mxu0 %v76
  %3864 = vmatpush1.msra.mxu0 %v75
  %3865 = vmatprep.subr.mxu0 %v80
  %3866 = vmatpush1.msra.mxu0 %v79
  %3867 = vmatprep.subr.mxu0 %v84
  %3868 = vmatpush1.msra.mxu0 %v83
  %3869 = vmatprep.subr.mxu0 %v88
  %3870 = vmatpush1.msra.mxu0 %v87
  %3871 = vmatprep.subr.mxu0 %v92
  %3872 = vmatpush1.msra.mxu0 %v91
  %3873 = vmatprep.subr.mxu0 0.0
  %3874 = vmatpush1.msra.mxu0 0.0
  %3875 = vmatprep.subr.mxu0 0.0
  %3876 = vmatpush1.msra.mxu0 0.0
  %3877 = vmatprep.subr.mxu0 0.0
  %3878 = vmatpush1.msra.mxu0 0.0
  %3879 = vmatprep.subr.mxu0 0.0
  %3880 = vmatpush1.msra.mxu0 0.0
  %3881 = vmatprep.subr.mxu0 0.0
  %3882 = vmatpush1.msra.mxu0 0.0
  %3883 = vmatprep.subr.mxu0 0.0
  %3884 = vmatpush1.msra.mxu0 0.0
  %3885 = vmatprep.subr.mxu0 0.0
  %3886 = vmatpush1.msra.mxu0 0.0
  %3887 = vmatprep.subr.mxu0 0.0
  %3888 = vmatpush1.msra.mxu0 0.0
  %3889 = vmatprep.subr.mxu0 0.0
  %3890 = vmatpush1.msra.mxu0 0.0
  %3891 = vmatprep.subr.mxu0 0.0
  %3892 = vmatpush1.msra.mxu0 0.0
  %3893 = vmatprep.subr.mxu0 0.0
  %3894 = vmatpush1.msra.mxu0 0.0
  %3895 = vmatprep.subr.mxu0 0.0
  %3896 = vmatpush1.msra.mxu0 0.0
  %3897 = vmatprep.subr.mxu0 0.0
  %3898 = vmatpush1.msra.mxu0 0.0
  %3899 = vmatprep.subr.mxu0 0.0
  %3900 = vmatpush1.msra.mxu0 0.0
  %3901 = vmatprep.subr.mxu0 0.0
  %3902 = vmatpush1.msra.mxu0 0.0
  %3903 = vmatprep.subr.mxu0 0.0
  %3904 = vmatpush1.msra.mxu0 0.0
  %3905 = vmatprep.mubr.f32.mxu0 0.0
  %3906 = vmatmul.mubr.f32.gmra.mrb[0].mxu0 %v3768
  %v3907 = vpop.f32.mrb[0].mxu0
  %v3908 = vadd.f32 0.0, %v3907
  %v3909 = vpop.f32.mrb[0].mxu0
  %v3910 = vadd.f32 0.0, %v3909
  %3911 = vdwg.mxu0
  %v3916 = vrot.slane %v3837, 1
  %v3917 = vrot.slane %v3839, 1
  %v3918 = vrot.slane %v3908, 1
  %v3919 = vrot.slane %v3910, 1
  %v3920 = vrot.slane %v3837, 2
  %v3921 = vrot.slane %v3839, 2
  %v3922 = vrot.slane %v3908, 2
  %v3923 = vrot.slane %v3910, 2
  %v3924 = vrot.slane %v3837, 3
  %v3925 = vrot.slane %v3839, 3
  %v3926 = vrot.slane %v3908, 3
  %v3927 = vrot.slane %v3910, 3
  %v3928 = vrot.slane %v3837, 4
  %v3929 = vrot.slane %v3839, 4
  %v3930 = vrot.slane %v3908, 4
  %v3931 = vrot.slane %v3910, 4
  %v3932 = vrot.slane %v3837, 5
  %v3933 = vrot.slane %v3839, 5
  %v3934 = vrot.slane %v3908, 5
  %v3935 = vrot.slane %v3910, 5
  %v3936 = vrot.slane %v3837, 6
  %v3937 = vrot.slane %v3839, 6
  %v3938 = vrot.slane %v3908, 6
  %v3939 = vrot.slane %v3910, 6
  %v3940 = vrot.slane %v3837, 7
  %v3941 = vrot.slane %v3839, 7
  %v3942 = vrot.slane %v3908, 7
  %v3943 = vrot.slane %v3910, 7
  %v3976 = vadd.f32 %v215, %v3916
  %v3977 = vadd.f32 %v217, %v3917
  %v3978 = vadd.f32 %v328, %v3918
  %v3979 = vadd.f32 %v330, %v3919
  %v3980 = vadd.f32 %v221, %v3920
  %v3981 = vadd.f32 %v223, %v3921
  %v3982 = vadd.f32 %v334, %v3922
  %v3983 = vadd.f32 %v336, %v3923
  %v3984 = vadd.f32 %v227, %v3924
  %v3985 = vadd.f32 %v229, %v3925
  %v3986 = vadd.f32 %v340, %v3926
  %v3987 = vadd.f32 %v342, %v3927
  %v3988 = vadd.f32 %v233, %v3928
  %v3989 = vadd.f32 %v235, %v3929
  %v3990 = vadd.f32 %v346, %v3930
  %v3991 = vadd.f32 %v348, %v3931
  %v3992 = vadd.f32 %v239, %v3932
  %v3993 = vadd.f32 %v241, %v3933
  %v3994 = vadd.f32 %v352, %v3934
  %v3995 = vadd.f32 %v354, %v3935
  %v3996 = vadd.f32 %v245, %v3936
  %v3997 = vadd.f32 %v247, %v3937
  %v3998 = vadd.f32 %v358, %v3938
  %v3999 = vadd.f32 %v360, %v3939
  %v4000 = vadd.f32 %v251, %v3940
  %v4001 = vadd.f32 %v253, %v3941
  %v4002 = vadd.f32 %v364, %v3942
  %v4003 = vadd.f32 %v366, %v3943
  %v4004 = vadd.f32 %v257, %v3837
  %v4005 = vadd.f32 %v259, %v3839
  %v4006 = vadd.f32 %v370, %v3908
  %v4007 = vadd.f32 %v372, %v3910
  %v4008 = vxor.u32 %v3976, 2147483648
  %v4009 = vxor.u32 %v3977, 2147483648
  %v4010 = vxor.u32 %v3978, 2147483648
  %v4011 = vxor.u32 %v3980, 2147483648
  %v4012 = vxor.u32 %v3981, 2147483648
  %v4013 = vxor.u32 %v3982, 2147483648
  %v4014 = vxor.u32 %v3984, 2147483648
  %v4015 = vxor.u32 %v3985, 2147483648
  %v4016 = vxor.u32 %v3986, 2147483648
  %v4017 = vxor.u32 %v3988, 2147483648
  %v4018 = vxor.u32 %v3989, 2147483648
  %v4019 = vxor.u32 %v3990, 2147483648
  %v4020 = vxor.u32 %v3992, 2147483648
  %v4021 = vxor.u32 %v3993, 2147483648
  %v4022 = vxor.u32 %v3994, 2147483648
  %v4023 = vxor.u32 %v3996, 2147483648
  %v4024 = vxor.u32 %v3997, 2147483648
  %v4025 = vxor.u32 %v3998, 2147483648
  %v4026 = vxor.u32 %v4000, 2147483648
  %v4027 = vxor.u32 %v4001, 2147483648
  %v4028 = vxor.u32 %v4002, 2147483648
  %v4029 = vxor.u32 %v4004, 2147483648
  %v4030 = vxor.u32 %v4005, 2147483648
  %v4031 = vxor.u32 %v4006, 2147483648
  %v4032 = vmul.f32 %v4008, 1.442695
  %v4033 = vpow.pop %v4032
  %v4034 = vmul.f32 %v4009, 1.442695
  %v4035 = vpow.pop %v4034
  %v4036 = vmul.f32 %v4010, 1.442695
  %v4037 = vpow.pop %v4036
  %v4038 = vmul.f32 %v4011, 1.442695
  %v4039 = vpow.pop %v4038
  %v4040 = vmul.f32 %v4012, 1.442695
  %v4041 = vpow.pop %v4040
  %v4042 = vmul.f32 %v4013, 1.442695
  %v4043 = vpow.pop %v4042
  %v4044 = vmul.f32 %v4014, 1.442695
  %v4045 = vpow.pop %v4044
  %v4046 = vmul.f32 %v4015, 1.442695
  %v4047 = vpow.pop %v4046
  %v4048 = vmul.f32 %v4016, 1.442695
  %v4049 = vpow.pop %v4048
  %v4050 = vmul.f32 %v4017, 1.442695
  %v4051 = vpow.pop %v4050
  %v4052 = vmul.f32 %v4018, 1.442695
  %v4053 = vpow.pop %v4052
  %v4054 = vmul.f32 %v4019, 1.442695
  %v4055 = vpow.pop %v4054
  %v4056 = vmul.f32 %v4020, 1.442695
  %v4057 = vpow.pop %v4056
  %v4058 = vmul.f32 %v4021, 1.442695
  %v4059 = vpow.pop %v4058
  %v4060 = vmul.f32 %v4022, 1.442695
  %v4061 = vpow.pop %v4060
  %v4062 = vmul.f32 %v4023, 1.442695
  %v4063 = vpow.pop %v4062
  %v4064 = vmul.f32 %v4024, 1.442695
  %v4065 = vpow.pop %v4064
  %v4066 = vmul.f32 %v4025, 1.442695
  %v4067 = vpow.pop %v4066
  %v4068 = vmul.f32 %v4026, 1.442695
  %v4069 = vpow.pop %v4068
  %v4070 = vmul.f32 %v4027, 1.442695
  %v4071 = vpow.pop %v4070
  %v4072 = vmul.f32 %v4028, 1.442695
  %v4073 = vpow.pop %v4072
  %v4074 = vmul.f32 %v4029, 1.442695
  %v4075 = vpow.pop %v4074
  %v4076 = vmul.f32 %v4030, 1.442695
  %v4077 = vpow.pop %v4076
  %v4078 = vmul.f32 %v4031, 1.442695
  %v4079 = vpow.pop %v4078
  %v4080 = vadd.f32 %v4033, 1.0
  %v4081 = vadd.f32 %v4035, 1.0
  %v4082 = vadd.f32 %v4037, 1.0
  %v4083 = vadd.f32 %v4039, 1.0
  %v4084 = vadd.f32 %v4041, 1.0
  %v4085 = vadd.f32 %v4043, 1.0
  %v4086 = vadd.f32 %v4045, 1.0
  %v4087 = vadd.f32 %v4047, 1.0
  %v4088 = vadd.f32 %v4049, 1.0
  %v4089 = vadd.f32 %v4051, 1.0
  %v4090 = vadd.f32 %v4053, 1.0
  %v4091 = vadd.f32 %v4055, 1.0
  %v4092 = vadd.f32 %v4057, 1.0
  %v4093 = vadd.f32 %v4059, 1.0
  %v4094 = vadd.f32 %v4061, 1.0
  %v4095 = vadd.f32 %v4063, 1.0
  %v4096 = vadd.f32 %v4065, 1.0
  %v4097 = vadd.f32 %v4067, 1.0
  %v4098 = vadd.f32 %v4069, 1.0
  %v4099 = vadd.f32 %v4071, 1.0
  %v4100 = vadd.f32 %v4073, 1.0
  %v4101 = vadd.f32 %v4075, 1.0
  %v4102 = vadd.f32 %v4077, 1.0
  %v4103 = vadd.f32 %v4079, 1.0
  %v4104 = vrcp.pop %v4080
  %v4105 = vmul.f32 1.0, %v4104
  %v4106 = vrcp.pop %v4081
  %v4107 = vmul.f32 1.0, %v4106
  %v4108 = vrcp.pop %v4082
  %v4109 = vmul.f32 1.0, %v4108
  %v4110 = vrcp.pop %v4083
  %v4111 = vmul.f32 1.0, %v4110
  %v4112 = vrcp.pop %v4084
  %v4113 = vmul.f32 1.0, %v4112
  %v4114 = vrcp.pop %v4085
  %v4115 = vmul.f32 1.0, %v4114
  %v4116 = vrcp.pop %v4086
  %v4117 = vmul.f32 1.0, %v4116
  %v4118 = vrcp.pop %v4087
  %v4119 = vmul.f32 1.0, %v4118
  %v4120 = vrcp.pop %v4088
  %v4121 = vmul.f32 1.0, %v4120
  %v4122 = vrcp.pop %v4089
  %v4123 = vmul.f32 1.0, %v4122
  %v4124 = vrcp.pop %v4090
  %v4125 = vmul.f32 1.0, %v4124
  %v4126 = vrcp.pop %v4091
  %v4127 = vmul.f32 1.0, %v4126
  %v4128 = vrcp.pop %v4092
  %v4129 = vmul.f32 1.0, %v4128
  %v4130 = vrcp.pop %v4093
  %v4131 = vmul.f32 1.0, %v4130
  %v4132 = vrcp.pop %v4094
  %v4133 = vmul.f32 1.0, %v4132
  %v4134 = vrcp.pop %v4095
  %v4135 = vmul.f32 1.0, %v4134
  %v4136 = vrcp.pop %v4096
  %v4137 = vmul.f32 1.0, %v4136
  %v4138 = vrcp.pop %v4097
  %v4139 = vmul.f32 1.0, %v4138
  %v4140 = vrcp.pop %v4098
  %v4141 = vmul.f32 1.0, %v4140
  %v4142 = vrcp.pop %v4099
  %v4143 = vmul.f32 1.0, %v4142
  %v4144 = vrcp.pop %v4100
  %v4145 = vmul.f32 1.0, %v4144
  %v4146 = vrcp.pop %v4101
  %v4147 = vmul.f32 1.0, %v4146
  %v4148 = vrcp.pop %v4102
  %v4149 = vmul.f32 1.0, %v4148
  %v4150 = vrcp.pop %v4103
  %v4151 = vmul.f32 1.0, %v4150
  %v4152 = vtanh.pop %v3979
  %v4153 = vtanh.pop %v3983
  %v4154 = vtanh.pop %v3987
  %v4155 = vtanh.pop %v3991
  %v4156 = vtanh.pop %v3995
  %v4157 = vtanh.pop %v3999
  %v4158 = vtanh.pop %v4003
  %v4159 = vtanh.pop %v4007
  %v4168 = vrot.slane %v3715, 7
  %v4169 = vrot.slane %v3716, 7
  %v4170 = vrot.slane %v3717, 7
  %v4171 = vrot.slane %v3718, 7
  %v4172 = vrot.slane %v3719, 7
  %v4173 = vrot.slane %v3720, 7
  %v4174 = vrot.slane %v3721, 7
  %v4175 = vrot.slane %v3722, 7
  %v4184 = vmul.f32 %v4105, %v4168
  %v4185 = vmul.f32 %v4111, %v4169
  %v4186 = vmul.f32 %v4117, %v4170
  %v4187 = vmul.f32 %v4123, %v4171
  %v4188 = vmul.f32 %v4129, %v4172
  %v4189 = vmul.f32 %v4135, %v4173
  %v4190 = vmul.f32 %v4141, %v4174
  %v4191 = vmul.f32 %v4147, %v4175
  %v4192 = vmul.f32 %v4107, %v4152
  %v4193 = vmul.f32 %v4113, %v4153
  %v4194 = vmul.f32 %v4119, %v4154
  %v4195 = vmul.f32 %v4125, %v4155
  %v4196 = vmul.f32 %v4131, %v4156
  %v4197 = vmul.f32 %v4137, %v4157
  %v4198 = vmul.f32 %v4143, %v4158
  %v4199 = vmul.f32 %v4149, %v4159
  %v4200 = vadd.f32 %v4184, %v4192
  %v4201 = vadd.f32 %v4185, %v4193
  %v4202 = vadd.f32 %v4186, %v4194
  %v4203 = vadd.f32 %v4187, %v4195
  %v4204 = vadd.f32 %v4188, %v4196
  %v4205 = vadd.f32 %v4189, %v4197
  %v4206 = vadd.f32 %v4190, %v4198
  %v4207 = vadd.f32 %v4191, %v4199
  %v4208 = vtanh.pop %v4200
  %v4209 = vtanh.pop %v4201
  %v4210 = vtanh.pop %v4202
  %v4211 = vtanh.pop %v4203
  %v4212 = vtanh.pop %v4204
  %v4213 = vtanh.pop %v4205
  %v4214 = vtanh.pop %v4206
  %v4215 = vtanh.pop %v4207
  %v4216 = vmul.f32 %v4109, %v4208
  %v4217 = vmul.f32 %v4115, %v4209
  %v4218 = vmul.f32 %v4121, %v4210
  %v4219 = vmul.f32 %v4127, %v4211
  %v4220 = vmul.f32 %v4133, %v4212
  %v4221 = vmul.f32 %v4139, %v4213
  %v4222 = vmul.f32 %v4145, %v4214
  %v4223 = vmul.f32 %v4151, %v4215
  %4224 = vst [vmem:[%s4] sm:$0x80] %v4216
  %4225 = vst [vmem:[%s4 + $0x8] sm:$0x80] %v4217
  %4226 = vst [vmem:[%s4 + $0x10] sm:$0x80] %v4218
  %4227 = vst [vmem:[%s4 + $0x18] sm:$0x80] %v4219
  %4228 = vst [vmem:[%s4 + $0x20] sm:$0x80] %v4220
  %4229 = vst [vmem:[%s4 + $0x28] sm:$0x80] %v4221
  %4230 = vst [vmem:[%s4 + $0x30] sm:$0x80] %v4222
  %4231 = vst [vmem:[%s4 + $0x38] sm:$0x80] %v4223
  %v4240 = vrot.slane %v4217, 7
  %v4241 = vrot.slane %v4218, 6
  %v4242 = vsel %vm839, %v4241, %v4240
  %v4243 = vrot.slane %v4219, 5
  %v4244 = vsel %vm842, %v4243, %v4242
  %v4245 = vrot.slane %v4220, 4
  %v4246 = vsel %vm845, %v4245, %v4244
  %v4247 = vrot.slane %v4221, 3
  %v4248 = vsel %vm848, %v4247, %v4246
  %v4249 = vrot.slane %v4222, 2
  %v4250 = vsel %vm851, %v4249, %v4248
  %v4251 = vrot.slane %v4223, 1
  %v4252 = vsel %vm854, %v4251, %v4250
  %4255 = vst [vmem:[#allocation2 - $0x7] sm:$0x80] %v4216
  %4256 = vst [vmem:[#allocation2 + $0x1] sm:$0x7f] %v4252
  %v4265 = vrot.slane %v4201, 7
  %v4266 = vrot.slane %v4202, 6
  %v4267 = vsel %vm839, %v4266, %v4265
  %v4268 = vrot.slane %v4203, 5
  %v4269 = vsel %vm842, %v4268, %v4267
  %v4270 = vrot.slane %v4204, 4
  %v4271 = vsel %vm845, %v4270, %v4269
  %v4272 = vrot.slane %v4205, 3
  %v4273 = vsel %vm848, %v4272, %v4271
  %v4274 = vrot.slane %v4206, 2
  %v4275 = vsel %vm851, %v4274, %v4273
  %v4276 = vrot.slane %v4207, 1
  %v4277 = vsel %vm854, %v4276, %v4275
  %4280 = vst [vmem:[#allocation3 - $0x7] sm:$0x80] %v4200
  %4281 = vst [vmem:[#allocation3 + $0x1] sm:$0x7f] %v4277
  // Predicated region
  $region22: #{lstm_forward.1} parent=0 // pred_check
    %p4282 = pneg %p19
  $region23: #{lstm_forward.1} parent=0 // pred_check_branch
    %4284 = sbr.rel (%p4282) target = $region25
  $region24: #{lstm_forward.1} parent=0 // pred_region
    %4285 = vst [vmem:[%s5 - $0x7] sm:$0x80] %v4200
    %4286 = vst [vmem:[%s5 + $0x1] sm:$0x7f] %v4277
  $region25: #{lstm_forward.1} parent=0 // pred_fallthru
    _
  // Predicated region
  $region26: #{lstm_forward.1} parent=0 // pred_check
    _
  $region27: #{lstm_forward.1} parent=0 // pred_check_branch
    %4288 = sbr.rel (0) target = $region29
  $region28: #{lstm_forward.1} parent=0 // pred_region
    _
  $region29: #{lstm_forward.1} parent=0 // pred_fallthru
    _
  // Predicated region
  $region30: #{lstm_forward.1} parent=0 // pred_check
    _
  $region31: #{lstm_forward.1} parent=0 // pred_check_branch
    %4290 = sbr.rel (0) target = $region33
  $region32: #{lstm_forward.1} parent=0 // pred_region
    _
  $region33: #{lstm_forward.1} parent=0 // pred_fallthru
    _
  // Predicated region
  $region34: #{lstm_forward.1} parent=0 // pred_check
    _
  $region35: #{lstm_forward.1} parent=0 // pred_check_branch
    %4292 = sbr.rel (0) target = $region37
  $region36: #{lstm_forward.1} parent=0 // pred_region
    _
  $region37: #{lstm_forward.1} parent=0 // pred_fallthru
    _
  // Predicated region
  $region38: #{lstm_forward.1} parent=0 // pred_check
    _
  $region39: #{lstm_forward.1} parent=0 // pred_check_branch
    %4294 = sbr.rel (0) target = $region41
  $region40: #{lstm_forward.1} parent=0 // pred_region
    _
  $region41: #{lstm_forward.1} parent=0 // pred_fallthru
    _

</llo_original>
